<compile_context>
chip_gen: v5e
topology: v5e:2x2
jax: 0.10.0
libtpu: 0.0.40
codegen_flags: <defaults>
</compile_context>

<pallas_src>
import jax
import jax.numpy as jnp
from jax import lax
from jax.experimental import pallas as pl
from jax.experimental.pallas import tpu as pltpu

HIDDEN = 14


# ----------------------------------------------------------------------------
# Fused Pallas kernel: 5 LSTM directions + Linear, everything VMEM-resident.
# ----------------------------------------------------------------------------
def _decoder_kernel(
    x_ref,                                              # (T, B, D_in)
    w1f_ih_ref, w1f_hh_ref, b1f_ref,                    # layer 1 forward
    w1b_ih_ref, w1b_hh_ref, b1b_ref,                    # layer 1 backward
    w2fa_ref, w2fb_ref, w2f_hh_ref, b2f_ref,            # layer 2 forward (W_ih split)
    w2ba_ref, w2bb_ref, w2b_hh_ref, b2b_ref,            # layer 2 backward
    w3a_ref, w3b_ref, w3_hh_ref, b3_ref,                # layer 3 (unidirectional)
    wo_ref, bo_ref,                                     # output Linear
    out_ref,                                            # (T, B, O)
    projf, projb,                                       # scratch (T, B, 4H)
    houtf, houtb,                                       # scratch (T, B, H)
):
    T, B, _ = x_ref.shape
    H = houtf.shape[2]
    f32 = jnp.float32
    zeros = jnp.zeros((B, H), f32)

    def dot(a, b):
        return jnp.dot(a, b, preferred_element_type=f32)

    def cell(gates, c):
        # Gate columns are pre-permuted to [i, f, o, g]:
        #   one sigmoid over the first 3H lanes, one tanh over the last H lanes.
        sig = jax.nn.sigmoid(gates[:, : 3 * H])
        g = jnp.tanh(gates[:, 3 * H:])
        c_new = sig[:, H:2 * H] * c + sig[:, :H] * g
        h_new = sig[:, 2 * H:3 * H] * jnp.tanh(c_new)
        return h_new, c_new

    def bidir_step(whh_f, whh_b):
        # One fori_loop runs BOTH directions: fwd consumes time t, bwd consumes T-1-t.
        def step(t, carry):
            hf, cf, hb, cb = carry
            tr = T - 1 - t
            gf = projf[t] + dot(hf, whh_f)
            gb = projb[tr] + dot(hb, whh_b)
            hf, cf = cell(gf, cf)
            hb, cb = cell(gb, cb)
            houtf[t] = hf           # both outputs stored in forward time order
            houtb[tr] = hb
            return hf, cf, hb, cb
        return step

    # ---------------- layer 1 (bidirectional, input = x) ----------------
    # Input projections hoisted out of the recurrence (off the serial chain).
    # Unrolled per-t 2D matmuls are used instead of one (T*B, D) matmul to avoid
    # value reshapes inside the kernel; the T independent pushes pipeline freely.
    w1f_ih = w1f_ih_ref[...]
    w1b_ih = w1b_ih_ref[...]
    b1f = b1f_ref[...]
    b1b = b1b_ref[...]
    for t in range(T):
        x_t = x_ref[t]
        projf[t] = dot(x_t, w1f_ih) + b1f
        projb[t] = dot(x_t, w1b_ih) + b1b

    w1f_hh = w1f_hh_ref[...]
    w1b_hh = w1b_hh_ref[...]
    lax.fori_loop(0, T, bidir_step(w1f_hh, w1b_hh), (zeros, zeros, zeros, zeros))

    # ---------------- layer 2 (bidirectional, input = [houtf | houtb]) ----------------
    # W_ih is pre-split into the rows acting on the fwd half / bwd half, so the
    # concat is replaced by two matmuls (no lane-concat needed inside the kernel).
    w2fa = w2fa_ref[...]
    w2fb = w2fb_ref[...]
    w2ba = w2ba_ref[...]
    w2bb = w2bb_ref[...]
    b2f = b2f_ref[...]
    b2b = b2b_ref[...]
    for t in range(T):
        hf_t = houtf[t]
        hb_t = houtb[t]
        projf[t] = dot(hf_t, w2fa) + dot(hb_t, w2fb) + b2f
        projb[t] = dot(hf_t, w2ba) + dot(hb_t, w2bb) + b2b

    w2f_hh = w2f_hh_ref[...]
    w2b_hh = w2b_hh_ref[...]
    # Safe buffer reuse: projections above already captured layer-1 outputs, so the
    # recurrence may overwrite houtf/houtb in place.
    lax.fori_loop(0, T, bidir_step(w2f_hh, w2b_hh), (zeros, zeros, zeros, zeros))

    # ---------------- layer 3 (unidirectional) ----------------
    w3a = w3a_ref[...]
    w3b = w3b_ref[...]
    b3 = b3_ref[...]
    for t in range(T):
        projf[t] = dot(houtf[t], w3a) + dot(houtb[t], w3b) + b3

    w3_hh = w3_hh_ref[...]

    def step3(t, carry):
        h, c = carry
        g = projf[t] + dot(h, w3_hh)
        h, c = cell(g, c)
        houtf[t] = h
        return h, c

    lax.fori_loop(0, T, step3, (zeros, zeros))

    # ---------------- output Linear (fused epilogue) ----------------
    wo = wo_ref[...]
    bo = bo_ref[...]
    for t in range(T):
        out_ref[t] = dot(houtf[t], wo) + bo


# ----------------------------------------------------------------------------
# Parameter preprocessing (done ONCE): transpose, fold biases, reorder gates to
# [i, f, o, g], and split the 2H-wide input weights of layers 2/3 into two halves.
# ----------------------------------------------------------------------------
def _gate_perm(hidden):
    return jnp.concatenate([
        jnp.arange(0, 2 * hidden),                 # i, f
        jnp.arange(3 * hidden, 4 * hidden),        # o
        jnp.arange(2 * hidden, 3 * hidden),        # g
    ])


def _prep_dir(w_ih, w_hh, b_ih, b_hh, split_input=False):
    hidden = w_hh.shape[1]                         # PyTorch: w_hh is (4H, H)
    perm = _gate_perm(hidden)
    w_ih_t = jnp.transpose(w_ih[perm]).astype(jnp.float32)   # (D_in, 4H)
    w_hh_t = jnp.transpose(w_hh[perm]).astype(jnp.float32)   # (H, 4H)
    b = (b_ih + b_hh)[perm].reshape(1, -1).astype(jnp.float32)
    if split_input:                                # D_in == 2H: split rows per direction
        return (w_ih_t[:hidden], w_ih_t[hidden:], w_hh_t, b)
    return (w_ih_t, w_hh_t, b)


def prepare_params(params):
    return (
        *_prep_dir(*params["lstm1_fwd"]),
        *_prep_dir(*params["lstm1_bwd"]),
        *_prep_dir(*params["lstm2_fwd"], split_input=True),
        *_prep_dir(*params["lstm2_bwd"], split_input=True),
        *_prep_dir(*params["lstm3"], split_input=True),
        jnp.transpose(params["out_w"]).astype(jnp.float32),   # (H, O)
        params["out_b"].reshape(1, -1).astype(jnp.float32),   # (1, O)
    )


# ----------------------------------------------------------------------------
# Wrapper: one pallas_call for the whole forward.
# ----------------------------------------------------------------------------
@jax.jit
def decoder_model_forward(x, flat_params):
    """x: (B, T, n_input) batch_first -> (B, T, n_output)."""
    x_tbd = jnp.transpose(x, (1, 0, 2)).astype(jnp.float32)   # time-major (T, B, D)
    T, B, _ = x_tbd.shape
    H = HIDDEN
    O = flat_params[-2].shape[1]
    out = pl.pallas_call(
        _decoder_kernel,
        out_shape=jax.ShapeDtypeStruct((T, B, O), jnp.float32),
        in_specs=[pl.BlockSpec(memory_space=pltpu.MemorySpace.VMEM)]
        * (1 + len(flat_params)),
        out_specs=pl.BlockSpec(memory_space=pltpu.MemorySpace.VMEM),
        scratch_shapes=[
            pltpu.VMEM((T, B, 4 * H), jnp.float32),   # fwd-direction gate pre-projection
            pltpu.VMEM((T, B, 4 * H), jnp.float32),   # bwd-direction gate pre-projection
            pltpu.VMEM((T, B, H), jnp.float32),       # fwd hidden outputs (reused per layer)
            pltpu.VMEM((T, B, H), jnp.float32),       # bwd hidden outputs (reused per layer)
        ],
    )(x_tbd, *flat_params)
    return jnp.transpose(out, (1, 0, 2))


# ----------------------------------------------------------------------------
# Deterministic parameter init (PyTorch-style uniform(-1/sqrt(H), 1/sqrt(H)))
# ----------------------------------------------------------------------------
def _init_lstm_dir(key, d_in, hidden):
    k = 1.0 / jnp.sqrt(hidden)
    ks = jax.random.split(key, 4)
    w_ih = jax.random.uniform(ks[0], (4 * hidden, d_in), jnp.float32, -k, k)
    w_hh = jax.random.uniform(ks[1], (4 * hidden, hidden), jnp.float32, -k, k)
    b_ih = jax.random.uniform(ks[2], (4 * hidden,), jnp.float32, -k, k)
    b_hh = jax.random.uniform(ks[3], (4 * hidden,), jnp.float32, -k, k)
    return (w_ih, w_hh, b_ih, b_hh)


def init_params(key, n_input, n_output):
    ks = jax.random.split(key, 7)
    k_out = 1.0 / jnp.sqrt(HIDDEN)
    return {
        "lstm1_fwd": _init_lstm_dir(ks[0], n_input, HIDDEN),
        "lstm1_bwd": _init_lstm_dir(ks[1], n_input, HIDDEN),
        "lstm2_fwd": _init_lstm_dir(ks[2], 2 * HIDDEN, HIDDEN),
        "lstm2_bwd": _init_lstm_dir(ks[3], 2 * HIDDEN, HIDDEN),
        "lstm3": _init_lstm_dir(ks[4], 2 * HIDDEN, HIDDEN),
        "out_w": jax.random.uniform(ks[5], (n_output, HIDDEN), jnp.float32, -k_out, k_out),
        "out_b": jax.random.uniform(ks[6], (n_output,), jnp.float32, -k_out, k_out),
    }


# ----------------------------------------------------------------------------
# Pure-JAX reference (original i,f,g,o layout) for a correctness check
# ----------------------------------------------------------------------------
def _ref_lstm_dir(x, w_ih, w_hh, b_ih, b_hh):
    B = x.shape[0]
    H = w_hh.shape[1]
    b = b_ih + b_hh

    def step(carry, x_t):
        h, c = carry
        g = x_t @ w_ih.T + h @ w_hh.T + b
        i, f, gg, o = jnp.split(g, 4, axis=-1)
        c = jax.nn.sigmoid(f) * c + jax.nn.sigmoid(i) * jnp.tanh(gg)
        h = jax.nn.sigmoid(o) * jnp.tanh(c)
        return (h, c), h

    init = (jnp.zeros((B, H), jnp.float32), jnp.zeros((B, H), jnp.float32))
    _, hs = lax.scan(step, init, jnp.transpose(x, (1, 0, 2)))
    return jnp.transpose(hs, (1, 0, 2))


def _ref_forward(x, p):
    def bidir(x, pf, pb):
        hf = _ref_lstm_dir(x, *pf)
        hb = jnp.flip(_ref_lstm_dir(jnp.flip(x, axis=1), *pb), axis=1)
        return jnp.concatenate([hf, hb], axis=-1)

    h1 = bidir(x, p["lstm1_fwd"], p["lstm1_bwd"])
    h2 = bidir(h1, p["lstm2_fwd"], p["lstm2_bwd"])
    h3 = _ref_lstm_dir(h2, *p["lstm3"])
    return h3 @ p["out_w"].T + p["out_b"]


# ----------------------------------------------------------------------------
if __name__ == "__main__":
    B, T, N_IN, N_OUT = 2, 8, 6, 3

    key = jax.random.PRNGKey(0)
    k_x, k_p = jax.random.split(key)
    x = jax.random.normal(k_x, (B, T, N_IN), dtype=jnp.float32)
    params = init_params(k_p, N_IN, N_OUT)
    flat_params = prepare_params(params)        # one-time parameter preprocessing

    out = jax.block_until_ready(decoder_model_forward(x, flat_params))

    ref = jax.block_until_ready(_ref_forward(x, params))
    assert out.shape == (B, T, N_OUT), out.shape
    assert jnp.allclose(out, ref, atol=1e-4, rtol=1e-4), "mismatch vs JAX reference"

    print("KERNEL_OK")
</pallas_src>

<mosaic_0001>
module attributes {stable_mosaic.version = 11 : i64} {
  func.func @_decoder_kernel(%arg0: memref<8x2x6xf32, #tpu.memory_space<vmem>>, %arg1: memref<6x56xf32, #tpu.memory_space<vmem>>, %arg2: memref<14x56xf32, #tpu.memory_space<vmem>>, %arg3: memref<1x56xf32, #tpu.memory_space<vmem>>, %arg4: memref<6x56xf32, #tpu.memory_space<vmem>>, %arg5: memref<14x56xf32, #tpu.memory_space<vmem>>, %arg6: memref<1x56xf32, #tpu.memory_space<vmem>>, %arg7: memref<14x56xf32, #tpu.memory_space<vmem>>, %arg8: memref<14x56xf32, #tpu.memory_space<vmem>>, %arg9: memref<14x56xf32, #tpu.memory_space<vmem>>, %arg10: memref<1x56xf32, #tpu.memory_space<vmem>>, %arg11: memref<14x56xf32, #tpu.memory_space<vmem>>, %arg12: memref<14x56xf32, #tpu.memory_space<vmem>>, %arg13: memref<14x56xf32, #tpu.memory_space<vmem>>, %arg14: memref<1x56xf32, #tpu.memory_space<vmem>>, %arg15: memref<14x56xf32, #tpu.memory_space<vmem>>, %arg16: memref<14x56xf32, #tpu.memory_space<vmem>>, %arg17: memref<14x56xf32, #tpu.memory_space<vmem>>, %arg18: memref<1x56xf32, #tpu.memory_space<vmem>>, %arg19: memref<14x3xf32, #tpu.memory_space<vmem>>, %arg20: memref<1x3xf32, #tpu.memory_space<vmem>>, %arg21: memref<8x2x3xf32, #tpu.memory_space<vmem>>, %arg22: memref<8x2x56xf32, #tpu.memory_space<vmem>>, %arg23: memref<8x2x56xf32, #tpu.memory_space<vmem>>, %arg24: memref<8x2x14xf32, #tpu.memory_space<vmem>>, %arg25: memref<8x2x14xf32, #tpu.memory_space<vmem>>) attributes {dimension_semantics = [], scalar_prefetch = 0 : i64, scratch_operands = 4 : i64, tpu.core_type = #tpu.core_type<tc>} {
    %cst = arith.constant 0.000000e+00 : f32
    %0 = vector.broadcast %cst : f32 to vector<2x14xf32>
    %c0 = arith.constant 0 : index
    %c0_0 = arith.constant 0 : index
    %1 = vector.load %arg1[%c0, %c0_0] : memref<6x56xf32, #tpu.memory_space<vmem>>, vector<6x56xf32>
    %c0_1 = arith.constant 0 : index
    %c0_2 = arith.constant 0 : index
    %2 = vector.load %arg4[%c0_1, %c0_2] : memref<6x56xf32, #tpu.memory_space<vmem>>, vector<6x56xf32>
    %c0_3 = arith.constant 0 : index
    %c0_4 = arith.constant 0 : index
    %3 = vector.load %arg3[%c0_3, %c0_4] : memref<1x56xf32, #tpu.memory_space<vmem>>, vector<1x56xf32>
    %c0_5 = arith.constant 0 : index
    %c0_6 = arith.constant 0 : index
    %4 = vector.load %arg6[%c0_5, %c0_6] : memref<1x56xf32, #tpu.memory_space<vmem>>, vector<1x56xf32>
    %c0_7 = arith.constant 0 : index
    %c0_8 = arith.constant 0 : index
    %c0_9 = arith.constant 0 : index
    %5 = vector.load %arg0[%c0_7, %c0_8, %c0_9] : memref<8x2x6xf32, #tpu.memory_space<vmem>>, vector<1x2x6xf32>
    %6 = vector.shape_cast %5 : vector<1x2x6xf32> to vector<2x6xf32>
    %cst_10 = arith.constant dense<0.000000e+00> : vector<2x56xf32>
    %7 = tpu.matmul %6, %1, %cst_10 {dimension_numbers = #tpu.dot_dimension_numbers<[1], [0], [0], [1], [0, 0, 1, 1], [], []>} : vector<2x6xf32>, vector<6x56xf32>, vector<2x56xf32> -> vector<2x56xf32>
    %8 = vector.broadcast %3 : vector<1x56xf32> to vector<2x56xf32>
    %9 = arith.addf %7, %8 : vector<2x56xf32>
    %c0_11 = arith.constant 0 : index
    %c0_12 = arith.constant 0 : index
    %c0_13 = arith.constant 0 : index
    %10 = vector.load %arg22[%c0_11, %c0_12, %c0_13] : memref<8x2x56xf32, #tpu.memory_space<vmem>>, vector<1x2x56xf32>
    %11 = vector.shape_cast %10 : vector<1x2x56xf32> to vector<2x56xf32>
    %12 = vector.shape_cast %9 : vector<2x56xf32> to vector<1x2x56xf32>
    tpu.vector_store %arg22[%c0_11, %c0_12, %c0_13], %12 {strides = array<i32>} : memref<8x2x56xf32, #tpu.memory_space<vmem>>, vector<1x2x56xf32>,
    %cst_14 = arith.constant dense<0.000000e+00> : vector<2x56xf32>
    %13 = tpu.matmul %6, %2, %cst_14 {dimension_numbers = #tpu.dot_dimension_numbers<[1], [0], [0], [1], [0, 0, 1, 1], [], []>} : vector<2x6xf32>, vector<6x56xf32>, vector<2x56xf32> -> vector<2x56xf32>
    %14 = vector.broadcast %4 : vector<1x56xf32> to vector<2x56xf32>
    %15 = arith.addf %13, %14 : vector<2x56xf32>
    %c0_15 = arith.constant 0 : index
    %c0_16 = arith.constant 0 : index
    %c0_17 = arith.constant 0 : index
    %16 = vector.load %arg23[%c0_15, %c0_16, %c0_17] : memref<8x2x56xf32, #tpu.memory_space<vmem>>, vector<1x2x56xf32>
    %17 = vector.shape_cast %16 : vector<1x2x56xf32> to vector<2x56xf32>
    %18 = vector.shape_cast %15 : vector<2x56xf32> to vector<1x2x56xf32>
    tpu.vector_store %arg23[%c0_15, %c0_16, %c0_17], %18 {strides = array<i32>} : memref<8x2x56xf32, #tpu.memory_space<vmem>>, vector<1x2x56xf32>,
    %c1 = arith.constant 1 : index
    %c0_18 = arith.constant 0 : index
    %c0_19 = arith.constant 0 : index
    %19 = vector.load %arg0[%c1, %c0_18, %c0_19] : memref<8x2x6xf32, #tpu.memory_space<vmem>>, vector<1x2x6xf32>
    %20 = vector.shape_cast %19 : vector<1x2x6xf32> to vector<2x6xf32>
    %cst_20 = arith.constant dense<0.000000e+00> : vector<2x56xf32>
    %21 = tpu.matmul %20, %1, %cst_20 {dimension_numbers = #tpu.dot_dimension_numbers<[1], [0], [0], [1], [0, 0, 1, 1], [], []>} : vector<2x6xf32>, vector<6x56xf32>, vector<2x56xf32> -> vector<2x56xf32>
    %22 = vector.broadcast %3 : vector<1x56xf32> to vector<2x56xf32>
    %23 = arith.addf %21, %22 : vector<2x56xf32>
    %c1_21 = arith.constant 1 : index
    %c0_22 = arith.constant 0 : index
    %c0_23 = arith.constant 0 : index
    %24 = vector.load %arg22[%c1_21, %c0_22, %c0_23] : memref<8x2x56xf32, #tpu.memory_space<vmem>>, vector<1x2x56xf32>
    %25 = vector.shape_cast %24 : vector<1x2x56xf32> to vector<2x56xf32>
    %26 = vector.shape_cast %23 : vector<2x56xf32> to vector<1x2x56xf32>
    tpu.vector_store %arg22[%c1_21, %c0_22, %c0_23], %26 {strides = array<i32>} : memref<8x2x56xf32, #tpu.memory_space<vmem>>, vector<1x2x56xf32>,
    %cst_24 = arith.constant dense<0.000000e+00> : vector<2x56xf32>
    %27 = tpu.matmul %20, %2, %cst_24 {dimension_numbers = #tpu.dot_dimension_numbers<[1], [0], [0], [1], [0, 0, 1, 1], [], []>} : vector<2x6xf32>, vector<6x56xf32>, vector<2x56xf32> -> vector<2x56xf32>
    %28 = vector.broadcast %4 : vector<1x56xf32> to vector<2x56xf32>
    %29 = arith.addf %27, %28 : vector<2x56xf32>
    %c1_25 = arith.constant 1 : index
    %c0_26 = arith.constant 0 : index
    %c0_27 = arith.constant 0 : index
    %30 = vector.load %arg23[%c1_25, %c0_26, %c0_27] : memref<8x2x56xf32, #tpu.memory_space<vmem>>, vector<1x2x56xf32>
    %31 = vector.shape_cast %30 : vector<1x2x56xf32> to vector<2x56xf32>
    %32 = vector.shape_cast %29 : vector<2x56xf32> to vector<1x2x56xf32>
    tpu.vector_store %arg23[%c1_25, %c0_26, %c0_27], %32 {strides = array<i32>} : memref<8x2x56xf32, #tpu.memory_space<vmem>>, vector<1x2x56xf32>,
    %c2 = arith.constant 2 : index
    %c0_28 = arith.constant 0 : index
    %c0_29 = arith.constant 0 : index
    %33 = vector.load %arg0[%c2, %c0_28, %c0_29] : memref<8x2x6xf32, #tpu.memory_space<vmem>>, vector<1x2x6xf32>
    %34 = vector.shape_cast %33 : vector<1x2x6xf32> to vector<2x6xf32>
    %cst_30 = arith.constant dense<0.000000e+00> : vector<2x56xf32>
    %35 = tpu.matmul %34, %1, %cst_30 {dimension_numbers = #tpu.dot_dimension_numbers<[1], [0], [0], [1], [0, 0, 1, 1], [], []>} : vector<2x6xf32>, vector<6x56xf32>, vector<2x56xf32> -> vector<2x56xf32>
    %36 = vector.broadcast %3 : vector<1x56xf32> to vector<2x56xf32>
    %37 = arith.addf %35, %36 : vector<2x56xf32>
    %c2_31 = arith.constant 2 : index
    %c0_32 = arith.constant 0 : index
    %c0_33 = arith.constant 0 : index
    %38 = vector.load %arg22[%c2_31, %c0_32, %c0_33] : memref<8x2x56xf32, #tpu.memory_space<vmem>>, vector<1x2x56xf32>
    %39 = vector.shape_cast %38 : vector<1x2x56xf32> to vector<2x56xf32>
    %40 = vector.shape_cast %37 : vector<2x56xf32> to vector<1x2x56xf32>
    tpu.vector_store %arg22[%c2_31, %c0_32, %c0_33], %40 {strides = array<i32>} : memref<8x2x56xf32, #tpu.memory_space<vmem>>, vector<1x2x56xf32>,
    %cst_34 = arith.constant dense<0.000000e+00> : vector<2x56xf32>
    %41 = tpu.matmul %34, %2, %cst_34 {dimension_numbers = #tpu.dot_dimension_numbers<[1], [0], [0], [1], [0, 0, 1, 1], [], []>} : vector<2x6xf32>, vector<6x56xf32>, vector<2x56xf32> -> vector<2x56xf32>
    %42 = vector.broadcast %4 : vector<1x56xf32> to vector<2x56xf32>
    %43 = arith.addf %41, %42 : vector<2x56xf32>
    %c2_35 = arith.constant 2 : index
    %c0_36 = arith.constant 0 : index
    %c0_37 = arith.constant 0 : index
    %44 = vector.load %arg23[%c2_35, %c0_36, %c0_37] : memref<8x2x56xf32, #tpu.memory_space<vmem>>, vector<1x2x56xf32>
    %45 = vector.shape_cast %44 : vector<1x2x56xf32> to vector<2x56xf32>
    %46 = vector.shape_cast %43 : vector<2x56xf32> to vector<1x2x56xf32>
    tpu.vector_store %arg23[%c2_35, %c0_36, %c0_37], %46 {strides = array<i32>} : memref<8x2x56xf32, #tpu.memory_space<vmem>>, vector<1x2x56xf32>,
    %c3 = arith.constant 3 : index
    %c0_38 = arith.constant 0 : index
    %c0_39 = arith.constant 0 : index
    %47 = vector.load %arg0[%c3, %c0_38, %c0_39] : memref<8x2x6xf32, #tpu.memory_space<vmem>>, vector<1x2x6xf32>
    %48 = vector.shape_cast %47 : vector<1x2x6xf32> to vector<2x6xf32>
    %cst_40 = arith.constant dense<0.000000e+00> : vector<2x56xf32>
    %49 = tpu.matmul %48, %1, %cst_40 {dimension_numbers = #tpu.dot_dimension_numbers<[1], [0], [0], [1], [0, 0, 1, 1], [], []>} : vector<2x6xf32>, vector<6x56xf32>, vector<2x56xf32> -> vector<2x56xf32>
    %50 = vector.broadcast %3 : vector<1x56xf32> to vector<2x56xf32>
    %51 = arith.addf %49, %50 : vector<2x56xf32>
    %c3_41 = arith.constant 3 : index
    %c0_42 = arith.constant 0 : index
    %c0_43 = arith.constant 0 : index
    %52 = vector.load %arg22[%c3_41, %c0_42, %c0_43] : memref<8x2x56xf32, #tpu.memory_space<vmem>>, vector<1x2x56xf32>
    %53 = vector.shape_cast %52 : vector<1x2x56xf32> to vector<2x56xf32>
    %54 = vector.shape_cast %51 : vector<2x56xf32> to vector<1x2x56xf32>
    tpu.vector_store %arg22[%c3_41, %c0_42, %c0_43], %54 {strides = array<i32>} : memref<8x2x56xf32, #tpu.memory_space<vmem>>, vector<1x2x56xf32>,
    %cst_44 = arith.constant dense<0.000000e+00> : vector<2x56xf32>
    %55 = tpu.matmul %48, %2, %cst_44 {dimension_numbers = #tpu.dot_dimension_numbers<[1], [0], [0], [1], [0, 0, 1, 1], [], []>} : vector<2x6xf32>, vector<6x56xf32>, vector<2x56xf32> -> vector<2x56xf32>
    %56 = vector.broadcast %4 : vector<1x56xf32> to vector<2x56xf32>
    %57 = arith.addf %55, %56 : vector<2x56xf32>
    %c3_45 = arith.constant 3 : index
    %c0_46 = arith.constant 0 : index
    %c0_47 = arith.constant 0 : index
    %58 = vector.load %arg23[%c3_45, %c0_46, %c0_47] : memref<8x2x56xf32, #tpu.memory_space<vmem>>, vector<1x2x56xf32>
    %59 = vector.shape_cast %58 : vector<1x2x56xf32> to vector<2x56xf32>
    %60 = vector.shape_cast %57 : vector<2x56xf32> to vector<1x2x56xf32>
    tpu.vector_store %arg23[%c3_45, %c0_46, %c0_47], %60 {strides = array<i32>} : memref<8x2x56xf32, #tpu.memory_space<vmem>>, vector<1x2x56xf32>,
    %c4 = arith.constant 4 : index
    %c0_48 = arith.constant 0 : index
    %c0_49 = arith.constant 0 : index
    %61 = vector.load %arg0[%c4, %c0_48, %c0_49] : memref<8x2x6xf32, #tpu.memory_space<vmem>>, vector<1x2x6xf32>
    %62 = vector.shape_cast %61 : vector<1x2x6xf32> to vector<2x6xf32>
    %cst_50 = arith.constant dense<0.000000e+00> : vector<2x56xf32>
    %63 = tpu.matmul %62, %1, %cst_50 {dimension_numbers = #tpu.dot_dimension_numbers<[1], [0], [0], [1], [0, 0, 1, 1], [], []>} : vector<2x6xf32>, vector<6x56xf32>, vector<2x56xf32> -> vector<2x56xf32>
    %64 = vector.broadcast %3 : vector<1x56xf32> to vector<2x56xf32>
    %65 = arith.addf %63, %64 : vector<2x56xf32>
    %c4_51 = arith.constant 4 : index
    %c0_52 = arith.constant 0 : index
    %c0_53 = arith.constant 0 : index
    %66 = vector.load %arg22[%c4_51, %c0_52, %c0_53] : memref<8x2x56xf32, #tpu.memory_space<vmem>>, vector<1x2x56xf32>
    %67 = vector.shape_cast %66 : vector<1x2x56xf32> to vector<2x56xf32>
    %68 = vector.shape_cast %65 : vector<2x56xf32> to vector<1x2x56xf32>
    tpu.vector_store %arg22[%c4_51, %c0_52, %c0_53], %68 {strides = array<i32>} : memref<8x2x56xf32, #tpu.memory_space<vmem>>, vector<1x2x56xf32>,
    %cst_54 = arith.constant dense<0.000000e+00> : vector<2x56xf32>
    %69 = tpu.matmul %62, %2, %cst_54 {dimension_numbers = #tpu.dot_dimension_numbers<[1], [0], [0], [1], [0, 0, 1, 1], [], []>} : vector<2x6xf32>, vector<6x56xf32>, vector<2x56xf32> -> vector<2x56xf32>
    %70 = vector.broadcast %4 : vector<1x56xf32> to vector<2x56xf32>
    %71 = arith.addf %69, %70 : vector<2x56xf32>
    %c4_55 = arith.constant 4 : index
    %c0_56 = arith.constant 0 : index
    %c0_57 = arith.constant 0 : index
    %72 = vector.load %arg23[%c4_55, %c0_56, %c0_57] : memref<8x2x56xf32, #tpu.memory_space<vmem>>, vector<1x2x56xf32>
    %73 = vector.shape_cast %72 : vector<1x2x56xf32> to vector<2x56xf32>
    %74 = vector.shape_cast %71 : vector<2x56xf32> to vector<1x2x56xf32>
    tpu.vector_store %arg23[%c4_55, %c0_56, %c0_57], %74 {strides = array<i32>} : memref<8x2x56xf32, #tpu.memory_space<vmem>>, vector<1x2x56xf32>,
    %c5 = arith.constant 5 : index
    %c0_58 = arith.constant 0 : index
    %c0_59 = arith.constant 0 : index
    %75 = vector.load %arg0[%c5, %c0_58, %c0_59] : memref<8x2x6xf32, #tpu.memory_space<vmem>>, vector<1x2x6xf32>
    %76 = vector.shape_cast %75 : vector<1x2x6xf32> to vector<2x6xf32>
    %cst_60 = arith.constant dense<0.000000e+00> : vector<2x56xf32>
    %77 = tpu.matmul %76, %1, %cst_60 {dimension_numbers = #tpu.dot_dimension_numbers<[1], [0], [0], [1], [0, 0, 1, 1], [], []>} : vector<2x6xf32>, vector<6x56xf32>, vector<2x56xf32> -> vector<2x56xf32>
    %78 = vector.broadcast %3 : vector<1x56xf32> to vector<2x56xf32>
    %79 = arith.addf %77, %78 : vector<2x56xf32>
    %c5_61 = arith.constant 5 : index
    %c0_62 = arith.constant 0 : index
    %c0_63 = arith.constant 0 : index
    %80 = vector.load %arg22[%c5_61, %c0_62, %c0_63] : memref<8x2x56xf32, #tpu.memory_space<vmem>>, vector<1x2x56xf32>
    %81 = vector.shape_cast %80 : vector<1x2x56xf32> to vector<2x56xf32>
    %82 = vector.shape_cast %79 : vector<2x56xf32> to vector<1x2x56xf32>
    tpu.vector_store %arg22[%c5_61, %c0_62, %c0_63], %82 {strides = array<i32>} : memref<8x2x56xf32, #tpu.memory_space<vmem>>, vector<1x2x56xf32>,
    %cst_64 = arith.constant dense<0.000000e+00> : vector<2x56xf32>
    %83 = tpu.matmul %76, %2, %cst_64 {dimension_numbers = #tpu.dot_dimension_numbers<[1], [0], [0], [1], [0, 0, 1, 1], [], []>} : vector<2x6xf32>, vector<6x56xf32>, vector<2x56xf32> -> vector<2x56xf32>
    %84 = vector.broadcast %4 : vector<1x56xf32> to vector<2x56xf32>
    %85 = arith.addf %83, %84 : vector<2x56xf32>
    %c5_65 = arith.constant 5 : index
    %c0_66 = arith.constant 0 : index
    %c0_67 = arith.constant 0 : index
    %86 = vector.load %arg23[%c5_65, %c0_66, %c0_67] : memref<8x2x56xf32, #tpu.memory_space<vmem>>, vector<1x2x56xf32>
    %87 = vector.shape_cast %86 : vector<1x2x56xf32> to vector<2x56xf32>
    %88 = vector.shape_cast %85 : vector<2x56xf32> to vector<1x2x56xf32>
    tpu.vector_store %arg23[%c5_65, %c0_66, %c0_67], %88 {strides = array<i32>} : memref<8x2x56xf32, #tpu.memory_space<vmem>>, vector<1x2x56xf32>,
    %c6 = arith.constant 6 : index
    %c0_68 = arith.constant 0 : index
    %c0_69 = arith.constant 0 : index
    %89 = vector.load %arg0[%c6, %c0_68, %c0_69] : memref<8x2x6xf32, #tpu.memory_space<vmem>>, vector<1x2x6xf32>
    %90 = vector.shape_cast %89 : vector<1x2x6xf32> to vector<2x6xf32>
    %cst_70 = arith.constant dense<0.000000e+00> : vector<2x56xf32>
    %91 = tpu.matmul %90, %1, %cst_70 {dimension_numbers = #tpu.dot_dimension_numbers<[1], [0], [0], [1], [0, 0, 1, 1], [], []>} : vector<2x6xf32>, vector<6x56xf32>, vector<2x56xf32> -> vector<2x56xf32>
    %92 = vector.broadcast %3 : vector<1x56xf32> to vector<2x56xf32>
    %93 = arith.addf %91, %92 : vector<2x56xf32>
    %c6_71 = arith.constant 6 : index
    %c0_72 = arith.constant 0 : index
    %c0_73 = arith.constant 0 : index
    %94 = vector.load %arg22[%c6_71, %c0_72, %c0_73] : memref<8x2x56xf32, #tpu.memory_space<vmem>>, vector<1x2x56xf32>
    %95 = vector.shape_cast %94 : vector<1x2x56xf32> to vector<2x56xf32>
    %96 = vector.shape_cast %93 : vector<2x56xf32> to vector<1x2x56xf32>
    tpu.vector_store %arg22[%c6_71, %c0_72, %c0_73], %96 {strides = array<i32>} : memref<8x2x56xf32, #tpu.memory_space<vmem>>, vector<1x2x56xf32>,
    %cst_74 = arith.constant dense<0.000000e+00> : vector<2x56xf32>
    %97 = tpu.matmul %90, %2, %cst_74 {dimension_numbers = #tpu.dot_dimension_numbers<[1], [0], [0], [1], [0, 0, 1, 1], [], []>} : vector<2x6xf32>, vector<6x56xf32>, vector<2x56xf32> -> vector<2x56xf32>
    %98 = vector.broadcast %4 : vector<1x56xf32> to vector<2x56xf32>
    %99 = arith.addf %97, %98 : vector<2x56xf32>
    %c6_75 = arith.constant 6 : index
    %c0_76 = arith.constant 0 : index
    %c0_77 = arith.constant 0 : index
    %100 = vector.load %arg23[%c6_75, %c0_76, %c0_77] : memref<8x2x56xf32, #tpu.memory_space<vmem>>, vector<1x2x56xf32>
    %101 = vector.shape_cast %100 : vector<1x2x56xf32> to vector<2x56xf32>
    %102 = vector.shape_cast %99 : vector<2x56xf32> to vector<1x2x56xf32>
    tpu.vector_store %arg23[%c6_75, %c0_76, %c0_77], %102 {strides = array<i32>} : memref<8x2x56xf32, #tpu.memory_space<vmem>>, vector<1x2x56xf32>,
    %c7 = arith.constant 7 : index
    %c0_78 = arith.constant 0 : index
    %c0_79 = arith.constant 0 : index
    %103 = vector.load %arg0[%c7, %c0_78, %c0_79] : memref<8x2x6xf32, #tpu.memory_space<vmem>>, vector<1x2x6xf32>
    %104 = vector.shape_cast %103 : vector<1x2x6xf32> to vector<2x6xf32>
    %cst_80 = arith.constant dense<0.000000e+00> : vector<2x56xf32>
    %105 = tpu.matmul %104, %1, %cst_80 {dimension_numbers = #tpu.dot_dimension_numbers<[1], [0], [0], [1], [0, 0, 1, 1], [], []>} : vector<2x6xf32>, vector<6x56xf32>, vector<2x56xf32> -> vector<2x56xf32>
    %106 = vector.broadcast %3 : vector<1x56xf32> to vector<2x56xf32>
    %107 = arith.addf %105, %106 : vector<2x56xf32>
    %c7_81 = arith.constant 7 : index
    %c0_82 = arith.constant 0 : index
    %c0_83 = arith.constant 0 : index
    %108 = vector.load %arg22[%c7_81, %c0_82, %c0_83] : memref<8x2x56xf32, #tpu.memory_space<vmem>>, vector<1x2x56xf32>
    %109 = vector.shape_cast %108 : vector<1x2x56xf32> to vector<2x56xf32>
    %110 = vector.shape_cast %107 : vector<2x56xf32> to vector<1x2x56xf32>
    tpu.vector_store %arg22[%c7_81, %c0_82, %c0_83], %110 {strides = array<i32>} : memref<8x2x56xf32, #tpu.memory_space<vmem>>, vector<1x2x56xf32>,
    %cst_84 = arith.constant dense<0.000000e+00> : vector<2x56xf32>
    %111 = tpu.matmul %104, %2, %cst_84 {dimension_numbers = #tpu.dot_dimension_numbers<[1], [0], [0], [1], [0, 0, 1, 1], [], []>} : vector<2x6xf32>, vector<6x56xf32>, vector<2x56xf32> -> vector<2x56xf32>
    %112 = vector.broadcast %4 : vector<1x56xf32> to vector<2x56xf32>
    %113 = arith.addf %111, %112 : vector<2x56xf32>
    %c7_85 = arith.constant 7 : index
    %c0_86 = arith.constant 0 : index
    %c0_87 = arith.constant 0 : index
    %114 = vector.load %arg23[%c7_85, %c0_86, %c0_87] : memref<8x2x56xf32, #tpu.memory_space<vmem>>, vector<1x2x56xf32>
    %115 = vector.shape_cast %114 : vector<1x2x56xf32> to vector<2x56xf32>
    %116 = vector.shape_cast %113 : vector<2x56xf32> to vector<1x2x56xf32>
    tpu.vector_store %arg23[%c7_85, %c0_86, %c0_87], %116 {strides = array<i32>} : memref<8x2x56xf32, #tpu.memory_space<vmem>>, vector<1x2x56xf32>,
    %c0_88 = arith.constant 0 : index
    %c0_89 = arith.constant 0 : index
    %117 = vector.load %arg2[%c0_88, %c0_89] : memref<14x56xf32, #tpu.memory_space<vmem>>, vector<14x56xf32>
    %c0_90 = arith.constant 0 : index
    %c0_91 = arith.constant 0 : index
    %118 = vector.load %arg5[%c0_90, %c0_91] : memref<14x56xf32, #tpu.memory_space<vmem>>, vector<14x56xf32>
    %c0_i32 = arith.constant 0 : i32
    %c8_i32 = arith.constant 8 : i32
    %119 = arith.addi %c0_i32, %c8_i32 : i32
    %c1_i32 = arith.constant 1 : i32
    %120:4 = scf.for %arg26 = %c0_i32 to %119 step %c1_i32 iter_args(%arg27 = %0, %arg28 = %0, %arg29 = %0, %arg30 = %0) -> (vector<2x14xf32>, vector<2x14xf32>, vector<2x14xf32>, vector<2x14xf32>)  : i32 {
      %c7_i32 = arith.constant 7 : i32
      %459 = arith.subi %c7_i32, %arg26 : i32
      %460 = arith.index_cast %arg26 : i32 to index
      %c0_401 = arith.constant 0 : index
      %c0_402 = arith.constant 0 : index
      %461 = vector.load %arg22[%460, %c0_401, %c0_402] : memref<8x2x56xf32, #tpu.memory_space<vmem>>, vector<1x2x56xf32>
      %462 = vector.shape_cast %461 : vector<1x2x56xf32> to vector<2x56xf32>
      %cst_403 = arith.constant dense<0.000000e+00> : vector<2x56xf32>
      %463 = tpu.matmul %arg27, %117, %cst_403 {dimension_numbers = #tpu.dot_dimension_numbers<[1], [0], [0], [1], [0, 0, 1, 1], [], []>} : vector<2x14xf32>, vector<14x56xf32>, vector<2x56xf32> -> vector<2x56xf32>
      %464 = arith.addf %462, %463 : vector<2x56xf32>
      %465 = arith.index_cast %459 : i32 to index
      %c0_404 = arith.constant 0 : index
      %c0_405 = arith.constant 0 : index
      %466 = vector.load %arg23[%465, %c0_404, %c0_405] : memref<8x2x56xf32, #tpu.memory_space<vmem>>, vector<1x2x56xf32>
      %467 = vector.shape_cast %466 : vector<1x2x56xf32> to vector<2x56xf32>
      %cst_406 = arith.constant dense<0.000000e+00> : vector<2x56xf32>
      %468 = tpu.matmul %arg29, %118, %cst_406 {dimension_numbers = #tpu.dot_dimension_numbers<[1], [0], [0], [1], [0, 0, 1, 1], [], []>} : vector<2x14xf32>, vector<14x56xf32>, vector<2x56xf32> -> vector<2x56xf32>
      %469 = arith.addf %467, %468 : vector<2x56xf32>
      %470 = vector.extract_strided_slice %464 {offsets = [0, 0], sizes = [2, 42], strides = [1, 1]} : vector<2x56xf32> to vector<2x42xf32>
      %471 = arith.negf %470 : vector<2x42xf32>
      %472 = math.exp %471 : vector<2x42xf32>
      %cst_407 = arith.constant 1.000000e+00 : f32
      %473 = vector.broadcast %cst_407 : f32 to vector<2x42xf32>
      %474 = arith.addf %473, %472 : vector<2x42xf32>
      %475 = arith.divf %473, %474 : vector<2x42xf32>
      %476 = vector.extract_strided_slice %464 {offsets = [0, 42], sizes = [2, 14], strides = [1, 1]} : vector<2x56xf32> to vector<2x14xf32>
      %477 = math.tanh %476 : vector<2x14xf32>
      %478 = vector.extract_strided_slice %475 {offsets = [0, 14], sizes = [2, 14], strides = [1, 1]} : vector<2x42xf32> to vector<2x14xf32>
      %479 = arith.mulf %478, %arg28 : vector<2x14xf32>
      %480 = vector.extract_strided_slice %475 {offsets = [0, 0], sizes = [2, 14], strides = [1, 1]} : vector<2x42xf32> to vector<2x14xf32>
      %481 = arith.mulf %480, %477 : vector<2x14xf32>
      %482 = arith.addf %479, %481 : vector<2x14xf32>
      %483 = vector.extract_strided_slice %475 {offsets = [0, 28], sizes = [2, 14], strides = [1, 1]} : vector<2x42xf32> to vector<2x14xf32>
      %484 = math.tanh %482 : vector<2x14xf32>
      %485 = arith.mulf %483, %484 : vector<2x14xf32>
      %486 = vector.extract_strided_slice %469 {offsets = [0, 0], sizes = [2, 42], strides = [1, 1]} : vector<2x56xf32> to vector<2x42xf32>
      %487 = arith.negf %486 : vector<2x42xf32>
      %488 = math.exp %487 : vector<2x42xf32>
      %cst_408 = arith.constant 1.000000e+00 : f32
      %489 = vector.broadcast %cst_408 : f32 to vector<2x42xf32>
      %490 = arith.addf %489, %488 : vector<2x42xf32>
      %491 = arith.divf %489, %490 : vector<2x42xf32>
      %492 = vector.extract_strided_slice %469 {offsets = [0, 42], sizes = [2, 14], strides = [1, 1]} : vector<2x56xf32> to vector<2x14xf32>
      %493 = math.tanh %492 : vector<2x14xf32>
      %494 = vector.extract_strided_slice %491 {offsets = [0, 14], sizes = [2, 14], strides = [1, 1]} : vector<2x42xf32> to vector<2x14xf32>
      %495 = arith.mulf %494, %arg30 : vector<2x14xf32>
      %496 = vector.extract_strided_slice %491 {offsets = [0, 0], sizes = [2, 14], strides = [1, 1]} : vector<2x42xf32> to vector<2x14xf32>
      %497 = arith.mulf %496, %493 : vector<2x14xf32>
      %498 = arith.addf %495, %497 : vector<2x14xf32>
      %499 = vector.extract_strided_slice %491 {offsets = [0, 28], sizes = [2, 14], strides = [1, 1]} : vector<2x42xf32> to vector<2x14xf32>
      %500 = math.tanh %498 : vector<2x14xf32>
      %501 = arith.mulf %499, %500 : vector<2x14xf32>
      %502 = arith.index_cast %arg26 : i32 to index
      %c0_409 = arith.constant 0 : index
      %c0_410 = arith.constant 0 : index
      %503 = vector.load %arg24[%502, %c0_409, %c0_410] : memref<8x2x14xf32, #tpu.memory_space<vmem>>, vector<1x2x14xf32>
      %504 = vector.shape_cast %503 : vector<1x2x14xf32> to vector<2x14xf32>
      %505 = vector.shape_cast %485 : vector<2x14xf32> to vector<1x2x14xf32>
      tpu.vector_store %arg24[%502, %c0_409, %c0_410], %505 {strides = array<i32>} : memref<8x2x14xf32, #tpu.memory_space<vmem>>, vector<1x2x14xf32>,
      %506 = arith.index_cast %459 : i32 to index
      %c0_411 = arith.constant 0 : index
      %c0_412 = arith.constant 0 : index
      %507 = vector.load %arg25[%506, %c0_411, %c0_412] : memref<8x2x14xf32, #tpu.memory_space<vmem>>, vector<1x2x14xf32>
      %508 = vector.shape_cast %507 : vector<1x2x14xf32> to vector<2x14xf32>
      %509 = vector.shape_cast %501 : vector<2x14xf32> to vector<1x2x14xf32>
      tpu.vector_store %arg25[%506, %c0_411, %c0_412], %509 {strides = array<i32>} : memref<8x2x14xf32, #tpu.memory_space<vmem>>, vector<1x2x14xf32>,
      scf.yield %485, %482, %501, %498 : vector<2x14xf32>, vector<2x14xf32>, vector<2x14xf32>, vector<2x14xf32>
    }
    %c8_i32_92 = arith.constant 8 : i32
    %c0_93 = arith.constant 0 : index
    %c0_94 = arith.constant 0 : index
    %121 = vector.load %arg7[%c0_93, %c0_94] : memref<14x56xf32, #tpu.memory_space<vmem>>, vector<14x56xf32>
    %c0_95 = arith.constant 0 : index
    %c0_96 = arith.constant 0 : index
    %122 = vector.load %arg8[%c0_95, %c0_96] : memref<14x56xf32, #tpu.memory_space<vmem>>, vector<14x56xf32>
    %c0_97 = arith.constant 0 : index
    %c0_98 = arith.constant 0 : index
    %123 = vector.load %arg11[%c0_97, %c0_98] : memref<14x56xf32, #tpu.memory_space<vmem>>, vector<14x56xf32>
    %c0_99 = arith.constant 0 : index
    %c0_100 = arith.constant 0 : index
    %124 = vector.load %arg12[%c0_99, %c0_100] : memref<14x56xf32, #tpu.memory_space<vmem>>, vector<14x56xf32>
    %c0_101 = arith.constant 0 : index
    %c0_102 = arith.constant 0 : index
    %125 = vector.load %arg10[%c0_101, %c0_102] : memref<1x56xf32, #tpu.memory_space<vmem>>, vector<1x56xf32>
    %c0_103 = arith.constant 0 : index
    %c0_104 = arith.constant 0 : index
    %126 = vector.load %arg14[%c0_103, %c0_104] : memref<1x56xf32, #tpu.memory_space<vmem>>, vector<1x56xf32>
    %c0_105 = arith.constant 0 : index
    %c0_106 = arith.constant 0 : index
    %c0_107 = arith.constant 0 : index
    %127 = vector.load %arg24[%c0_105, %c0_106, %c0_107] : memref<8x2x14xf32, #tpu.memory_space<vmem>>, vector<1x2x14xf32>
    %128 = vector.shape_cast %127 : vector<1x2x14xf32> to vector<2x14xf32>
    %c0_108 = arith.constant 0 : index
    %c0_109 = arith.constant 0 : index
    %c0_110 = arith.constant 0 : index
    %129 = vector.load %arg25[%c0_108, %c0_109, %c0_110] : memref<8x2x14xf32, #tpu.memory_space<vmem>>, vector<1x2x14xf32>
    %130 = vector.shape_cast %129 : vector<1x2x14xf32> to vector<2x14xf32>
    %cst_111 = arith.constant dense<0.000000e+00> : vector<2x56xf32>
    %131 = tpu.matmul %128, %121, %cst_111 {dimension_numbers = #tpu.dot_dimension_numbers<[1], [0], [0], [1], [0, 0, 1, 1], [], []>} : vector<2x14xf32>, vector<14x56xf32>, vector<2x56xf32> -> vector<2x56xf32>
    %cst_112 = arith.constant dense<0.000000e+00> : vector<2x56xf32>
    %132 = tpu.matmul %130, %122, %cst_112 {dimension_numbers = #tpu.dot_dimension_numbers<[1], [0], [0], [1], [0, 0, 1, 1], [], []>} : vector<2x14xf32>, vector<14x56xf32>, vector<2x56xf32> -> vector<2x56xf32>
    %133 = arith.addf %131, %132 : vector<2x56xf32>
    %134 = vector.broadcast %125 : vector<1x56xf32> to vector<2x56xf32>
    %135 = arith.addf %133, %134 : vector<2x56xf32>
    %c0_113 = arith.constant 0 : index
    %c0_114 = arith.constant 0 : index
    %c0_115 = arith.constant 0 : index
    %136 = vector.load %arg22[%c0_113, %c0_114, %c0_115] : memref<8x2x56xf32, #tpu.memory_space<vmem>>, vector<1x2x56xf32>
    %137 = vector.shape_cast %136 : vector<1x2x56xf32> to vector<2x56xf32>
    %138 = vector.shape_cast %135 : vector<2x56xf32> to vector<1x2x56xf32>
    tpu.vector_store %arg22[%c0_113, %c0_114, %c0_115], %138 {strides = array<i32>} : memref<8x2x56xf32, #tpu.memory_space<vmem>>, vector<1x2x56xf32>,
    %cst_116 = arith.constant dense<0.000000e+00> : vector<2x56xf32>
    %139 = tpu.matmul %128, %123, %cst_116 {dimension_numbers = #tpu.dot_dimension_numbers<[1], [0], [0], [1], [0, 0, 1, 1], [], []>} : vector<2x14xf32>, vector<14x56xf32>, vector<2x56xf32> -> vector<2x56xf32>
    %cst_117 = arith.constant dense<0.000000e+00> : vector<2x56xf32>
    %140 = tpu.matmul %130, %124, %cst_117 {dimension_numbers = #tpu.dot_dimension_numbers<[1], [0], [0], [1], [0, 0, 1, 1], [], []>} : vector<2x14xf32>, vector<14x56xf32>, vector<2x56xf32> -> vector<2x56xf32>
    %141 = arith.addf %139, %140 : vector<2x56xf32>
    %142 = vector.broadcast %126 : vector<1x56xf32> to vector<2x56xf32>
    %143 = arith.addf %141, %142 : vector<2x56xf32>
    %c0_118 = arith.constant 0 : index
    %c0_119 = arith.constant 0 : index
    %c0_120 = arith.constant 0 : index
    %144 = vector.load %arg23[%c0_118, %c0_119, %c0_120] : memref<8x2x56xf32, #tpu.memory_space<vmem>>, vector<1x2x56xf32>
    %145 = vector.shape_cast %144 : vector<1x2x56xf32> to vector<2x56xf32>
    %146 = vector.shape_cast %143 : vector<2x56xf32> to vector<1x2x56xf32>
    tpu.vector_store %arg23[%c0_118, %c0_119, %c0_120], %146 {strides = array<i32>} : memref<8x2x56xf32, #tpu.memory_space<vmem>>, vector<1x2x56xf32>,
    %c1_121 = arith.constant 1 : index
    %c0_122 = arith.constant 0 : index
    %c0_123 = arith.constant 0 : index
    %147 = vector.load %arg24[%c1_121, %c0_122, %c0_123] : memref<8x2x14xf32, #tpu.memory_space<vmem>>, vector<1x2x14xf32>
    %148 = vector.shape_cast %147 : vector<1x2x14xf32> to vector<2x14xf32>
    %c1_124 = arith.constant 1 : index
    %c0_125 = arith.constant 0 : index
    %c0_126 = arith.constant 0 : index
    %149 = vector.load %arg25[%c1_124, %c0_125, %c0_126] : memref<8x2x14xf32, #tpu.memory_space<vmem>>, vector<1x2x14xf32>
    %150 = vector.shape_cast %149 : vector<1x2x14xf32> to vector<2x14xf32>
    %cst_127 = arith.constant dense<0.000000e+00> : vector<2x56xf32>
    %151 = tpu.matmul %148, %121, %cst_127 {dimension_numbers = #tpu.dot_dimension_numbers<[1], [0], [0], [1], [0, 0, 1, 1], [], []>} : vector<2x14xf32>, vector<14x56xf32>, vector<2x56xf32> -> vector<2x56xf32>
    %cst_128 = arith.constant dense<0.000000e+00> : vector<2x56xf32>
    %152 = tpu.matmul %150, %122, %cst_128 {dimension_numbers = #tpu.dot_dimension_numbers<[1], [0], [0], [1], [0, 0, 1, 1], [], []>} : vector<2x14xf32>, vector<14x56xf32>, vector<2x56xf32> -> vector<2x56xf32>
    %153 = arith.addf %151, %152 : vector<2x56xf32>
    %154 = vector.broadcast %125 : vector<1x56xf32> to vector<2x56xf32>
    %155 = arith.addf %153, %154 : vector<2x56xf32>
    %c1_129 = arith.constant 1 : index
    %c0_130 = arith.constant 0 : index
    %c0_131 = arith.constant 0 : index
    %156 = vector.load %arg22[%c1_129, %c0_130, %c0_131] : memref<8x2x56xf32, #tpu.memory_space<vmem>>, vector<1x2x56xf32>
    %157 = vector.shape_cast %156 : vector<1x2x56xf32> to vector<2x56xf32>
    %158 = vector.shape_cast %155 : vector<2x56xf32> to vector<1x2x56xf32>
    tpu.vector_store %arg22[%c1_129, %c0_130, %c0_131], %158 {strides = array<i32>} : memref<8x2x56xf32, #tpu.memory_space<vmem>>, vector<1x2x56xf32>,
    %cst_132 = arith.constant dense<0.000000e+00> : vector<2x56xf32>
    %159 = tpu.matmul %148, %123, %cst_132 {dimension_numbers = #tpu.dot_dimension_numbers<[1], [0], [0], [1], [0, 0, 1, 1], [], []>} : vector<2x14xf32>, vector<14x56xf32>, vector<2x56xf32> -> vector<2x56xf32>
    %cst_133 = arith.constant dense<0.000000e+00> : vector<2x56xf32>
    %160 = tpu.matmul %150, %124, %cst_133 {dimension_numbers = #tpu.dot_dimension_numbers<[1], [0], [0], [1], [0, 0, 1, 1], [], []>} : vector<2x14xf32>, vector<14x56xf32>, vector<2x56xf32> -> vector<2x56xf32>
    %161 = arith.addf %159, %160 : vector<2x56xf32>
    %162 = vector.broadcast %126 : vector<1x56xf32> to vector<2x56xf32>
    %163 = arith.addf %161, %162 : vector<2x56xf32>
    %c1_134 = arith.constant 1 : index
    %c0_135 = arith.constant 0 : index
    %c0_136 = arith.constant 0 : index
    %164 = vector.load %arg23[%c1_134, %c0_135, %c0_136] : memref<8x2x56xf32, #tpu.memory_space<vmem>>, vector<1x2x56xf32>
    %165 = vector.shape_cast %164 : vector<1x2x56xf32> to vector<2x56xf32>
    %166 = vector.shape_cast %163 : vector<2x56xf32> to vector<1x2x56xf32>
    tpu.vector_store %arg23[%c1_134, %c0_135, %c0_136], %166 {strides = array<i32>} : memref<8x2x56xf32, #tpu.memory_space<vmem>>, vector<1x2x56xf32>,
    %c2_137 = arith.constant 2 : index
    %c0_138 = arith.constant 0 : index
    %c0_139 = arith.constant 0 : index
    %167 = vector.load %arg24[%c2_137, %c0_138, %c0_139] : memref<8x2x14xf32, #tpu.memory_space<vmem>>, vector<1x2x14xf32>
    %168 = vector.shape_cast %167 : vector<1x2x14xf32> to vector<2x14xf32>
    %c2_140 = arith.constant 2 : index
    %c0_141 = arith.constant 0 : index
    %c0_142 = arith.constant 0 : index
    %169 = vector.load %arg25[%c2_140, %c0_141, %c0_142] : memref<8x2x14xf32, #tpu.memory_space<vmem>>, vector<1x2x14xf32>
    %170 = vector.shape_cast %169 : vector<1x2x14xf32> to vector<2x14xf32>
    %cst_143 = arith.constant dense<0.000000e+00> : vector<2x56xf32>
    %171 = tpu.matmul %168, %121, %cst_143 {dimension_numbers = #tpu.dot_dimension_numbers<[1], [0], [0], [1], [0, 0, 1, 1], [], []>} : vector<2x14xf32>, vector<14x56xf32>, vector<2x56xf32> -> vector<2x56xf32>
    %cst_144 = arith.constant dense<0.000000e+00> : vector<2x56xf32>
    %172 = tpu.matmul %170, %122, %cst_144 {dimension_numbers = #tpu.dot_dimension_numbers<[1], [0], [0], [1], [0, 0, 1, 1], [], []>} : vector<2x14xf32>, vector<14x56xf32>, vector<2x56xf32> -> vector<2x56xf32>
    %173 = arith.addf %171, %172 : vector<2x56xf32>
    %174 = vector.broadcast %125 : vector<1x56xf32> to vector<2x56xf32>
    %175 = arith.addf %173, %174 : vector<2x56xf32>
    %c2_145 = arith.constant 2 : index
    %c0_146 = arith.constant 0 : index
    %c0_147 = arith.constant 0 : index
    %176 = vector.load %arg22[%c2_145, %c0_146, %c0_147] : memref<8x2x56xf32, #tpu.memory_space<vmem>>, vector<1x2x56xf32>
    %177 = vector.shape_cast %176 : vector<1x2x56xf32> to vector<2x56xf32>
    %178 = vector.shape_cast %175 : vector<2x56xf32> to vector<1x2x56xf32>
    tpu.vector_store %arg22[%c2_145, %c0_146, %c0_147], %178 {strides = array<i32>} : memref<8x2x56xf32, #tpu.memory_space<vmem>>, vector<1x2x56xf32>,
    %cst_148 = arith.constant dense<0.000000e+00> : vector<2x56xf32>
    %179 = tpu.matmul %168, %123, %cst_148 {dimension_numbers = #tpu.dot_dimension_numbers<[1], [0], [0], [1], [0, 0, 1, 1], [], []>} : vector<2x14xf32>, vector<14x56xf32>, vector<2x56xf32> -> vector<2x56xf32>
    %cst_149 = arith.constant dense<0.000000e+00> : vector<2x56xf32>
    %180 = tpu.matmul %170, %124, %cst_149 {dimension_numbers = #tpu.dot_dimension_numbers<[1], [0], [0], [1], [0, 0, 1, 1], [], []>} : vector<2x14xf32>, vector<14x56xf32>, vector<2x56xf32> -> vector<2x56xf32>
    %181 = arith.addf %179, %180 : vector<2x56xf32>
    %182 = vector.broadcast %126 : vector<1x56xf32> to vector<2x56xf32>
    %183 = arith.addf %181, %182 : vector<2x56xf32>
    %c2_150 = arith.constant 2 : index
    %c0_151 = arith.constant 0 : index
    %c0_152 = arith.constant 0 : index
    %184 = vector.load %arg23[%c2_150, %c0_151, %c0_152] : memref<8x2x56xf32, #tpu.memory_space<vmem>>, vector<1x2x56xf32>
    %185 = vector.shape_cast %184 : vector<1x2x56xf32> to vector<2x56xf32>
    %186 = vector.shape_cast %183 : vector<2x56xf32> to vector<1x2x56xf32>
    tpu.vector_store %arg23[%c2_150, %c0_151, %c0_152], %186 {strides = array<i32>} : memref<8x2x56xf32, #tpu.memory_space<vmem>>, vector<1x2x56xf32>,
    %c3_153 = arith.constant 3 : index
    %c0_154 = arith.constant 0 : index
    %c0_155 = arith.constant 0 : index
    %187 = vector.load %arg24[%c3_153, %c0_154, %c0_155] : memref<8x2x14xf32, #tpu.memory_space<vmem>>, vector<1x2x14xf32>
    %188 = vector.shape_cast %187 : vector<1x2x14xf32> to vector<2x14xf32>
    %c3_156 = arith.constant 3 : index
    %c0_157 = arith.constant 0 : index
    %c0_158 = arith.constant 0 : index
    %189 = vector.load %arg25[%c3_156, %c0_157, %c0_158] : memref<8x2x14xf32, #tpu.memory_space<vmem>>, vector<1x2x14xf32>
    %190 = vector.shape_cast %189 : vector<1x2x14xf32> to vector<2x14xf32>
    %cst_159 = arith.constant dense<0.000000e+00> : vector<2x56xf32>
    %191 = tpu.matmul %188, %121, %cst_159 {dimension_numbers = #tpu.dot_dimension_numbers<[1], [0], [0], [1], [0, 0, 1, 1], [], []>} : vector<2x14xf32>, vector<14x56xf32>, vector<2x56xf32> -> vector<2x56xf32>
    %cst_160 = arith.constant dense<0.000000e+00> : vector<2x56xf32>
    %192 = tpu.matmul %190, %122, %cst_160 {dimension_numbers = #tpu.dot_dimension_numbers<[1], [0], [0], [1], [0, 0, 1, 1], [], []>} : vector<2x14xf32>, vector<14x56xf32>, vector<2x56xf32> -> vector<2x56xf32>
    %193 = arith.addf %191, %192 : vector<2x56xf32>
    %194 = vector.broadcast %125 : vector<1x56xf32> to vector<2x56xf32>
    %195 = arith.addf %193, %194 : vector<2x56xf32>
    %c3_161 = arith.constant 3 : index
    %c0_162 = arith.constant 0 : index
    %c0_163 = arith.constant 0 : index
    %196 = vector.load %arg22[%c3_161, %c0_162, %c0_163] : memref<8x2x56xf32, #tpu.memory_space<vmem>>, vector<1x2x56xf32>
    %197 = vector.shape_cast %196 : vector<1x2x56xf32> to vector<2x56xf32>
    %198 = vector.shape_cast %195 : vector<2x56xf32> to vector<1x2x56xf32>
    tpu.vector_store %arg22[%c3_161, %c0_162, %c0_163], %198 {strides = array<i32>} : memref<8x2x56xf32, #tpu.memory_space<vmem>>, vector<1x2x56xf32>,
    %cst_164 = arith.constant dense<0.000000e+00> : vector<2x56xf32>
    %199 = tpu.matmul %188, %123, %cst_164 {dimension_numbers = #tpu.dot_dimension_numbers<[1], [0], [0], [1], [0, 0, 1, 1], [], []>} : vector<2x14xf32>, vector<14x56xf32>, vector<2x56xf32> -> vector<2x56xf32>
    %cst_165 = arith.constant dense<0.000000e+00> : vector<2x56xf32>
    %200 = tpu.matmul %190, %124, %cst_165 {dimension_numbers = #tpu.dot_dimension_numbers<[1], [0], [0], [1], [0, 0, 1, 1], [], []>} : vector<2x14xf32>, vector<14x56xf32>, vector<2x56xf32> -> vector<2x56xf32>
    %201 = arith.addf %199, %200 : vector<2x56xf32>
    %202 = vector.broadcast %126 : vector<1x56xf32> to vector<2x56xf32>
    %203 = arith.addf %201, %202 : vector<2x56xf32>
    %c3_166 = arith.constant 3 : index
    %c0_167 = arith.constant 0 : index
    %c0_168 = arith.constant 0 : index
    %204 = vector.load %arg23[%c3_166, %c0_167, %c0_168] : memref<8x2x56xf32, #tpu.memory_space<vmem>>, vector<1x2x56xf32>
    %205 = vector.shape_cast %204 : vector<1x2x56xf32> to vector<2x56xf32>
    %206 = vector.shape_cast %203 : vector<2x56xf32> to vector<1x2x56xf32>
    tpu.vector_store %arg23[%c3_166, %c0_167, %c0_168], %206 {strides = array<i32>} : memref<8x2x56xf32, #tpu.memory_space<vmem>>, vector<1x2x56xf32>,
    %c4_169 = arith.constant 4 : index
    %c0_170 = arith.constant 0 : index
    %c0_171 = arith.constant 0 : index
    %207 = vector.load %arg24[%c4_169, %c0_170, %c0_171] : memref<8x2x14xf32, #tpu.memory_space<vmem>>, vector<1x2x14xf32>
    %208 = vector.shape_cast %207 : vector<1x2x14xf32> to vector<2x14xf32>
    %c4_172 = arith.constant 4 : index
    %c0_173 = arith.constant 0 : index
    %c0_174 = arith.constant 0 : index
    %209 = vector.load %arg25[%c4_172, %c0_173, %c0_174] : memref<8x2x14xf32, #tpu.memory_space<vmem>>, vector<1x2x14xf32>
    %210 = vector.shape_cast %209 : vector<1x2x14xf32> to vector<2x14xf32>
    %cst_175 = arith.constant dense<0.000000e+00> : vector<2x56xf32>
    %211 = tpu.matmul %208, %121, %cst_175 {dimension_numbers = #tpu.dot_dimension_numbers<[1], [0], [0], [1], [0, 0, 1, 1], [], []>} : vector<2x14xf32>, vector<14x56xf32>, vector<2x56xf32> -> vector<2x56xf32>
    %cst_176 = arith.constant dense<0.000000e+00> : vector<2x56xf32>
    %212 = tpu.matmul %210, %122, %cst_176 {dimension_numbers = #tpu.dot_dimension_numbers<[1], [0], [0], [1], [0, 0, 1, 1], [], []>} : vector<2x14xf32>, vector<14x56xf32>, vector<2x56xf32> -> vector<2x56xf32>
    %213 = arith.addf %211, %212 : vector<2x56xf32>
    %214 = vector.broadcast %125 : vector<1x56xf32> to vector<2x56xf32>
    %215 = arith.addf %213, %214 : vector<2x56xf32>
    %c4_177 = arith.constant 4 : index
    %c0_178 = arith.constant 0 : index
    %c0_179 = arith.constant 0 : index
    %216 = vector.load %arg22[%c4_177, %c0_178, %c0_179] : memref<8x2x56xf32, #tpu.memory_space<vmem>>, vector<1x2x56xf32>
    %217 = vector.shape_cast %216 : vector<1x2x56xf32> to vector<2x56xf32>
    %218 = vector.shape_cast %215 : vector<2x56xf32> to vector<1x2x56xf32>
    tpu.vector_store %arg22[%c4_177, %c0_178, %c0_179], %218 {strides = array<i32>} : memref<8x2x56xf32, #tpu.memory_space<vmem>>, vector<1x2x56xf32>,
    %cst_180 = arith.constant dense<0.000000e+00> : vector<2x56xf32>
    %219 = tpu.matmul %208, %123, %cst_180 {dimension_numbers = #tpu.dot_dimension_numbers<[1], [0], [0], [1], [0, 0, 1, 1], [], []>} : vector<2x14xf32>, vector<14x56xf32>, vector<2x56xf32> -> vector<2x56xf32>
    %cst_181 = arith.constant dense<0.000000e+00> : vector<2x56xf32>
    %220 = tpu.matmul %210, %124, %cst_181 {dimension_numbers = #tpu.dot_dimension_numbers<[1], [0], [0], [1], [0, 0, 1, 1], [], []>} : vector<2x14xf32>, vector<14x56xf32>, vector<2x56xf32> -> vector<2x56xf32>
    %221 = arith.addf %219, %220 : vector<2x56xf32>
    %222 = vector.broadcast %126 : vector<1x56xf32> to vector<2x56xf32>
    %223 = arith.addf %221, %222 : vector<2x56xf32>
    %c4_182 = arith.constant 4 : index
    %c0_183 = arith.constant 0 : index
    %c0_184 = arith.constant 0 : index
    %224 = vector.load %arg23[%c4_182, %c0_183, %c0_184] : memref<8x2x56xf32, #tpu.memory_space<vmem>>, vector<1x2x56xf32>
    %225 = vector.shape_cast %224 : vector<1x2x56xf32> to vector<2x56xf32>
    %226 = vector.shape_cast %223 : vector<2x56xf32> to vector<1x2x56xf32>
    tpu.vector_store %arg23[%c4_182, %c0_183, %c0_184], %226 {strides = array<i32>} : memref<8x2x56xf32, #tpu.memory_space<vmem>>, vector<1x2x56xf32>,
    %c5_185 = arith.constant 5 : index
    %c0_186 = arith.constant 0 : index
    %c0_187 = arith.constant 0 : index
    %227 = vector.load %arg24[%c5_185, %c0_186, %c0_187] : memref<8x2x14xf32, #tpu.memory_space<vmem>>, vector<1x2x14xf32>
    %228 = vector.shape_cast %227 : vector<1x2x14xf32> to vector<2x14xf32>
    %c5_188 = arith.constant 5 : index
    %c0_189 = arith.constant 0 : index
    %c0_190 = arith.constant 0 : index
    %229 = vector.load %arg25[%c5_188, %c0_189, %c0_190] : memref<8x2x14xf32, #tpu.memory_space<vmem>>, vector<1x2x14xf32>
    %230 = vector.shape_cast %229 : vector<1x2x14xf32> to vector<2x14xf32>
    %cst_191 = arith.constant dense<0.000000e+00> : vector<2x56xf32>
    %231 = tpu.matmul %228, %121, %cst_191 {dimension_numbers = #tpu.dot_dimension_numbers<[1], [0], [0], [1], [0, 0, 1, 1], [], []>} : vector<2x14xf32>, vector<14x56xf32>, vector<2x56xf32> -> vector<2x56xf32>
    %cst_192 = arith.constant dense<0.000000e+00> : vector<2x56xf32>
    %232 = tpu.matmul %230, %122, %cst_192 {dimension_numbers = #tpu.dot_dimension_numbers<[1], [0], [0], [1], [0, 0, 1, 1], [], []>} : vector<2x14xf32>, vector<14x56xf32>, vector<2x56xf32> -> vector<2x56xf32>
    %233 = arith.addf %231, %232 : vector<2x56xf32>
    %234 = vector.broadcast %125 : vector<1x56xf32> to vector<2x56xf32>
    %235 = arith.addf %233, %234 : vector<2x56xf32>
    %c5_193 = arith.constant 5 : index
    %c0_194 = arith.constant 0 : index
    %c0_195 = arith.constant 0 : index
    %236 = vector.load %arg22[%c5_193, %c0_194, %c0_195] : memref<8x2x56xf32, #tpu.memory_space<vmem>>, vector<1x2x56xf32>
    %237 = vector.shape_cast %236 : vector<1x2x56xf32> to vector<2x56xf32>
    %238 = vector.shape_cast %235 : vector<2x56xf32> to vector<1x2x56xf32>
    tpu.vector_store %arg22[%c5_193, %c0_194, %c0_195], %238 {strides = array<i32>} : memref<8x2x56xf32, #tpu.memory_space<vmem>>, vector<1x2x56xf32>,
    %cst_196 = arith.constant dense<0.000000e+00> : vector<2x56xf32>
    %239 = tpu.matmul %228, %123, %cst_196 {dimension_numbers = #tpu.dot_dimension_numbers<[1], [0], [0], [1], [0, 0, 1, 1], [], []>} : vector<2x14xf32>, vector<14x56xf32>, vector<2x56xf32> -> vector<2x56xf32>
    %cst_197 = arith.constant dense<0.000000e+00> : vector<2x56xf32>
    %240 = tpu.matmul %230, %124, %cst_197 {dimension_numbers = #tpu.dot_dimension_numbers<[1], [0], [0], [1], [0, 0, 1, 1], [], []>} : vector<2x14xf32>, vector<14x56xf32>, vector<2x56xf32> -> vector<2x56xf32>
    %241 = arith.addf %239, %240 : vector<2x56xf32>
    %242 = vector.broadcast %126 : vector<1x56xf32> to vector<2x56xf32>
    %243 = arith.addf %241, %242 : vector<2x56xf32>
    %c5_198 = arith.constant 5 : index
    %c0_199 = arith.constant 0 : index
    %c0_200 = arith.constant 0 : index
    %244 = vector.load %arg23[%c5_198, %c0_199, %c0_200] : memref<8x2x56xf32, #tpu.memory_space<vmem>>, vector<1x2x56xf32>
    %245 = vector.shape_cast %244 : vector<1x2x56xf32> to vector<2x56xf32>
    %246 = vector.shape_cast %243 : vector<2x56xf32> to vector<1x2x56xf32>
    tpu.vector_store %arg23[%c5_198, %c0_199, %c0_200], %246 {strides = array<i32>} : memref<8x2x56xf32, #tpu.memory_space<vmem>>, vector<1x2x56xf32>,
    %c6_201 = arith.constant 6 : index
    %c0_202 = arith.constant 0 : index
    %c0_203 = arith.constant 0 : index
    %247 = vector.load %arg24[%c6_201, %c0_202, %c0_203] : memref<8x2x14xf32, #tpu.memory_space<vmem>>, vector<1x2x14xf32>
    %248 = vector.shape_cast %247 : vector<1x2x14xf32> to vector<2x14xf32>
    %c6_204 = arith.constant 6 : index
    %c0_205 = arith.constant 0 : index
    %c0_206 = arith.constant 0 : index
    %249 = vector.load %arg25[%c6_204, %c0_205, %c0_206] : memref<8x2x14xf32, #tpu.memory_space<vmem>>, vector<1x2x14xf32>
    %250 = vector.shape_cast %249 : vector<1x2x14xf32> to vector<2x14xf32>
    %cst_207 = arith.constant dense<0.000000e+00> : vector<2x56xf32>
    %251 = tpu.matmul %248, %121, %cst_207 {dimension_numbers = #tpu.dot_dimension_numbers<[1], [0], [0], [1], [0, 0, 1, 1], [], []>} : vector<2x14xf32>, vector<14x56xf32>, vector<2x56xf32> -> vector<2x56xf32>
    %cst_208 = arith.constant dense<0.000000e+00> : vector<2x56xf32>
    %252 = tpu.matmul %250, %122, %cst_208 {dimension_numbers = #tpu.dot_dimension_numbers<[1], [0], [0], [1], [0, 0, 1, 1], [], []>} : vector<2x14xf32>, vector<14x56xf32>, vector<2x56xf32> -> vector<2x56xf32>
    %253 = arith.addf %251, %252 : vector<2x56xf32>
    %254 = vector.broadcast %125 : vector<1x56xf32> to vector<2x56xf32>
    %255 = arith.addf %253, %254 : vector<2x56xf32>
    %c6_209 = arith.constant 6 : index
    %c0_210 = arith.constant 0 : index
    %c0_211 = arith.constant 0 : index
    %256 = vector.load %arg22[%c6_209, %c0_210, %c0_211] : memref<8x2x56xf32, #tpu.memory_space<vmem>>, vector<1x2x56xf32>
    %257 = vector.shape_cast %256 : vector<1x2x56xf32> to vector<2x56xf32>
    %258 = vector.shape_cast %255 : vector<2x56xf32> to vector<1x2x56xf32>
    tpu.vector_store %arg22[%c6_209, %c0_210, %c0_211], %258 {strides = array<i32>} : memref<8x2x56xf32, #tpu.memory_space<vmem>>, vector<1x2x56xf32>,
    %cst_212 = arith.constant dense<0.000000e+00> : vector<2x56xf32>
    %259 = tpu.matmul %248, %123, %cst_212 {dimension_numbers = #tpu.dot_dimension_numbers<[1], [0], [0], [1], [0, 0, 1, 1], [], []>} : vector<2x14xf32>, vector<14x56xf32>, vector<2x56xf32> -> vector<2x56xf32>
    %cst_213 = arith.constant dense<0.000000e+00> : vector<2x56xf32>
    %260 = tpu.matmul %250, %124, %cst_213 {dimension_numbers = #tpu.dot_dimension_numbers<[1], [0], [0], [1], [0, 0, 1, 1], [], []>} : vector<2x14xf32>, vector<14x56xf32>, vector<2x56xf32> -> vector<2x56xf32>
    %261 = arith.addf %259, %260 : vector<2x56xf32>
    %262 = vector.broadcast %126 : vector<1x56xf32> to vector<2x56xf32>
    %263 = arith.addf %261, %262 : vector<2x56xf32>
    %c6_214 = arith.constant 6 : index
    %c0_215 = arith.constant 0 : index
    %c0_216 = arith.constant 0 : index
    %264 = vector.load %arg23[%c6_214, %c0_215, %c0_216] : memref<8x2x56xf32, #tpu.memory_space<vmem>>, vector<1x2x56xf32>
    %265 = vector.shape_cast %264 : vector<1x2x56xf32> to vector<2x56xf32>
    %266 = vector.shape_cast %263 : vector<2x56xf32> to vector<1x2x56xf32>
    tpu.vector_store %arg23[%c6_214, %c0_215, %c0_216], %266 {strides = array<i32>} : memref<8x2x56xf32, #tpu.memory_space<vmem>>, vector<1x2x56xf32>,
    %c7_217 = arith.constant 7 : index
    %c0_218 = arith.constant 0 : index
    %c0_219 = arith.constant 0 : index
    %267 = vector.load %arg24[%c7_217, %c0_218, %c0_219] : memref<8x2x14xf32, #tpu.memory_space<vmem>>, vector<1x2x14xf32>
    %268 = vector.shape_cast %267 : vector<1x2x14xf32> to vector<2x14xf32>
    %c7_220 = arith.constant 7 : index
    %c0_221 = arith.constant 0 : index
    %c0_222 = arith.constant 0 : index
    %269 = vector.load %arg25[%c7_220, %c0_221, %c0_222] : memref<8x2x14xf32, #tpu.memory_space<vmem>>, vector<1x2x14xf32>
    %270 = vector.shape_cast %269 : vector<1x2x14xf32> to vector<2x14xf32>
    %cst_223 = arith.constant dense<0.000000e+00> : vector<2x56xf32>
    %271 = tpu.matmul %268, %121, %cst_223 {dimension_numbers = #tpu.dot_dimension_numbers<[1], [0], [0], [1], [0, 0, 1, 1], [], []>} : vector<2x14xf32>, vector<14x56xf32>, vector<2x56xf32> -> vector<2x56xf32>
    %cst_224 = arith.constant dense<0.000000e+00> : vector<2x56xf32>
    %272 = tpu.matmul %270, %122, %cst_224 {dimension_numbers = #tpu.dot_dimension_numbers<[1], [0], [0], [1], [0, 0, 1, 1], [], []>} : vector<2x14xf32>, vector<14x56xf32>, vector<2x56xf32> -> vector<2x56xf32>
    %273 = arith.addf %271, %272 : vector<2x56xf32>
    %274 = vector.broadcast %125 : vector<1x56xf32> to vector<2x56xf32>
    %275 = arith.addf %273, %274 : vector<2x56xf32>
    %c7_225 = arith.constant 7 : index
    %c0_226 = arith.constant 0 : index
    %c0_227 = arith.constant 0 : index
    %276 = vector.load %arg22[%c7_225, %c0_226, %c0_227] : memref<8x2x56xf32, #tpu.memory_space<vmem>>, vector<1x2x56xf32>
    %277 = vector.shape_cast %276 : vector<1x2x56xf32> to vector<2x56xf32>
    %278 = vector.shape_cast %275 : vector<2x56xf32> to vector<1x2x56xf32>
    tpu.vector_store %arg22[%c7_225, %c0_226, %c0_227], %278 {strides = array<i32>} : memref<8x2x56xf32, #tpu.memory_space<vmem>>, vector<1x2x56xf32>,
    %cst_228 = arith.constant dense<0.000000e+00> : vector<2x56xf32>
    %279 = tpu.matmul %268, %123, %cst_228 {dimension_numbers = #tpu.dot_dimension_numbers<[1], [0], [0], [1], [0, 0, 1, 1], [], []>} : vector<2x14xf32>, vector<14x56xf32>, vector<2x56xf32> -> vector<2x56xf32>
    %cst_229 = arith.constant dense<0.000000e+00> : vector<2x56xf32>
    %280 = tpu.matmul %270, %124, %cst_229 {dimension_numbers = #tpu.dot_dimension_numbers<[1], [0], [0], [1], [0, 0, 1, 1], [], []>} : vector<2x14xf32>, vector<14x56xf32>, vector<2x56xf32> -> vector<2x56xf32>
    %281 = arith.addf %279, %280 : vector<2x56xf32>
    %282 = vector.broadcast %126 : vector<1x56xf32> to vector<2x56xf32>
    %283 = arith.addf %281, %282 : vector<2x56xf32>
    %c7_230 = arith.constant 7 : index
    %c0_231 = arith.constant 0 : index
    %c0_232 = arith.constant 0 : index
    %284 = vector.load %arg23[%c7_230, %c0_231, %c0_232] : memref<8x2x56xf32, #tpu.memory_space<vmem>>, vector<1x2x56xf32>
    %285 = vector.shape_cast %284 : vector<1x2x56xf32> to vector<2x56xf32>
    %286 = vector.shape_cast %283 : vector<2x56xf32> to vector<1x2x56xf32>
    tpu.vector_store %arg23[%c7_230, %c0_231, %c0_232], %286 {strides = array<i32>} : memref<8x2x56xf32, #tpu.memory_space<vmem>>, vector<1x2x56xf32>,
    %c0_233 = arith.constant 0 : index
    %c0_234 = arith.constant 0 : index
    %287 = vector.load %arg9[%c0_233, %c0_234] : memref<14x56xf32, #tpu.memory_space<vmem>>, vector<14x56xf32>
    %c0_235 = arith.constant 0 : index
    %c0_236 = arith.constant 0 : index
    %288 = vector.load %arg13[%c0_235, %c0_236] : memref<14x56xf32, #tpu.memory_space<vmem>>, vector<14x56xf32>
    %c0_i32_237 = arith.constant 0 : i32
    %c8_i32_238 = arith.constant 8 : i32
    %289 = arith.addi %c0_i32_237, %c8_i32_238 : i32
    %c1_i32_239 = arith.constant 1 : i32
    %290:4 = scf.for %arg26 = %c0_i32_237 to %289 step %c1_i32_239 iter_args(%arg27 = %0, %arg28 = %0, %arg29 = %0, %arg30 = %0) -> (vector<2x14xf32>, vector<2x14xf32>, vector<2x14xf32>, vector<2x14xf32>)  : i32 {
      %c7_i32 = arith.constant 7 : i32
      %459 = arith.subi %c7_i32, %arg26 : i32
      %460 = arith.index_cast %arg26 : i32 to index
      %c0_401 = arith.constant 0 : index
      %c0_402 = arith.constant 0 : index
      %461 = vector.load %arg22[%460, %c0_401, %c0_402] : memref<8x2x56xf32, #tpu.memory_space<vmem>>, vector<1x2x56xf32>
      %462 = vector.shape_cast %461 : vector<1x2x56xf32> to vector<2x56xf32>
      %cst_403 = arith.constant dense<0.000000e+00> : vector<2x56xf32>
      %463 = tpu.matmul %arg27, %287, %cst_403 {dimension_numbers = #tpu.dot_dimension_numbers<[1], [0], [0], [1], [0, 0, 1, 1], [], []>} : vector<2x14xf32>, vector<14x56xf32>, vector<2x56xf32> -> vector<2x56xf32>
      %464 = arith.addf %462, %463 : vector<2x56xf32>
      %465 = arith.index_cast %459 : i32 to index
      %c0_404 = arith.constant 0 : index
      %c0_405 = arith.constant 0 : index
      %466 = vector.load %arg23[%465, %c0_404, %c0_405] : memref<8x2x56xf32, #tpu.memory_space<vmem>>, vector<1x2x56xf32>
      %467 = vector.shape_cast %466 : vector<1x2x56xf32> to vector<2x56xf32>
      %cst_406 = arith.constant dense<0.000000e+00> : vector<2x56xf32>
      %468 = tpu.matmul %arg29, %288, %cst_406 {dimension_numbers = #tpu.dot_dimension_numbers<[1], [0], [0], [1], [0, 0, 1, 1], [], []>} : vector<2x14xf32>, vector<14x56xf32>, vector<2x56xf32> -> vector<2x56xf32>
      %469 = arith.addf %467, %468 : vector<2x56xf32>
      %470 = vector.extract_strided_slice %464 {offsets = [0, 0], sizes = [2, 42], strides = [1, 1]} : vector<2x56xf32> to vector<2x42xf32>
      %471 = arith.negf %470 : vector<2x42xf32>
      %472 = math.exp %471 : vector<2x42xf32>
      %cst_407 = arith.constant 1.000000e+00 : f32
      %473 = vector.broadcast %cst_407 : f32 to vector<2x42xf32>
      %474 = arith.addf %473, %472 : vector<2x42xf32>
      %475 = arith.divf %473, %474 : vector<2x42xf32>
      %476 = vector.extract_strided_slice %464 {offsets = [0, 42], sizes = [2, 14], strides = [1, 1]} : vector<2x56xf32> to vector<2x14xf32>
      %477 = math.tanh %476 : vector<2x14xf32>
      %478 = vector.extract_strided_slice %475 {offsets = [0, 14], sizes = [2, 14], strides = [1, 1]} : vector<2x42xf32> to vector<2x14xf32>
      %479 = arith.mulf %478, %arg28 : vector<2x14xf32>
      %480 = vector.extract_strided_slice %475 {offsets = [0, 0], sizes = [2, 14], strides = [1, 1]} : vector<2x42xf32> to vector<2x14xf32>
      %481 = arith.mulf %480, %477 : vector<2x14xf32>
      %482 = arith.addf %479, %481 : vector<2x14xf32>
      %483 = vector.extract_strided_slice %475 {offsets = [0, 28], sizes = [2, 14], strides = [1, 1]} : vector<2x42xf32> to vector<2x14xf32>
      %484 = math.tanh %482 : vector<2x14xf32>
      %485 = arith.mulf %483, %484 : vector<2x14xf32>
      %486 = vector.extract_strided_slice %469 {offsets = [0, 0], sizes = [2, 42], strides = [1, 1]} : vector<2x56xf32> to vector<2x42xf32>
      %487 = arith.negf %486 : vector<2x42xf32>
      %488 = math.exp %487 : vector<2x42xf32>
      %cst_408 = arith.constant 1.000000e+00 : f32
      %489 = vector.broadcast %cst_408 : f32 to vector<2x42xf32>
      %490 = arith.addf %489, %488 : vector<2x42xf32>
      %491 = arith.divf %489, %490 : vector<2x42xf32>
      %492 = vector.extract_strided_slice %469 {offsets = [0, 42], sizes = [2, 14], strides = [1, 1]} : vector<2x56xf32> to vector<2x14xf32>
      %493 = math.tanh %492 : vector<2x14xf32>
      %494 = vector.extract_strided_slice %491 {offsets = [0, 14], sizes = [2, 14], strides = [1, 1]} : vector<2x42xf32> to vector<2x14xf32>
      %495 = arith.mulf %494, %arg30 : vector<2x14xf32>
      %496 = vector.extract_strided_slice %491 {offsets = [0, 0], sizes = [2, 14], strides = [1, 1]} : vector<2x42xf32> to vector<2x14xf32>
      %497 = arith.mulf %496, %493 : vector<2x14xf32>
      %498 = arith.addf %495, %497 : vector<2x14xf32>
      %499 = vector.extract_strided_slice %491 {offsets = [0, 28], sizes = [2, 14], strides = [1, 1]} : vector<2x42xf32> to vector<2x14xf32>
      %500 = math.tanh %498 : vector<2x14xf32>
      %501 = arith.mulf %499, %500 : vector<2x14xf32>
      %502 = arith.index_cast %arg26 : i32 to index
      %c0_409 = arith.constant 0 : index
      %c0_410 = arith.constant 0 : index
      %503 = vector.load %arg24[%502, %c0_409, %c0_410] : memref<8x2x14xf32, #tpu.memory_space<vmem>>, vector<1x2x14xf32>
      %504 = vector.shape_cast %503 : vector<1x2x14xf32> to vector<2x14xf32>
      %505 = vector.shape_cast %485 : vector<2x14xf32> to vector<1x2x14xf32>
      tpu.vector_store %arg24[%502, %c0_409, %c0_410], %505 {strides = array<i32>} : memref<8x2x14xf32, #tpu.memory_space<vmem>>, vector<1x2x14xf32>,
      %506 = arith.index_cast %459 : i32 to index
      %c0_411 = arith.constant 0 : index
      %c0_412 = arith.constant 0 : index
      %507 = vector.load %arg25[%506, %c0_411, %c0_412] : memref<8x2x14xf32, #tpu.memory_space<vmem>>, vector<1x2x14xf32>
      %508 = vector.shape_cast %507 : vector<1x2x14xf32> to vector<2x14xf32>
      %509 = vector.shape_cast %501 : vector<2x14xf32> to vector<1x2x14xf32>
      tpu.vector_store %arg25[%506, %c0_411, %c0_412], %509 {strides = array<i32>} : memref<8x2x14xf32, #tpu.memory_space<vmem>>, vector<1x2x14xf32>,
      scf.yield %485, %482, %501, %498 : vector<2x14xf32>, vector<2x14xf32>, vector<2x14xf32>, vector<2x14xf32>
    }
    %c8_i32_240 = arith.constant 8 : i32
    %c0_241 = arith.constant 0 : index
    %c0_242 = arith.constant 0 : index
    %291 = vector.load %arg15[%c0_241, %c0_242] : memref<14x56xf32, #tpu.memory_space<vmem>>, vector<14x56xf32>
    %c0_243 = arith.constant 0 : index
    %c0_244 = arith.constant 0 : index
    %292 = vector.load %arg16[%c0_243, %c0_244] : memref<14x56xf32, #tpu.memory_space<vmem>>, vector<14x56xf32>
    %c0_245 = arith.constant 0 : index
    %c0_246 = arith.constant 0 : index
    %293 = vector.load %arg18[%c0_245, %c0_246] : memref<1x56xf32, #tpu.memory_space<vmem>>, vector<1x56xf32>
    %c0_247 = arith.constant 0 : index
    %c0_248 = arith.constant 0 : index
    %c0_249 = arith.constant 0 : index
    %294 = vector.load %arg24[%c0_247, %c0_248, %c0_249] : memref<8x2x14xf32, #tpu.memory_space<vmem>>, vector<1x2x14xf32>
    %295 = vector.shape_cast %294 : vector<1x2x14xf32> to vector<2x14xf32>
    %cst_250 = arith.constant dense<0.000000e+00> : vector<2x56xf32>
    %296 = tpu.matmul %295, %291, %cst_250 {dimension_numbers = #tpu.dot_dimension_numbers<[1], [0], [0], [1], [0, 0, 1, 1], [], []>} : vector<2x14xf32>, vector<14x56xf32>, vector<2x56xf32> -> vector<2x56xf32>
    %c0_251 = arith.constant 0 : index
    %c0_252 = arith.constant 0 : index
    %c0_253 = arith.constant 0 : index
    %297 = vector.load %arg25[%c0_251, %c0_252, %c0_253] : memref<8x2x14xf32, #tpu.memory_space<vmem>>, vector<1x2x14xf32>
    %298 = vector.shape_cast %297 : vector<1x2x14xf32> to vector<2x14xf32>
    %cst_254 = arith.constant dense<0.000000e+00> : vector<2x56xf32>
    %299 = tpu.matmul %298, %292, %cst_254 {dimension_numbers = #tpu.dot_dimension_numbers<[1], [0], [0], [1], [0, 0, 1, 1], [], []>} : vector<2x14xf32>, vector<14x56xf32>, vector<2x56xf32> -> vector<2x56xf32>
    %300 = arith.addf %296, %299 : vector<2x56xf32>
    %301 = vector.broadcast %293 : vector<1x56xf32> to vector<2x56xf32>
    %302 = arith.addf %300, %301 : vector<2x56xf32>
    %c0_255 = arith.constant 0 : index
    %c0_256 = arith.constant 0 : index
    %c0_257 = arith.constant 0 : index
    %303 = vector.load %arg22[%c0_255, %c0_256, %c0_257] : memref<8x2x56xf32, #tpu.memory_space<vmem>>, vector<1x2x56xf32>
    %304 = vector.shape_cast %303 : vector<1x2x56xf32> to vector<2x56xf32>
    %305 = vector.shape_cast %302 : vector<2x56xf32> to vector<1x2x56xf32>
    tpu.vector_store %arg22[%c0_255, %c0_256, %c0_257], %305 {strides = array<i32>} : memref<8x2x56xf32, #tpu.memory_space<vmem>>, vector<1x2x56xf32>,
    %c1_258 = arith.constant 1 : index
    %c0_259 = arith.constant 0 : index
    %c0_260 = arith.constant 0 : index
    %306 = vector.load %arg24[%c1_258, %c0_259, %c0_260] : memref<8x2x14xf32, #tpu.memory_space<vmem>>, vector<1x2x14xf32>
    %307 = vector.shape_cast %306 : vector<1x2x14xf32> to vector<2x14xf32>
    %cst_261 = arith.constant dense<0.000000e+00> : vector<2x56xf32>
    %308 = tpu.matmul %307, %291, %cst_261 {dimension_numbers = #tpu.dot_dimension_numbers<[1], [0], [0], [1], [0, 0, 1, 1], [], []>} : vector<2x14xf32>, vector<14x56xf32>, vector<2x56xf32> -> vector<2x56xf32>
    %c1_262 = arith.constant 1 : index
    %c0_263 = arith.constant 0 : index
    %c0_264 = arith.constant 0 : index
    %309 = vector.load %arg25[%c1_262, %c0_263, %c0_264] : memref<8x2x14xf32, #tpu.memory_space<vmem>>, vector<1x2x14xf32>
    %310 = vector.shape_cast %309 : vector<1x2x14xf32> to vector<2x14xf32>
    %cst_265 = arith.constant dense<0.000000e+00> : vector<2x56xf32>
    %311 = tpu.matmul %310, %292, %cst_265 {dimension_numbers = #tpu.dot_dimension_numbers<[1], [0], [0], [1], [0, 0, 1, 1], [], []>} : vector<2x14xf32>, vector<14x56xf32>, vector<2x56xf32> -> vector<2x56xf32>
    %312 = arith.addf %308, %311 : vector<2x56xf32>
    %313 = vector.broadcast %293 : vector<1x56xf32> to vector<2x56xf32>
    %314 = arith.addf %312, %313 : vector<2x56xf32>
    %c1_266 = arith.constant 1 : index
    %c0_267 = arith.constant 0 : index
    %c0_268 = arith.constant 0 : index
    %315 = vector.load %arg22[%c1_266, %c0_267, %c0_268] : memref<8x2x56xf32, #tpu.memory_space<vmem>>, vector<1x2x56xf32>
    %316 = vector.shape_cast %315 : vector<1x2x56xf32> to vector<2x56xf32>
    %317 = vector.shape_cast %314 : vector<2x56xf32> to vector<1x2x56xf32>
    tpu.vector_store %arg22[%c1_266, %c0_267, %c0_268], %317 {strides = array<i32>} : memref<8x2x56xf32, #tpu.memory_space<vmem>>, vector<1x2x56xf32>,
    %c2_269 = arith.constant 2 : index
    %c0_270 = arith.constant 0 : index
    %c0_271 = arith.constant 0 : index
    %318 = vector.load %arg24[%c2_269, %c0_270, %c0_271] : memref<8x2x14xf32, #tpu.memory_space<vmem>>, vector<1x2x14xf32>
    %319 = vector.shape_cast %318 : vector<1x2x14xf32> to vector<2x14xf32>
    %cst_272 = arith.constant dense<0.000000e+00> : vector<2x56xf32>
    %320 = tpu.matmul %319, %291, %cst_272 {dimension_numbers = #tpu.dot_dimension_numbers<[1], [0], [0], [1], [0, 0, 1, 1], [], []>} : vector<2x14xf32>, vector<14x56xf32>, vector<2x56xf32> -> vector<2x56xf32>
    %c2_273 = arith.constant 2 : index
    %c0_274 = arith.constant 0 : index
    %c0_275 = arith.constant 0 : index
    %321 = vector.load %arg25[%c2_273, %c0_274, %c0_275] : memref<8x2x14xf32, #tpu.memory_space<vmem>>, vector<1x2x14xf32>
    %322 = vector.shape_cast %321 : vector<1x2x14xf32> to vector<2x14xf32>
    %cst_276 = arith.constant dense<0.000000e+00> : vector<2x56xf32>
    %323 = tpu.matmul %322, %292, %cst_276 {dimension_numbers = #tpu.dot_dimension_numbers<[1], [0], [0], [1], [0, 0, 1, 1], [], []>} : vector<2x14xf32>, vector<14x56xf32>, vector<2x56xf32> -> vector<2x56xf32>
    %324 = arith.addf %320, %323 : vector<2x56xf32>
    %325 = vector.broadcast %293 : vector<1x56xf32> to vector<2x56xf32>
    %326 = arith.addf %324, %325 : vector<2x56xf32>
    %c2_277 = arith.constant 2 : index
    %c0_278 = arith.constant 0 : index
    %c0_279 = arith.constant 0 : index
    %327 = vector.load %arg22[%c2_277, %c0_278, %c0_279] : memref<8x2x56xf32, #tpu.memory_space<vmem>>, vector<1x2x56xf32>
    %328 = vector.shape_cast %327 : vector<1x2x56xf32> to vector<2x56xf32>
    %329 = vector.shape_cast %326 : vector<2x56xf32> to vector<1x2x56xf32>
    tpu.vector_store %arg22[%c2_277, %c0_278, %c0_279], %329 {strides = array<i32>} : memref<8x2x56xf32, #tpu.memory_space<vmem>>, vector<1x2x56xf32>,
    %c3_280 = arith.constant 3 : index
    %c0_281 = arith.constant 0 : index
    %c0_282 = arith.constant 0 : index
    %330 = vector.load %arg24[%c3_280, %c0_281, %c0_282] : memref<8x2x14xf32, #tpu.memory_space<vmem>>, vector<1x2x14xf32>
    %331 = vector.shape_cast %330 : vector<1x2x14xf32> to vector<2x14xf32>
    %cst_283 = arith.constant dense<0.000000e+00> : vector<2x56xf32>
    %332 = tpu.matmul %331, %291, %cst_283 {dimension_numbers = #tpu.dot_dimension_numbers<[1], [0], [0], [1], [0, 0, 1, 1], [], []>} : vector<2x14xf32>, vector<14x56xf32>, vector<2x56xf32> -> vector<2x56xf32>
    %c3_284 = arith.constant 3 : index
    %c0_285 = arith.constant 0 : index
    %c0_286 = arith.constant 0 : index
    %333 = vector.load %arg25[%c3_284, %c0_285, %c0_286] : memref<8x2x14xf32, #tpu.memory_space<vmem>>, vector<1x2x14xf32>
    %334 = vector.shape_cast %333 : vector<1x2x14xf32> to vector<2x14xf32>
    %cst_287 = arith.constant dense<0.000000e+00> : vector<2x56xf32>
    %335 = tpu.matmul %334, %292, %cst_287 {dimension_numbers = #tpu.dot_dimension_numbers<[1], [0], [0], [1], [0, 0, 1, 1], [], []>} : vector<2x14xf32>, vector<14x56xf32>, vector<2x56xf32> -> vector<2x56xf32>
    %336 = arith.addf %332, %335 : vector<2x56xf32>
    %337 = vector.broadcast %293 : vector<1x56xf32> to vector<2x56xf32>
    %338 = arith.addf %336, %337 : vector<2x56xf32>
    %c3_288 = arith.constant 3 : index
    %c0_289 = arith.constant 0 : index
    %c0_290 = arith.constant 0 : index
    %339 = vector.load %arg22[%c3_288, %c0_289, %c0_290] : memref<8x2x56xf32, #tpu.memory_space<vmem>>, vector<1x2x56xf32>
    %340 = vector.shape_cast %339 : vector<1x2x56xf32> to vector<2x56xf32>
    %341 = vector.shape_cast %338 : vector<2x56xf32> to vector<1x2x56xf32>
    tpu.vector_store %arg22[%c3_288, %c0_289, %c0_290], %341 {strides = array<i32>} : memref<8x2x56xf32, #tpu.memory_space<vmem>>, vector<1x2x56xf32>,
    %c4_291 = arith.constant 4 : index
    %c0_292 = arith.constant 0 : index
    %c0_293 = arith.constant 0 : index
    %342 = vector.load %arg24[%c4_291, %c0_292, %c0_293] : memref<8x2x14xf32, #tpu.memory_space<vmem>>, vector<1x2x14xf32>
    %343 = vector.shape_cast %342 : vector<1x2x14xf32> to vector<2x14xf32>
    %cst_294 = arith.constant dense<0.000000e+00> : vector<2x56xf32>
    %344 = tpu.matmul %343, %291, %cst_294 {dimension_numbers = #tpu.dot_dimension_numbers<[1], [0], [0], [1], [0, 0, 1, 1], [], []>} : vector<2x14xf32>, vector<14x56xf32>, vector<2x56xf32> -> vector<2x56xf32>
    %c4_295 = arith.constant 4 : index
    %c0_296 = arith.constant 0 : index
    %c0_297 = arith.constant 0 : index
    %345 = vector.load %arg25[%c4_295, %c0_296, %c0_297] : memref<8x2x14xf32, #tpu.memory_space<vmem>>, vector<1x2x14xf32>
    %346 = vector.shape_cast %345 : vector<1x2x14xf32> to vector<2x14xf32>
    %cst_298 = arith.constant dense<0.000000e+00> : vector<2x56xf32>
    %347 = tpu.matmul %346, %292, %cst_298 {dimension_numbers = #tpu.dot_dimension_numbers<[1], [0], [0], [1], [0, 0, 1, 1], [], []>} : vector<2x14xf32>, vector<14x56xf32>, vector<2x56xf32> -> vector<2x56xf32>
    %348 = arith.addf %344, %347 : vector<2x56xf32>
    %349 = vector.broadcast %293 : vector<1x56xf32> to vector<2x56xf32>
    %350 = arith.addf %348, %349 : vector<2x56xf32>
    %c4_299 = arith.constant 4 : index
    %c0_300 = arith.constant 0 : index
    %c0_301 = arith.constant 0 : index
    %351 = vector.load %arg22[%c4_299, %c0_300, %c0_301] : memref<8x2x56xf32, #tpu.memory_space<vmem>>, vector<1x2x56xf32>
    %352 = vector.shape_cast %351 : vector<1x2x56xf32> to vector<2x56xf32>
    %353 = vector.shape_cast %350 : vector<2x56xf32> to vector<1x2x56xf32>
    tpu.vector_store %arg22[%c4_299, %c0_300, %c0_301], %353 {strides = array<i32>} : memref<8x2x56xf32, #tpu.memory_space<vmem>>, vector<1x2x56xf32>,
    %c5_302 = arith.constant 5 : index
    %c0_303 = arith.constant 0 : index
    %c0_304 = arith.constant 0 : index
    %354 = vector.load %arg24[%c5_302, %c0_303, %c0_304] : memref<8x2x14xf32, #tpu.memory_space<vmem>>, vector<1x2x14xf32>
    %355 = vector.shape_cast %354 : vector<1x2x14xf32> to vector<2x14xf32>
    %cst_305 = arith.constant dense<0.000000e+00> : vector<2x56xf32>
    %356 = tpu.matmul %355, %291, %cst_305 {dimension_numbers = #tpu.dot_dimension_numbers<[1], [0], [0], [1], [0, 0, 1, 1], [], []>} : vector<2x14xf32>, vector<14x56xf32>, vector<2x56xf32> -> vector<2x56xf32>
    %c5_306 = arith.constant 5 : index
    %c0_307 = arith.constant 0 : index
    %c0_308 = arith.constant 0 : index
    %357 = vector.load %arg25[%c5_306, %c0_307, %c0_308] : memref<8x2x14xf32, #tpu.memory_space<vmem>>, vector<1x2x14xf32>
    %358 = vector.shape_cast %357 : vector<1x2x14xf32> to vector<2x14xf32>
    %cst_309 = arith.constant dense<0.000000e+00> : vector<2x56xf32>
    %359 = tpu.matmul %358, %292, %cst_309 {dimension_numbers = #tpu.dot_dimension_numbers<[1], [0], [0], [1], [0, 0, 1, 1], [], []>} : vector<2x14xf32>, vector<14x56xf32>, vector<2x56xf32> -> vector<2x56xf32>
    %360 = arith.addf %356, %359 : vector<2x56xf32>
    %361 = vector.broadcast %293 : vector<1x56xf32> to vector<2x56xf32>
    %362 = arith.addf %360, %361 : vector<2x56xf32>
    %c5_310 = arith.constant 5 : index
    %c0_311 = arith.constant 0 : index
    %c0_312 = arith.constant 0 : index
    %363 = vector.load %arg22[%c5_310, %c0_311, %c0_312] : memref<8x2x56xf32, #tpu.memory_space<vmem>>, vector<1x2x56xf32>
    %364 = vector.shape_cast %363 : vector<1x2x56xf32> to vector<2x56xf32>
    %365 = vector.shape_cast %362 : vector<2x56xf32> to vector<1x2x56xf32>
    tpu.vector_store %arg22[%c5_310, %c0_311, %c0_312], %365 {strides = array<i32>} : memref<8x2x56xf32, #tpu.memory_space<vmem>>, vector<1x2x56xf32>,
    %c6_313 = arith.constant 6 : index
    %c0_314 = arith.constant 0 : index
    %c0_315 = arith.constant 0 : index
    %366 = vector.load %arg24[%c6_313, %c0_314, %c0_315] : memref<8x2x14xf32, #tpu.memory_space<vmem>>, vector<1x2x14xf32>
    %367 = vector.shape_cast %366 : vector<1x2x14xf32> to vector<2x14xf32>
    %cst_316 = arith.constant dense<0.000000e+00> : vector<2x56xf32>
    %368 = tpu.matmul %367, %291, %cst_316 {dimension_numbers = #tpu.dot_dimension_numbers<[1], [0], [0], [1], [0, 0, 1, 1], [], []>} : vector<2x14xf32>, vector<14x56xf32>, vector<2x56xf32> -> vector<2x56xf32>
    %c6_317 = arith.constant 6 : index
    %c0_318 = arith.constant 0 : index
    %c0_319 = arith.constant 0 : index
    %369 = vector.load %arg25[%c6_317, %c0_318, %c0_319] : memref<8x2x14xf32, #tpu.memory_space<vmem>>, vector<1x2x14xf32>
    %370 = vector.shape_cast %369 : vector<1x2x14xf32> to vector<2x14xf32>
    %cst_320 = arith.constant dense<0.000000e+00> : vector<2x56xf32>
    %371 = tpu.matmul %370, %292, %cst_320 {dimension_numbers = #tpu.dot_dimension_numbers<[1], [0], [0], [1], [0, 0, 1, 1], [], []>} : vector<2x14xf32>, vector<14x56xf32>, vector<2x56xf32> -> vector<2x56xf32>
    %372 = arith.addf %368, %371 : vector<2x56xf32>
    %373 = vector.broadcast %293 : vector<1x56xf32> to vector<2x56xf32>
    %374 = arith.addf %372, %373 : vector<2x56xf32>
    %c6_321 = arith.constant 6 : index
    %c0_322 = arith.constant 0 : index
    %c0_323 = arith.constant 0 : index
    %375 = vector.load %arg22[%c6_321, %c0_322, %c0_323] : memref<8x2x56xf32, #tpu.memory_space<vmem>>, vector<1x2x56xf32>
    %376 = vector.shape_cast %375 : vector<1x2x56xf32> to vector<2x56xf32>
    %377 = vector.shape_cast %374 : vector<2x56xf32> to vector<1x2x56xf32>
    tpu.vector_store %arg22[%c6_321, %c0_322, %c0_323], %377 {strides = array<i32>} : memref<8x2x56xf32, #tpu.memory_space<vmem>>, vector<1x2x56xf32>,
    %c7_324 = arith.constant 7 : index
    %c0_325 = arith.constant 0 : index
    %c0_326 = arith.constant 0 : index
    %378 = vector.load %arg24[%c7_324, %c0_325, %c0_326] : memref<8x2x14xf32, #tpu.memory_space<vmem>>, vector<1x2x14xf32>
    %379 = vector.shape_cast %378 : vector<1x2x14xf32> to vector<2x14xf32>
    %cst_327 = arith.constant dense<0.000000e+00> : vector<2x56xf32>
    %380 = tpu.matmul %379, %291, %cst_327 {dimension_numbers = #tpu.dot_dimension_numbers<[1], [0], [0], [1], [0, 0, 1, 1], [], []>} : vector<2x14xf32>, vector<14x56xf32>, vector<2x56xf32> -> vector<2x56xf32>
    %c7_328 = arith.constant 7 : index
    %c0_329 = arith.constant 0 : index
    %c0_330 = arith.constant 0 : index
    %381 = vector.load %arg25[%c7_328, %c0_329, %c0_330] : memref<8x2x14xf32, #tpu.memory_space<vmem>>, vector<1x2x14xf32>
    %382 = vector.shape_cast %381 : vector<1x2x14xf32> to vector<2x14xf32>
    %cst_331 = arith.constant dense<0.000000e+00> : vector<2x56xf32>
    %383 = tpu.matmul %382, %292, %cst_331 {dimension_numbers = #tpu.dot_dimension_numbers<[1], [0], [0], [1], [0, 0, 1, 1], [], []>} : vector<2x14xf32>, vector<14x56xf32>, vector<2x56xf32> -> vector<2x56xf32>
    %384 = arith.addf %380, %383 : vector<2x56xf32>
    %385 = vector.broadcast %293 : vector<1x56xf32> to vector<2x56xf32>
    %386 = arith.addf %384, %385 : vector<2x56xf32>
    %c7_332 = arith.constant 7 : index
    %c0_333 = arith.constant 0 : index
    %c0_334 = arith.constant 0 : index
    %387 = vector.load %arg22[%c7_332, %c0_333, %c0_334] : memref<8x2x56xf32, #tpu.memory_space<vmem>>, vector<1x2x56xf32>
    %388 = vector.shape_cast %387 : vector<1x2x56xf32> to vector<2x56xf32>
    %389 = vector.shape_cast %386 : vector<2x56xf32> to vector<1x2x56xf32>
    tpu.vector_store %arg22[%c7_332, %c0_333, %c0_334], %389 {strides = array<i32>} : memref<8x2x56xf32, #tpu.memory_space<vmem>>, vector<1x2x56xf32>,
    %c0_335 = arith.constant 0 : index
    %c0_336 = arith.constant 0 : index
    %390 = vector.load %arg17[%c0_335, %c0_336] : memref<14x56xf32, #tpu.memory_space<vmem>>, vector<14x56xf32>
    %c0_i32_337 = arith.constant 0 : i32
    %c8_i32_338 = arith.constant 8 : i32
    %391 = arith.addi %c0_i32_337, %c8_i32_338 : i32
    %c1_i32_339 = arith.constant 1 : i32
    %392:2 = scf.for %arg26 = %c0_i32_337 to %391 step %c1_i32_339 iter_args(%arg27 = %0, %arg28 = %0) -> (vector<2x14xf32>, vector<2x14xf32>)  : i32 {
      %459 = arith.index_cast %arg26 : i32 to index
      %c0_401 = arith.constant 0 : index
      %c0_402 = arith.constant 0 : index
      %460 = vector.load %arg22[%459, %c0_401, %c0_402] : memref<8x2x56xf32, #tpu.memory_space<vmem>>, vector<1x2x56xf32>
      %461 = vector.shape_cast %460 : vector<1x2x56xf32> to vector<2x56xf32>
      %cst_403 = arith.constant dense<0.000000e+00> : vector<2x56xf32>
      %462 = tpu.matmul %arg27, %390, %cst_403 {dimension_numbers = #tpu.dot_dimension_numbers<[1], [0], [0], [1], [0, 0, 1, 1], [], []>} : vector<2x14xf32>, vector<14x56xf32>, vector<2x56xf32> -> vector<2x56xf32>
      %463 = arith.addf %461, %462 : vector<2x56xf32>
      %464 = vector.extract_strided_slice %463 {offsets = [0, 0], sizes = [2, 42], strides = [1, 1]} : vector<2x56xf32> to vector<2x42xf32>
      %465 = arith.negf %464 : vector<2x42xf32>
      %466 = math.exp %465 : vector<2x42xf32>
      %cst_404 = arith.constant 1.000000e+00 : f32
      %467 = vector.broadcast %cst_404 : f32 to vector<2x42xf32>
      %468 = arith.addf %467, %466 : vector<2x42xf32>
      %469 = arith.divf %467, %468 : vector<2x42xf32>
      %470 = vector.extract_strided_slice %463 {offsets = [0, 42], sizes = [2, 14], strides = [1, 1]} : vector<2x56xf32> to vector<2x14xf32>
      %471 = math.tanh %470 : vector<2x14xf32>
      %472 = vector.extract_strided_slice %469 {offsets = [0, 14], sizes = [2, 14], strides = [1, 1]} : vector<2x42xf32> to vector<2x14xf32>
      %473 = arith.mulf %472, %arg28 : vector<2x14xf32>
      %474 = vector.extract_strided_slice %469 {offsets = [0, 0], sizes = [2, 14], strides = [1, 1]} : vector<2x42xf32> to vector<2x14xf32>
      %475 = arith.mulf %474, %471 : vector<2x14xf32>
      %476 = arith.addf %473, %475 : vector<2x14xf32>
      %477 = vector.extract_strided_slice %469 {offsets = [0, 28], sizes = [2, 14], strides = [1, 1]} : vector<2x42xf32> to vector<2x14xf32>
      %478 = math.tanh %476 : vector<2x14xf32>
      %479 = arith.mulf %477, %478 : vector<2x14xf32>
      %480 = arith.index_cast %arg26 : i32 to index
      %c0_405 = arith.constant 0 : index
      %c0_406 = arith.constant 0 : index
      %481 = vector.load %arg24[%480, %c0_405, %c0_406] : memref<8x2x14xf32, #tpu.memory_space<vmem>>, vector<1x2x14xf32>
      %482 = vector.shape_cast %481 : vector<1x2x14xf32> to vector<2x14xf32>
      %483 = vector.shape_cast %479 : vector<2x14xf32> to vector<1x2x14xf32>
      tpu.vector_store %arg24[%480, %c0_405, %c0_406], %483 {strides = array<i32>} : memref<8x2x14xf32, #tpu.memory_space<vmem>>, vector<1x2x14xf32>,
      scf.yield %479, %476 : vector<2x14xf32>, vector<2x14xf32>
    }
    %c8_i32_340 = arith.constant 8 : i32
    %c0_341 = arith.constant 0 : index
    %c0_342 = arith.constant 0 : index
    %393 = vector.load %arg19[%c0_341, %c0_342] : memref<14x3xf32, #tpu.memory_space<vmem>>, vector<14x3xf32>
    %c0_343 = arith.constant 0 : index
    %c0_344 = arith.constant 0 : index
    %394 = vector.load %arg20[%c0_343, %c0_344] : memref<1x3xf32, #tpu.memory_space<vmem>>, vector<1x3xf32>
    %c0_345 = arith.constant 0 : index
    %c0_346 = arith.constant 0 : index
    %c0_347 = arith.constant 0 : index
    %395 = vector.load %arg24[%c0_345, %c0_346, %c0_347] : memref<8x2x14xf32, #tpu.memory_space<vmem>>, vector<1x2x14xf32>
    %396 = vector.shape_cast %395 : vector<1x2x14xf32> to vector<2x14xf32>
    %cst_348 = arith.constant dense<0.000000e+00> : vector<2x3xf32>
    %397 = tpu.matmul %396, %393, %cst_348 {dimension_numbers = #tpu.dot_dimension_numbers<[1], [0], [0], [1], [0, 0, 1, 1], [], []>} : vector<2x14xf32>, vector<14x3xf32>, vector<2x3xf32> -> vector<2x3xf32>
    %398 = vector.broadcast %394 : vector<1x3xf32> to vector<2x3xf32>
    %399 = arith.addf %397, %398 : vector<2x3xf32>
    %c0_349 = arith.constant 0 : index
    %c0_350 = arith.constant 0 : index
    %c0_351 = arith.constant 0 : index
    %400 = vector.load %arg21[%c0_349, %c0_350, %c0_351] : memref<8x2x3xf32, #tpu.memory_space<vmem>>, vector<1x2x3xf32>
    %401 = vector.shape_cast %400 : vector<1x2x3xf32> to vector<2x3xf32>
    %402 = vector.shape_cast %399 : vector<2x3xf32> to vector<1x2x3xf32>
    tpu.vector_store %arg21[%c0_349, %c0_350, %c0_351], %402 {strides = array<i32>} : memref<8x2x3xf32, #tpu.memory_space<vmem>>, vector<1x2x3xf32>,
    %c1_352 = arith.constant 1 : index
    %c0_353 = arith.constant 0 : index
    %c0_354 = arith.constant 0 : index
    %403 = vector.load %arg24[%c1_352, %c0_353, %c0_354] : memref<8x2x14xf32, #tpu.memory_space<vmem>>, vector<1x2x14xf32>
    %404 = vector.shape_cast %403 : vector<1x2x14xf32> to vector<2x14xf32>
    %cst_355 = arith.constant dense<0.000000e+00> : vector<2x3xf32>
    %405 = tpu.matmul %404, %393, %cst_355 {dimension_numbers = #tpu.dot_dimension_numbers<[1], [0], [0], [1], [0, 0, 1, 1], [], []>} : vector<2x14xf32>, vector<14x3xf32>, vector<2x3xf32> -> vector<2x3xf32>
    %406 = vector.broadcast %394 : vector<1x3xf32> to vector<2x3xf32>
    %407 = arith.addf %405, %406 : vector<2x3xf32>
    %c1_356 = arith.constant 1 : index
    %c0_357 = arith.constant 0 : index
    %c0_358 = arith.constant 0 : index
    %408 = vector.load %arg21[%c1_356, %c0_357, %c0_358] : memref<8x2x3xf32, #tpu.memory_space<vmem>>, vector<1x2x3xf32>
    %409 = vector.shape_cast %408 : vector<1x2x3xf32> to vector<2x3xf32>
    %410 = vector.shape_cast %407 : vector<2x3xf32> to vector<1x2x3xf32>
    tpu.vector_store %arg21[%c1_356, %c0_357, %c0_358], %410 {strides = array<i32>} : memref<8x2x3xf32, #tpu.memory_space<vmem>>, vector<1x2x3xf32>,
    %c2_359 = arith.constant 2 : index
    %c0_360 = arith.constant 0 : index
    %c0_361 = arith.constant 0 : index
    %411 = vector.load %arg24[%c2_359, %c0_360, %c0_361] : memref<8x2x14xf32, #tpu.memory_space<vmem>>, vector<1x2x14xf32>
    %412 = vector.shape_cast %411 : vector<1x2x14xf32> to vector<2x14xf32>
    %cst_362 = arith.constant dense<0.000000e+00> : vector<2x3xf32>
    %413 = tpu.matmul %412, %393, %cst_362 {dimension_numbers = #tpu.dot_dimension_numbers<[1], [0], [0], [1], [0, 0, 1, 1], [], []>} : vector<2x14xf32>, vector<14x3xf32>, vector<2x3xf32> -> vector<2x3xf32>
    %414 = vector.broadcast %394 : vector<1x3xf32> to vector<2x3xf32>
    %415 = arith.addf %413, %414 : vector<2x3xf32>
    %c2_363 = arith.constant 2 : index
    %c0_364 = arith.constant 0 : index
    %c0_365 = arith.constant 0 : index
    %416 = vector.load %arg21[%c2_363, %c0_364, %c0_365] : memref<8x2x3xf32, #tpu.memory_space<vmem>>, vector<1x2x3xf32>
    %417 = vector.shape_cast %416 : vector<1x2x3xf32> to vector<2x3xf32>
    %418 = vector.shape_cast %415 : vector<2x3xf32> to vector<1x2x3xf32>
    tpu.vector_store %arg21[%c2_363, %c0_364, %c0_365], %418 {strides = array<i32>} : memref<8x2x3xf32, #tpu.memory_space<vmem>>, vector<1x2x3xf32>,
    %c3_366 = arith.constant 3 : index
    %c0_367 = arith.constant 0 : index
    %c0_368 = arith.constant 0 : index
    %419 = vector.load %arg24[%c3_366, %c0_367, %c0_368] : memref<8x2x14xf32, #tpu.memory_space<vmem>>, vector<1x2x14xf32>
    %420 = vector.shape_cast %419 : vector<1x2x14xf32> to vector<2x14xf32>
    %cst_369 = arith.constant dense<0.000000e+00> : vector<2x3xf32>
    %421 = tpu.matmul %420, %393, %cst_369 {dimension_numbers = #tpu.dot_dimension_numbers<[1], [0], [0], [1], [0, 0, 1, 1], [], []>} : vector<2x14xf32>, vector<14x3xf32>, vector<2x3xf32> -> vector<2x3xf32>
    %422 = vector.broadcast %394 : vector<1x3xf32> to vector<2x3xf32>
    %423 = arith.addf %421, %422 : vector<2x3xf32>
    %c3_370 = arith.constant 3 : index
    %c0_371 = arith.constant 0 : index
    %c0_372 = arith.constant 0 : index
    %424 = vector.load %arg21[%c3_370, %c0_371, %c0_372] : memref<8x2x3xf32, #tpu.memory_space<vmem>>, vector<1x2x3xf32>
    %425 = vector.shape_cast %424 : vector<1x2x3xf32> to vector<2x3xf32>
    %426 = vector.shape_cast %423 : vector<2x3xf32> to vector<1x2x3xf32>
    tpu.vector_store %arg21[%c3_370, %c0_371, %c0_372], %426 {strides = array<i32>} : memref<8x2x3xf32, #tpu.memory_space<vmem>>, vector<1x2x3xf32>,
    %c4_373 = arith.constant 4 : index
    %c0_374 = arith.constant 0 : index
    %c0_375 = arith.constant 0 : index
    %427 = vector.load %arg24[%c4_373, %c0_374, %c0_375] : memref<8x2x14xf32, #tpu.memory_space<vmem>>, vector<1x2x14xf32>
    %428 = vector.shape_cast %427 : vector<1x2x14xf32> to vector<2x14xf32>
    %cst_376 = arith.constant dense<0.000000e+00> : vector<2x3xf32>
    %429 = tpu.matmul %428, %393, %cst_376 {dimension_numbers = #tpu.dot_dimension_numbers<[1], [0], [0], [1], [0, 0, 1, 1], [], []>} : vector<2x14xf32>, vector<14x3xf32>, vector<2x3xf32> -> vector<2x3xf32>
    %430 = vector.broadcast %394 : vector<1x3xf32> to vector<2x3xf32>
    %431 = arith.addf %429, %430 : vector<2x3xf32>
    %c4_377 = arith.constant 4 : index
    %c0_378 = arith.constant 0 : index
    %c0_379 = arith.constant 0 : index
    %432 = vector.load %arg21[%c4_377, %c0_378, %c0_379] : memref<8x2x3xf32, #tpu.memory_space<vmem>>, vector<1x2x3xf32>
    %433 = vector.shape_cast %432 : vector<1x2x3xf32> to vector<2x3xf32>
    %434 = vector.shape_cast %431 : vector<2x3xf32> to vector<1x2x3xf32>
    tpu.vector_store %arg21[%c4_377, %c0_378, %c0_379], %434 {strides = array<i32>} : memref<8x2x3xf32, #tpu.memory_space<vmem>>, vector<1x2x3xf32>,
    %c5_380 = arith.constant 5 : index
    %c0_381 = arith.constant 0 : index
    %c0_382 = arith.constant 0 : index
    %435 = vector.load %arg24[%c5_380, %c0_381, %c0_382] : memref<8x2x14xf32, #tpu.memory_space<vmem>>, vector<1x2x14xf32>
    %436 = vector.shape_cast %435 : vector<1x2x14xf32> to vector<2x14xf32>
    %cst_383 = arith.constant dense<0.000000e+00> : vector<2x3xf32>
    %437 = tpu.matmul %436, %393, %cst_383 {dimension_numbers = #tpu.dot_dimension_numbers<[1], [0], [0], [1], [0, 0, 1, 1], [], []>} : vector<2x14xf32>, vector<14x3xf32>, vector<2x3xf32> -> vector<2x3xf32>
    %438 = vector.broadcast %394 : vector<1x3xf32> to vector<2x3xf32>
    %439 = arith.addf %437, %438 : vector<2x3xf32>
    %c5_384 = arith.constant 5 : index
    %c0_385 = arith.constant 0 : index
    %c0_386 = arith.constant 0 : index
    %440 = vector.load %arg21[%c5_384, %c0_385, %c0_386] : memref<8x2x3xf32, #tpu.memory_space<vmem>>, vector<1x2x3xf32>
    %441 = vector.shape_cast %440 : vector<1x2x3xf32> to vector<2x3xf32>
    %442 = vector.shape_cast %439 : vector<2x3xf32> to vector<1x2x3xf32>
    tpu.vector_store %arg21[%c5_384, %c0_385, %c0_386], %442 {strides = array<i32>} : memref<8x2x3xf32, #tpu.memory_space<vmem>>, vector<1x2x3xf32>,
    %c6_387 = arith.constant 6 : index
    %c0_388 = arith.constant 0 : index
    %c0_389 = arith.constant 0 : index
    %443 = vector.load %arg24[%c6_387, %c0_388, %c0_389] : memref<8x2x14xf32, #tpu.memory_space<vmem>>, vector<1x2x14xf32>
    %444 = vector.shape_cast %443 : vector<1x2x14xf32> to vector<2x14xf32>
    %cst_390 = arith.constant dense<0.000000e+00> : vector<2x3xf32>
    %445 = tpu.matmul %444, %393, %cst_390 {dimension_numbers = #tpu.dot_dimension_numbers<[1], [0], [0], [1], [0, 0, 1, 1], [], []>} : vector<2x14xf32>, vector<14x3xf32>, vector<2x3xf32> -> vector<2x3xf32>
    %446 = vector.broadcast %394 : vector<1x3xf32> to vector<2x3xf32>
    %447 = arith.addf %445, %446 : vector<2x3xf32>
    %c6_391 = arith.constant 6 : index
    %c0_392 = arith.constant 0 : index
    %c0_393 = arith.constant 0 : index
    %448 = vector.load %arg21[%c6_391, %c0_392, %c0_393] : memref<8x2x3xf32, #tpu.memory_space<vmem>>, vector<1x2x3xf32>
    %449 = vector.shape_cast %448 : vector<1x2x3xf32> to vector<2x3xf32>
    %450 = vector.shape_cast %447 : vector<2x3xf32> to vector<1x2x3xf32>
    tpu.vector_store %arg21[%c6_391, %c0_392, %c0_393], %450 {strides = array<i32>} : memref<8x2x3xf32, #tpu.memory_space<vmem>>, vector<1x2x3xf32>,
    %c7_394 = arith.constant 7 : index
    %c0_395 = arith.constant 0 : index
    %c0_396 = arith.constant 0 : index
    %451 = vector.load %arg24[%c7_394, %c0_395, %c0_396] : memref<8x2x14xf32, #tpu.memory_space<vmem>>, vector<1x2x14xf32>
    %452 = vector.shape_cast %451 : vector<1x2x14xf32> to vector<2x14xf32>
    %cst_397 = arith.constant dense<0.000000e+00> : vector<2x3xf32>
    %453 = tpu.matmul %452, %393, %cst_397 {dimension_numbers = #tpu.dot_dimension_numbers<[1], [0], [0], [1], [0, 0, 1, 1], [], []>} : vector<2x14xf32>, vector<14x3xf32>, vector<2x3xf32> -> vector<2x3xf32>
    %454 = vector.broadcast %394 : vector<1x3xf32> to vector<2x3xf32>
    %455 = arith.addf %453, %454 : vector<2x3xf32>
    %c7_398 = arith.constant 7 : index
    %c0_399 = arith.constant 0 : index
    %c0_400 = arith.constant 0 : index
    %456 = vector.load %arg21[%c7_398, %c0_399, %c0_400] : memref<8x2x3xf32, #tpu.memory_space<vmem>>, vector<1x2x3xf32>
    %457 = vector.shape_cast %456 : vector<1x2x3xf32> to vector<2x3xf32>
    %458 = vector.shape_cast %455 : vector<2x3xf32> to vector<1x2x3xf32>
    tpu.vector_store %arg21[%c7_398, %c0_399, %c0_400], %458 {strides = array<i32>} : memref<8x2x3xf32, #tpu.memory_space<vmem>>, vector<1x2x3xf32>,
    return
  }
}

</mosaic_0001>

<llo_original>
// kernel: decoder_model_forward.1
$region0: #{decoder_model_forward.1}
  #allocation0 [shape = 'u32[]', space=smem, size = 0x4, offset = 0x4, fixed_abs, tag = 'smem constant byte address 0x4 - core index']
  #allocation1 [shape = 'u32[72,128]{1,0:T(1,128)}', space=vmem, size = 0x9000, scoped, tag = 'internal scratch']
  #allocation2 [shape = 'f32[8,2,56]{2,1,0:T(2,128)}', space=vmem, size = 0x2000, scoped, tag = 'scratch operand']
  #allocation3 [shape = 'f32[8,2,56]{2,1,0:T(2,128)}', space=vmem, size = 0x2000, scoped, tag = 'scratch operand']
  #allocation4 [shape = 'f32[8,2,14]{2,1,0:T(2,128)}', space=vmem, size = 0x2000, scoped, tag = 'scratch operand']
  #allocation5 [shape = 'f32[8,2,14]{2,1,0:T(2,128)}', space=vmem, size = 0x2000, scoped, tag = 'scratch operand']
  %s0 = inlined_call_operand.vmem [shape: f32[8,2,6], index: 0, kind: input, shape index: {}]
  %s1 = inlined_call_operand.hbm [shape: f32[6,56], index: 1, kind: input, shape index: {}]
  %s2 = inlined_call_operand.vmem [shape: f32[14,56], index: 2, kind: input, shape index: {}]
  %s3 = inlined_call_operand.hbm [shape: f32[1,56], index: 3, kind: input, shape index: {}]
  %s4 = inlined_call_operand.hbm [shape: f32[6,56], index: 4, kind: input, shape index: {}]
  %s5 = inlined_call_operand.vmem [shape: f32[14,56], index: 5, kind: input, shape index: {}]
  %s6 = inlined_call_operand.vmem [shape: f32[1,56], index: 6, kind: input, shape index: {}]
  %s7 = inlined_call_operand.vmem [shape: f32[14,56], index: 7, kind: input, shape index: {}]
  %s8 = inlined_call_operand.hbm [shape: f32[14,56], index: 8, kind: input, shape index: {}]
  %s9 = inlined_call_operand.hbm [shape: f32[14,56], index: 9, kind: input, shape index: {}]
  %s10 = inlined_call_operand.vmem [shape: f32[1,56], index: 10, kind: input, shape index: {}]
  %s11 = inlined_call_operand.hbm [shape: f32[14,56], index: 11, kind: input, shape index: {}]
  %s12 = inlined_call_operand.hbm [shape: f32[14,56], index: 12, kind: input, shape index: {}]
  %s13 = inlined_call_operand.hbm [shape: f32[14,56], index: 13, kind: input, shape index: {}]
  %s14 = inlined_call_operand.vmem [shape: f32[1,56], index: 14, kind: input, shape index: {}]
  %s15 = inlined_call_operand.hbm [shape: f32[14,56], index: 15, kind: input, shape index: {}]
  %s16 = inlined_call_operand.hbm [shape: f32[14,56], index: 16, kind: input, shape index: {}]
  %s17 = inlined_call_operand.hbm [shape: f32[14,56], index: 17, kind: input, shape index: {}]
  %s18 = inlined_call_operand.vmem [shape: f32[1,56], index: 18, kind: input, shape index: {}]
  %s19 = inlined_call_operand.vmem [shape: f32[14,3], index: 19, kind: input, shape index: {}]
  %s20 = inlined_call_operand.vmem [shape: f32[1,3], index: 20, kind: input, shape index: {}]
  %s21 = inlined_call_operand.vmem [shape: f32[8,2,3], index: 21, kind: output, shape index: {}]
  %s22 = sld [smem:[#allocation0]]
  $region159: #{decoder_model_forward.1} parent=0
    _
  %s24 = ssub.s32 1, %s22
  %s25 = scalar_select 0, %s24, %s22
  $region1: #{decoder_model_forward.1} parent=0
    #allocation6 [shape = 'u8[4096]{0}', space=vmem, size = 0x1000, scoped, tag = 'input window, operand 1, single buffered']
    #allocation7 [shape = 's32[1]{0}', space=sflag, size = 0x4, scoped, tag = 'scoped memory for decoder_model_forward.1']
    #allocation8 [shape = 'u8[512]{0}', space=vmem, size = 0x400, scoped, tag = 'input window, operand 3, single buffered']
    #allocation9 [shape = 's32[1]{0}', space=sflag, size = 0x4, scoped, tag = 'scoped memory for decoder_model_forward.1']
    #allocation10 [shape = 'u8[4096]{0}', space=vmem, size = 0x1000, scoped, tag = 'input window, operand 4, single buffered']
    #allocation11 [shape = 'u8[8192]{0}', space=vmem, size = 0x2000, scoped, tag = 'input window, operand 8, single buffered']
    #allocation12 [shape = 's32[1]{0}', space=sflag, size = 0x4, scoped, tag = 'scoped memory for decoder_model_forward.1']
    #allocation13 [shape = 'u8[8192]{0}', space=vmem, size = 0x2000, scoped, tag = 'input window, operand 9, single buffered']
    #allocation14 [shape = 'u8[8192]{0}', space=vmem, size = 0x2000, scoped, tag = 'input window, operand 11, single buffered']
    #allocation15 [shape = 's32[1]{0}', space=sflag, size = 0x4, scoped, tag = 'scoped memory for decoder_model_forward.1']
    #allocation16 [shape = 'u8[8192]{0}', space=vmem, size = 0x2000, scoped, tag = 'input window, operand 12, single buffered']
    #allocation17 [shape = 'u8[8192]{0}', space=vmem, size = 0x2000, scoped, tag = 'input window, operand 13, single buffered']
    #allocation18 [shape = 's32[1]{0}', space=sflag, size = 0x4, scoped, tag = 'scoped memory for decoder_model_forward.1']
    #allocation19 [shape = 'u8[8192]{0}', space=vmem, size = 0x2000, scoped, tag = 'input window, operand 15, single buffered']
    #allocation20 [shape = 'u8[8192]{0}', space=vmem, size = 0x2000, scoped, tag = 'input window, operand 16, single buffered']
    #allocation21 [shape = 's32[1]{0}', space=sflag, size = 0x4, scoped, tag = 'scoped memory for decoder_model_forward.1']
    #allocation22 [shape = 'u8[8192]{0}', space=vmem, size = 0x2000, scoped, tag = 'input window, operand 17, single buffered']
    %26 = vsyncpa [#allocation7], 0
    %27 = vsyncpa [#allocation9], 0
    %28 = vsyncpa [#allocation12], 0
    %29 = vsyncpa [#allocation15], 0
    %30 = vsyncpa [#allocation18], 0
    %31 = vsyncpa [#allocation21], 0
    // Predicated region
    $region2: #{decoder_model_forward.1} parent=1 // pred_check
      _
    $region3: #{decoder_model_forward.1} parent=1 // pred_check_branch
      %33 = sbr.rel (0) target = $region5
    $region4: #{decoder_model_forward.1} parent=1 // pred_region
      _
    $region5: #{decoder_model_forward.1} parent=1 // pred_fallthru
      _
    // Predicated region
    $region6: #{decoder_model_forward.1} parent=1 // pred_check
      _
    $region7: #{decoder_model_forward.1} parent=1 // pred_check_branch
      %35 = sbr.rel (0) target = $region9
    $region8: #{decoder_model_forward.1} parent=1 // pred_region
      %37 = vsyncadd [#allocation7], 0
      %s39 = sshll.u32 %s1, 4
      %s40 = int_to_ptr.hbm [resolvable:$true] %s39
      %s41 = sshll.u32 [#allocation6], 4
      %s42 = int_to_ptr.vmem [resolvable:$true] %s41
      %44 = dma.hbm_to_vmem [thread:$0]  %s40, 128, %s42, [#allocation7]
    $region9: #{decoder_model_forward.1} parent=1 // pred_fallthru
      _
    // Predicated region
    $region10: #{decoder_model_forward.1} parent=1 // pred_check
      _
    $region11: #{decoder_model_forward.1} parent=1 // pred_check_branch
      %46 = sbr.rel (0) target = $region13
    $region12: #{decoder_model_forward.1} parent=1 // pred_region
      _
    $region13: #{decoder_model_forward.1} parent=1 // pred_fallthru
      _
    // Predicated region
    $region14: #{decoder_model_forward.1} parent=1 // pred_check
      _
    $region15: #{decoder_model_forward.1} parent=1 // pred_check_branch
      %48 = sbr.rel (0) target = $region17
    $region16: #{decoder_model_forward.1} parent=1 // pred_region
      %50 = vsyncadd [#allocation9], 0
      %s52 = sshll.u32 %s3, 4
      %s53 = int_to_ptr.hbm [resolvable:$true] %s52
      %s54 = sshll.u32 [#allocation8], 4
      %s55 = int_to_ptr.vmem [resolvable:$true] %s54
      %57 = dma.hbm_to_vmem [thread:$0]  %s53, 16, %s55, [#allocation9]
    $region17: #{decoder_model_forward.1} parent=1 // pred_fallthru
      _
    // Predicated region
    $region18: #{decoder_model_forward.1} parent=1 // pred_check
      _
    $region19: #{decoder_model_forward.1} parent=1 // pred_check_branch
      %59 = sbr.rel (0) target = $region21
    $region20: #{decoder_model_forward.1} parent=1 // pred_region
      %61 = vsyncadd [#allocation9], 0
      %s63 = sshll.u32 %s4, 4
      %s64 = int_to_ptr.hbm [resolvable:$true] %s63
      %s65 = sshll.u32 [#allocation10], 4
      %s66 = int_to_ptr.vmem [resolvable:$true] %s65
      %68 = dma.hbm_to_vmem [thread:$0]  %s64, 128, %s66, [#allocation9]
    $region21: #{decoder_model_forward.1} parent=1 // pred_fallthru
      _
    // Predicated region
    $region22: #{decoder_model_forward.1} parent=1 // pred_check
      _
    $region23: #{decoder_model_forward.1} parent=1 // pred_check_branch
      %70 = sbr.rel (0) target = $region25
    $region24: #{decoder_model_forward.1} parent=1 // pred_region
      _
    $region25: #{decoder_model_forward.1} parent=1 // pred_fallthru
      _
    // Predicated region
    $region26: #{decoder_model_forward.1} parent=1 // pred_check
      _
    $region27: #{decoder_model_forward.1} parent=1 // pred_check_branch
      %72 = sbr.rel (0) target = $region29
    $region28: #{decoder_model_forward.1} parent=1 // pred_region
      _
    $region29: #{decoder_model_forward.1} parent=1 // pred_fallthru
      _
    // Predicated region
    $region30: #{decoder_model_forward.1} parent=1 // pred_check
      _
    $region31: #{decoder_model_forward.1} parent=1 // pred_check_branch
      %74 = sbr.rel (0) target = $region33
    $region32: #{decoder_model_forward.1} parent=1 // pred_region
      _
    $region33: #{decoder_model_forward.1} parent=1 // pred_fallthru
      _
    // Predicated region
    $region34: #{decoder_model_forward.1} parent=1 // pred_check
      _
    $region35: #{decoder_model_forward.1} parent=1 // pred_check_branch
      %76 = sbr.rel (0) target = $region37
    $region36: #{decoder_model_forward.1} parent=1 // pred_region
      %78 = vsyncadd [#allocation12], 0
      %s79 = sshll.u32 %s8, 4
      %s80 = int_to_ptr.hbm [resolvable:$true] %s79
      %s81 = sshll.u32 [#allocation11], 4
      %s82 = int_to_ptr.vmem [resolvable:$true] %s81
      %87 = dma.hbm_to_vmem [thread:$0]  %s80, 256, %s82, [#allocation12], 128, 128, 8
    $region37: #{decoder_model_forward.1} parent=1 // pred_fallthru
      _
    // Predicated region
    $region38: #{decoder_model_forward.1} parent=1 // pred_check
      _
    $region39: #{decoder_model_forward.1} parent=1 // pred_check_branch
      %89 = sbr.rel (0) target = $region41
    $region40: #{decoder_model_forward.1} parent=1 // pred_region
      %91 = vsyncadd [#allocation12], 0
      %s92 = sshll.u32 %s9, 4
      %s93 = int_to_ptr.hbm [resolvable:$true] %s92
      %s94 = sshll.u32 [#allocation13], 4
      %s95 = int_to_ptr.vmem [resolvable:$true] %s94
      %100 = dma.hbm_to_vmem [thread:$0]  %s93, 256, %s95, [#allocation12], 128, 128, 8
    $region41: #{decoder_model_forward.1} parent=1 // pred_fallthru
      _
    // Predicated region
    $region42: #{decoder_model_forward.1} parent=1 // pred_check
      _
    $region43: #{decoder_model_forward.1} parent=1 // pred_check_branch
      %102 = sbr.rel (0) target = $region45
    $region44: #{decoder_model_forward.1} parent=1 // pred_region
      _
    $region45: #{decoder_model_forward.1} parent=1 // pred_fallthru
      _
    // Predicated region
    $region46: #{decoder_model_forward.1} parent=1 // pred_check
      _
    $region47: #{decoder_model_forward.1} parent=1 // pred_check_branch
      %104 = sbr.rel (0) target = $region49
    $region48: #{decoder_model_forward.1} parent=1 // pred_region
      %106 = vsyncadd [#allocation15], 0
      %s107 = sshll.u32 %s11, 4
      %s108 = int_to_ptr.hbm [resolvable:$true] %s107
      %s109 = sshll.u32 [#allocation14], 4
      %s110 = int_to_ptr.vmem [resolvable:$true] %s109
      %115 = dma.hbm_to_vmem [thread:$0]  %s108, 256, %s110, [#allocation15], 128, 128, 8
    $region49: #{decoder_model_forward.1} parent=1 // pred_fallthru
      _
    // Predicated region
    $region50: #{decoder_model_forward.1} parent=1 // pred_check
      _
    $region51: #{decoder_model_forward.1} parent=1 // pred_check_branch
      %117 = sbr.rel (0) target = $region53
    $region52: #{decoder_model_forward.1} parent=1 // pred_region
      %119 = vsyncadd [#allocation15], 0
      %s120 = sshll.u32 %s12, 4
      %s121 = int_to_ptr.hbm [resolvable:$true] %s120
      %s122 = sshll.u32 [#allocation16], 4
      %s123 = int_to_ptr.vmem [resolvable:$true] %s122
      %128 = dma.hbm_to_vmem [thread:$0]  %s121, 256, %s123, [#allocation15], 128, 128, 8
    $region53: #{decoder_model_forward.1} parent=1 // pred_fallthru
      _
    // Predicated region
    $region54: #{decoder_model_forward.1} parent=1 // pred_check
      _
    $region55: #{decoder_model_forward.1} parent=1 // pred_check_branch
      %130 = sbr.rel (0) target = $region57
    $region56: #{decoder_model_forward.1} parent=1 // pred_region
      %132 = vsyncadd [#allocation18], 0
      %s133 = sshll.u32 %s13, 4
      %s134 = int_to_ptr.hbm [resolvable:$true] %s133
      %s135 = sshll.u32 [#allocation17], 4
      %s136 = int_to_ptr.vmem [resolvable:$true] %s135
      %141 = dma.hbm_to_vmem [thread:$0]  %s134, 256, %s136, [#allocation18], 128, 128, 8
    $region57: #{decoder_model_forward.1} parent=1 // pred_fallthru
      _
    // Predicated region
    $region58: #{decoder_model_forward.1} parent=1 // pred_check
      _
    $region59: #{decoder_model_forward.1} parent=1 // pred_check_branch
      %143 = sbr.rel (0) target = $region61
    $region60: #{decoder_model_forward.1} parent=1 // pred_region
      _
    $region61: #{decoder_model_forward.1} parent=1 // pred_fallthru
      _
    // Predicated region
    $region62: #{decoder_model_forward.1} parent=1 // pred_check
      _
    $region63: #{decoder_model_forward.1} parent=1 // pred_check_branch
      %145 = sbr.rel (0) target = $region65
    $region64: #{decoder_model_forward.1} parent=1 // pred_region
      %147 = vsyncadd [#allocation18], 0
      %s148 = sshll.u32 %s15, 4
      %s149 = int_to_ptr.hbm [resolvable:$true] %s148
      %s150 = sshll.u32 [#allocation19], 4
      %s151 = int_to_ptr.vmem [resolvable:$true] %s150
      %156 = dma.hbm_to_vmem [thread:$0]  %s149, 256, %s151, [#allocation18], 128, 128, 8
    $region65: #{decoder_model_forward.1} parent=1 // pred_fallthru
      _
    // Predicated region
    $region66: #{decoder_model_forward.1} parent=1 // pred_check
      _
    $region67: #{decoder_model_forward.1} parent=1 // pred_check_branch
      %158 = sbr.rel (0) target = $region69
    $region68: #{decoder_model_forward.1} parent=1 // pred_region
      %160 = vsyncadd [#allocation21], 0
      %s161 = sshll.u32 %s16, 4
      %s162 = int_to_ptr.hbm [resolvable:$true] %s161
      %s163 = sshll.u32 [#allocation20], 4
      %s164 = int_to_ptr.vmem [resolvable:$true] %s163
      %169 = dma.hbm_to_vmem [thread:$0]  %s162, 256, %s164, [#allocation21], 128, 128, 8
    $region69: #{decoder_model_forward.1} parent=1 // pred_fallthru
      _
    // Predicated region
    $region70: #{decoder_model_forward.1} parent=1 // pred_check
      _
    $region71: #{decoder_model_forward.1} parent=1 // pred_check_branch
      %171 = sbr.rel (0) target = $region73
    $region72: #{decoder_model_forward.1} parent=1 // pred_region
      %173 = vsyncadd [#allocation21], 0
      %s174 = sshll.u32 %s17, 4
      %s175 = int_to_ptr.hbm [resolvable:$true] %s174
      %s176 = sshll.u32 [#allocation22], 4
      %s177 = int_to_ptr.vmem [resolvable:$true] %s176
      %182 = dma.hbm_to_vmem [thread:$0]  %s175, 256, %s177, [#allocation21], 128, 128, 8
    $region73: #{decoder_model_forward.1} parent=1 // pred_fallthru
      _
    // Predicated region
    $region74: #{decoder_model_forward.1} parent=1 // pred_check
      _
    $region75: #{decoder_model_forward.1} parent=1 // pred_check_branch
      %184 = sbr.rel (0) target = $region77
    $region76: #{decoder_model_forward.1} parent=1 // pred_region
      _
    $region77: #{decoder_model_forward.1} parent=1 // pred_fallthru
      _
    // Predicated region
    $region78: #{decoder_model_forward.1} parent=1 // pred_check
      _
    $region79: #{decoder_model_forward.1} parent=1 // pred_check_branch
      %186 = sbr.rel (0) target = $region81
    $region80: #{decoder_model_forward.1} parent=1 // pred_region
      _
    $region81: #{decoder_model_forward.1} parent=1 // pred_fallthru
      _
    // Predicated region
    $region82: #{decoder_model_forward.1} parent=1 // pred_check
      _
    $region83: #{decoder_model_forward.1} parent=1 // pred_check_branch
      %188 = sbr.rel (0) target = $region85
    $region84: #{decoder_model_forward.1} parent=1 // pred_region
      _
    $region85: #{decoder_model_forward.1} parent=1 // pred_fallthru
      _
    // Predicated region
    $region86: #{decoder_model_forward.1} parent=1 // pred_check
      _
    $region87: #{decoder_model_forward.1} parent=1 // pred_check_branch
      %190 = sbr.rel (0) target = $region89
    $region88: #{decoder_model_forward.1} parent=1 // pred_region
      %192 = dma.done [#allocation7], 128
    $region89: #{decoder_model_forward.1} parent=1 // pred_fallthru
      _
    // Predicated region
    $region90: #{decoder_model_forward.1} parent=1 // pred_check
      _
    $region91: #{decoder_model_forward.1} parent=1 // pred_check_branch
      %194 = sbr.rel (0) target = $region93
    $region92: #{decoder_model_forward.1} parent=1 // pred_region
      %196 = dma.done [#allocation9], 16
    $region93: #{decoder_model_forward.1} parent=1 // pred_fallthru
      _
    // Predicated region
    $region94: #{decoder_model_forward.1} parent=1 // pred_check
      _
    $region95: #{decoder_model_forward.1} parent=1 // pred_check_branch
      %198 = sbr.rel (0) target = $region97
    $region96: #{decoder_model_forward.1} parent=1 // pred_region
      %200 = dma.done [#allocation9], 128
    $region97: #{decoder_model_forward.1} parent=1 // pred_fallthru
      _
    // Predicated region
    $region98: #{decoder_model_forward.1} parent=1 // pred_check
      _
    $region99: #{decoder_model_forward.1} parent=1 // pred_check_branch
      %202 = sbr.rel (0) target = $region101
    $region100: #{decoder_model_forward.1} parent=1 // pred_region
      %204 = dma.done [#allocation12], 256
    $region101: #{decoder_model_forward.1} parent=1 // pred_fallthru
      _
    // Predicated region
    $region102: #{decoder_model_forward.1} parent=1 // pred_check
      _
    $region103: #{decoder_model_forward.1} parent=1 // pred_check_branch
      %206 = sbr.rel (0) target = $region105
    $region104: #{decoder_model_forward.1} parent=1 // pred_region
      %208 = dma.done [#allocation12], 256
    $region105: #{decoder_model_forward.1} parent=1 // pred_fallthru
      _
    // Predicated region
    $region106: #{decoder_model_forward.1} parent=1 // pred_check
      _
    $region107: #{decoder_model_forward.1} parent=1 // pred_check_branch
      %210 = sbr.rel (0) target = $region109
    $region108: #{decoder_model_forward.1} parent=1 // pred_region
      %212 = dma.done [#allocation15], 256
    $region109: #{decoder_model_forward.1} parent=1 // pred_fallthru
      _
    // Predicated region
    $region110: #{decoder_model_forward.1} parent=1 // pred_check
      _
    $region111: #{decoder_model_forward.1} parent=1 // pred_check_branch
      %214 = sbr.rel (0) target = $region113
    $region112: #{decoder_model_forward.1} parent=1 // pred_region
      %216 = dma.done [#allocation15], 256
    $region113: #{decoder_model_forward.1} parent=1 // pred_fallthru
      _
    // Predicated region
    $region114: #{decoder_model_forward.1} parent=1 // pred_check
      _
    $region115: #{decoder_model_forward.1} parent=1 // pred_check_branch
      %218 = sbr.rel (0) target = $region117
    $region116: #{decoder_model_forward.1} parent=1 // pred_region
      %220 = dma.done [#allocation18], 256
    $region117: #{decoder_model_forward.1} parent=1 // pred_fallthru
      _
    // Predicated region
    $region118: #{decoder_model_forward.1} parent=1 // pred_check
      _
    $region119: #{decoder_model_forward.1} parent=1 // pred_check_branch
      %222 = sbr.rel (0) target = $region121
    $region120: #{decoder_model_forward.1} parent=1 // pred_region
      %224 = dma.done [#allocation18], 256
    $region121: #{decoder_model_forward.1} parent=1 // pred_fallthru
      _
    // Predicated region
    $region122: #{decoder_model_forward.1} parent=1 // pred_check
      _
    $region123: #{decoder_model_forward.1} parent=1 // pred_check_branch
      %226 = sbr.rel (0) target = $region125
    $region124: #{decoder_model_forward.1} parent=1 // pred_region
      %228 = dma.done [#allocation21], 256
    $region125: #{decoder_model_forward.1} parent=1 // pred_fallthru
      _
    // Predicated region
    $region126: #{decoder_model_forward.1} parent=1 // pred_check
      _
    $region127: #{decoder_model_forward.1} parent=1 // pred_check_branch
      %230 = sbr.rel (0) target = $region129
    $region128: #{decoder_model_forward.1} parent=1 // pred_region
      %232 = dma.done [#allocation21], 256
    $region129: #{decoder_model_forward.1} parent=1 // pred_fallthru
      _
    %v233 = vld [vmem:[#allocation6] sm:$0x3f]
    %v234 = vld [vmem:[#allocation10] sm:$0x3f]
    %v235 = vld [vmem:[#allocation8] sm:$0x1]
    %v236 = vld [vmem:[%s6] sm:$0x1]
    %v237 = vld [vmem:[%s0] sm:$0x3]
    %v239 = vperm.slane %v235, 0
    %vm241 = vcmask 48128
    %v243 = vsel %vm241, %v237, 0
    %vm245 = vcmask 1045504
    %v247 = vsel %vm245, %v233, 0
    %249 = vmatpush.msra.mxu0 0.0
    %250 = vmatpush.msra.mxu0 0.0
    %251 = vmatpush.msra.mxu0 0.0
    %252 = vmatpush.msra.mxu0 0.0
    %253 = vmatpush.msra.mxu0 0.0
    %254 = vmatpush.msra.mxu0 0.0
    %255 = vmatpush.msra.mxu0 0.0
    %256 = vmatpush.msra.mxu0 0.0
    %257 = vmatpush.msra.mxu0 0.0
    %258 = vmatpush.msra.mxu0 0.0
    %259 = vmatpush.msra.mxu0 0.0
    %260 = vmatpush.msra.mxu0 0.0
    %261 = vmatpush.msra.mxu0 0.0
    %262 = vmatpush.msra.mxu0 0.0
    %263 = vmatpush.msra.mxu0 0.0
    %264 = vmatpush.msra.mxu0 %v247
    %265 = vmatmul.f32.gmra.mxu0 %v243
    %v266 = vpop.f32.mrf.mxu0
    %v267 = vadd.f32 %v239, %v266
    %268 = vdwg.mxu0
    %vm269 = vcmask 451584
    %270 = vst.msk [vmem:[#allocation2] sm:$0x3] %vm269, %v267
    %v272 = vperm.slane %v236, 0
    %v275 = vsel %vm245, %v234, 0
    %277 = vmatpush.msra.mxu0 0.0
    %278 = vmatpush.msra.mxu0 0.0
    %279 = vmatpush.msra.mxu0 0.0
    %280 = vmatpush.msra.mxu0 0.0
    %281 = vmatpush.msra.mxu0 0.0
    %282 = vmatpush.msra.mxu0 0.0
    %283 = vmatpush.msra.mxu0 0.0
    %284 = vmatpush.msra.mxu0 0.0
    %285 = vmatpush.msra.mxu0 0.0
    %286 = vmatpush.msra.mxu0 0.0
    %287 = vmatpush.msra.mxu0 0.0
    %288 = vmatpush.msra.mxu0 0.0
    %289 = vmatpush.msra.mxu0 0.0
    %290 = vmatpush.msra.mxu0 0.0
    %291 = vmatpush.msra.mxu0 0.0
    %292 = vmatpush.msra.mxu0 %v275
    %293 = vmatmul.f32.gmra.mxu0 %v243
    %v294 = vpop.f32.mrf.mxu0
    %v295 = vadd.f32 %v272, %v294
    %296 = vdwg.mxu0
    %297 = vst.msk [vmem:[#allocation3] sm:$0x3] %vm269, %v295
    %s298 = scalar_lea.vmem %s0, 2
    %v299 = vld [vmem:[%s298] sm:$0x3]
    %v301 = vsel %vm241, %v299, 0
    %303 = vmatpush.msra.mxu0 0.0
    %304 = vmatpush.msra.mxu0 0.0
    %305 = vmatpush.msra.mxu0 0.0
    %306 = vmatpush.msra.mxu0 0.0
    %307 = vmatpush.msra.mxu0 0.0
    %308 = vmatpush.msra.mxu0 0.0
    %309 = vmatpush.msra.mxu0 0.0
    %310 = vmatpush.msra.mxu0 0.0
    %311 = vmatpush.msra.mxu0 0.0
    %312 = vmatpush.msra.mxu0 0.0
    %313 = vmatpush.msra.mxu0 0.0
    %314 = vmatpush.msra.mxu0 0.0
    %315 = vmatpush.msra.mxu0 0.0
    %316 = vmatpush.msra.mxu0 0.0
    %317 = vmatpush.msra.mxu0 0.0
    %318 = vmatpush.msra.mxu0 %v247
    %319 = vmatmul.f32.gmra.mxu0 %v301
    %v320 = vpop.f32.mrf.mxu0
    %v321 = vadd.f32 %v239, %v320
    %322 = vdwg.mxu0
    %s323 = scalar_lea.vmem [#allocation2], 2
    %324 = vst.msk [vmem:[%s323] sm:$0x3] %vm269, %v321
    %325 = vmatpush.msra.mxu0 0.0
    %326 = vmatpush.msra.mxu0 0.0
    %327 = vmatpush.msra.mxu0 0.0
    %328 = vmatpush.msra.mxu0 0.0
    %329 = vmatpush.msra.mxu0 0.0
    %330 = vmatpush.msra.mxu0 0.0
    %331 = vmatpush.msra.mxu0 0.0
    %332 = vmatpush.msra.mxu0 0.0
    %333 = vmatpush.msra.mxu0 0.0
    %334 = vmatpush.msra.mxu0 0.0
    %335 = vmatpush.msra.mxu0 0.0
    %336 = vmatpush.msra.mxu0 0.0
    %337 = vmatpush.msra.mxu0 0.0
    %338 = vmatpush.msra.mxu0 0.0
    %339 = vmatpush.msra.mxu0 0.0
    %340 = vmatpush.msra.mxu0 %v275
    %341 = vmatmul.f32.gmra.mxu0 %v301
    %v342 = vpop.f32.mrf.mxu0
    %v343 = vadd.f32 %v272, %v342
    %344 = vdwg.mxu0
    %s345 = scalar_lea.vmem [#allocation3], 2
    %346 = vst.msk [vmem:[%s345] sm:$0x3] %vm269, %v343
    %s347 = scalar_lea.vmem %s0, 4
    %v348 = vld [vmem:[%s347] sm:$0x3]
    %v350 = vsel %vm241, %v348, 0
    %352 = vmatpush.msra.mxu0 0.0
    %353 = vmatpush.msra.mxu0 0.0
    %354 = vmatpush.msra.mxu0 0.0
    %355 = vmatpush.msra.mxu0 0.0
    %356 = vmatpush.msra.mxu0 0.0
    %357 = vmatpush.msra.mxu0 0.0
    %358 = vmatpush.msra.mxu0 0.0
    %359 = vmatpush.msra.mxu0 0.0
    %360 = vmatpush.msra.mxu0 0.0
    %361 = vmatpush.msra.mxu0 0.0
    %362 = vmatpush.msra.mxu0 0.0
    %363 = vmatpush.msra.mxu0 0.0
    %364 = vmatpush.msra.mxu0 0.0
    %365 = vmatpush.msra.mxu0 0.0
    %366 = vmatpush.msra.mxu0 0.0
    %367 = vmatpush.msra.mxu0 %v247
    %368 = vmatmul.f32.gmra.mxu0 %v350
    %v369 = vpop.f32.mrf.mxu0
    %v370 = vadd.f32 %v239, %v369
    %371 = vdwg.mxu0
    %s372 = scalar_lea.vmem [#allocation2], 4
    %373 = vst.msk [vmem:[%s372] sm:$0x3] %vm269, %v370
    %374 = vmatpush.msra.mxu0 0.0
    %375 = vmatpush.msra.mxu0 0.0
    %376 = vmatpush.msra.mxu0 0.0
    %377 = vmatpush.msra.mxu0 0.0
    %378 = vmatpush.msra.mxu0 0.0
    %379 = vmatpush.msra.mxu0 0.0
    %380 = vmatpush.msra.mxu0 0.0
    %381 = vmatpush.msra.mxu0 0.0
    %382 = vmatpush.msra.mxu0 0.0
    %383 = vmatpush.msra.mxu0 0.0
    %384 = vmatpush.msra.mxu0 0.0
    %385 = vmatpush.msra.mxu0 0.0
    %386 = vmatpush.msra.mxu0 0.0
    %387 = vmatpush.msra.mxu0 0.0
    %388 = vmatpush.msra.mxu0 0.0
    %389 = vmatpush.msra.mxu0 %v275
    %390 = vmatmul.f32.gmra.mxu0 %v350
    %v391 = vpop.f32.mrf.mxu0
    %v392 = vadd.f32 %v272, %v391
    %393 = vdwg.mxu0
    %s394 = scalar_lea.vmem [#allocation3], 4
    %395 = vst.msk [vmem:[%s394] sm:$0x3] %vm269, %v392
    %s396 = scalar_lea.vmem %s0, 6
    %v397 = vld [vmem:[%s396] sm:$0x3]
    %v399 = vsel %vm241, %v397, 0
    %401 = vmatpush.msra.mxu0 0.0
    %402 = vmatpush.msra.mxu0 0.0
    %403 = vmatpush.msra.mxu0 0.0
    %404 = vmatpush.msra.mxu0 0.0
    %405 = vmatpush.msra.mxu0 0.0
    %406 = vmatpush.msra.mxu0 0.0
    %407 = vmatpush.msra.mxu0 0.0
    %408 = vmatpush.msra.mxu0 0.0
    %409 = vmatpush.msra.mxu0 0.0
    %410 = vmatpush.msra.mxu0 0.0
    %411 = vmatpush.msra.mxu0 0.0
    %412 = vmatpush.msra.mxu0 0.0
    %413 = vmatpush.msra.mxu0 0.0
    %414 = vmatpush.msra.mxu0 0.0
    %415 = vmatpush.msra.mxu0 0.0
    %416 = vmatpush.msra.mxu0 %v247
    %417 = vmatmul.f32.gmra.mxu0 %v399
    %v418 = vpop.f32.mrf.mxu0
    %v419 = vadd.f32 %v239, %v418
    %420 = vdwg.mxu0
    %s421 = scalar_lea.vmem [#allocation2], 6
    %422 = vst.msk [vmem:[%s421] sm:$0x3] %vm269, %v419
    %423 = vmatpush.msra.mxu0 0.0
    %424 = vmatpush.msra.mxu0 0.0
    %425 = vmatpush.msra.mxu0 0.0
    %426 = vmatpush.msra.mxu0 0.0
    %427 = vmatpush.msra.mxu0 0.0
    %428 = vmatpush.msra.mxu0 0.0
    %429 = vmatpush.msra.mxu0 0.0
    %430 = vmatpush.msra.mxu0 0.0
    %431 = vmatpush.msra.mxu0 0.0
    %432 = vmatpush.msra.mxu0 0.0
    %433 = vmatpush.msra.mxu0 0.0
    %434 = vmatpush.msra.mxu0 0.0
    %435 = vmatpush.msra.mxu0 0.0
    %436 = vmatpush.msra.mxu0 0.0
    %437 = vmatpush.msra.mxu0 0.0
    %438 = vmatpush.msra.mxu0 %v275
    %439 = vmatmul.f32.gmra.mxu0 %v399
    %v440 = vpop.f32.mrf.mxu0
    %v441 = vadd.f32 %v272, %v440
    %442 = vdwg.mxu0
    %s443 = scalar_lea.vmem [#allocation3], 6
    %444 = vst.msk [vmem:[%s443] sm:$0x3] %vm269, %v441
    %s445 = scalar_lea.vmem %s0, 8
    %v446 = vld [vmem:[%s445] sm:$0x3]
    %v448 = vsel %vm241, %v446, 0
    %450 = vmatpush.msra.mxu0 0.0
    %451 = vmatpush.msra.mxu0 0.0
    %452 = vmatpush.msra.mxu0 0.0
    %453 = vmatpush.msra.mxu0 0.0
    %454 = vmatpush.msra.mxu0 0.0
    %455 = vmatpush.msra.mxu0 0.0
    %456 = vmatpush.msra.mxu0 0.0
    %457 = vmatpush.msra.mxu0 0.0
    %458 = vmatpush.msra.mxu0 0.0
    %459 = vmatpush.msra.mxu0 0.0
    %460 = vmatpush.msra.mxu0 0.0
    %461 = vmatpush.msra.mxu0 0.0
    %462 = vmatpush.msra.mxu0 0.0
    %463 = vmatpush.msra.mxu0 0.0
    %464 = vmatpush.msra.mxu0 0.0
    %465 = vmatpush.msra.mxu0 %v247
    %466 = vmatmul.f32.gmra.mxu0 %v448
    %v467 = vpop.f32.mrf.mxu0
    %v468 = vadd.f32 %v239, %v467
    %469 = vdwg.mxu0
    %s470 = scalar_lea.vmem [#allocation2], 8
    %471 = vst.msk [vmem:[%s470] sm:$0x3] %vm269, %v468
    %472 = vmatpush.msra.mxu0 0.0
    %473 = vmatpush.msra.mxu0 0.0
    %474 = vmatpush.msra.mxu0 0.0
    %475 = vmatpush.msra.mxu0 0.0
    %476 = vmatpush.msra.mxu0 0.0
    %477 = vmatpush.msra.mxu0 0.0
    %478 = vmatpush.msra.mxu0 0.0
    %479 = vmatpush.msra.mxu0 0.0
    %480 = vmatpush.msra.mxu0 0.0
    %481 = vmatpush.msra.mxu0 0.0
    %482 = vmatpush.msra.mxu0 0.0
    %483 = vmatpush.msra.mxu0 0.0
    %484 = vmatpush.msra.mxu0 0.0
    %485 = vmatpush.msra.mxu0 0.0
    %486 = vmatpush.msra.mxu0 0.0
    %487 = vmatpush.msra.mxu0 %v275
    %488 = vmatmul.f32.gmra.mxu0 %v448
    %v489 = vpop.f32.mrf.mxu0
    %v490 = vadd.f32 %v272, %v489
    %491 = vdwg.mxu0
    %s492 = scalar_lea.vmem [#allocation3], 8
    %493 = vst.msk [vmem:[%s492] sm:$0x3] %vm269, %v490
    %s494 = scalar_lea.vmem %s0, 10
    %v495 = vld [vmem:[%s494] sm:$0x3]
    %v497 = vsel %vm241, %v495, 0
    %499 = vmatpush.msra.mxu0 0.0
    %500 = vmatpush.msra.mxu0 0.0
    %501 = vmatpush.msra.mxu0 0.0
    %502 = vmatpush.msra.mxu0 0.0
    %503 = vmatpush.msra.mxu0 0.0
    %504 = vmatpush.msra.mxu0 0.0
    %505 = vmatpush.msra.mxu0 0.0
    %506 = vmatpush.msra.mxu0 0.0
    %507 = vmatpush.msra.mxu0 0.0
    %508 = vmatpush.msra.mxu0 0.0
    %509 = vmatpush.msra.mxu0 0.0
    %510 = vmatpush.msra.mxu0 0.0
    %511 = vmatpush.msra.mxu0 0.0
    %512 = vmatpush.msra.mxu0 0.0
    %513 = vmatpush.msra.mxu0 0.0
    %514 = vmatpush.msra.mxu0 %v247
    %515 = vmatmul.f32.gmra.mxu0 %v497
    %v516 = vpop.f32.mrf.mxu0
    %v517 = vadd.f32 %v239, %v516
    %518 = vdwg.mxu0
    %s519 = scalar_lea.vmem [#allocation2], 10
    %520 = vst.msk [vmem:[%s519] sm:$0x3] %vm269, %v517
    %521 = vmatpush.msra.mxu0 0.0
    %522 = vmatpush.msra.mxu0 0.0
    %523 = vmatpush.msra.mxu0 0.0
    %524 = vmatpush.msra.mxu0 0.0
    %525 = vmatpush.msra.mxu0 0.0
    %526 = vmatpush.msra.mxu0 0.0
    %527 = vmatpush.msra.mxu0 0.0
    %528 = vmatpush.msra.mxu0 0.0
    %529 = vmatpush.msra.mxu0 0.0
    %530 = vmatpush.msra.mxu0 0.0
    %531 = vmatpush.msra.mxu0 0.0
    %532 = vmatpush.msra.mxu0 0.0
    %533 = vmatpush.msra.mxu0 0.0
    %534 = vmatpush.msra.mxu0 0.0
    %535 = vmatpush.msra.mxu0 0.0
    %536 = vmatpush.msra.mxu0 %v275
    %537 = vmatmul.f32.gmra.mxu0 %v497
    %v538 = vpop.f32.mrf.mxu0
    %v539 = vadd.f32 %v272, %v538
    %540 = vdwg.mxu0
    %s541 = scalar_lea.vmem [#allocation3], 10
    %542 = vst.msk [vmem:[%s541] sm:$0x3] %vm269, %v539
    %s543 = scalar_lea.vmem %s0, 12
    %v544 = vld [vmem:[%s543] sm:$0x3]
    %v546 = vsel %vm241, %v544, 0
    %548 = vmatpush.msra.mxu0 0.0
    %549 = vmatpush.msra.mxu0 0.0
    %550 = vmatpush.msra.mxu0 0.0
    %551 = vmatpush.msra.mxu0 0.0
    %552 = vmatpush.msra.mxu0 0.0
    %553 = vmatpush.msra.mxu0 0.0
    %554 = vmatpush.msra.mxu0 0.0
    %555 = vmatpush.msra.mxu0 0.0
    %556 = vmatpush.msra.mxu0 0.0
    %557 = vmatpush.msra.mxu0 0.0
    %558 = vmatpush.msra.mxu0 0.0
    %559 = vmatpush.msra.mxu0 0.0
    %560 = vmatpush.msra.mxu0 0.0
    %561 = vmatpush.msra.mxu0 0.0
    %562 = vmatpush.msra.mxu0 0.0
    %563 = vmatpush.msra.mxu0 %v247
    %564 = vmatmul.f32.gmra.mxu0 %v546
    %v565 = vpop.f32.mrf.mxu0
    %v566 = vadd.f32 %v239, %v565
    %567 = vdwg.mxu0
    %s568 = scalar_lea.vmem [#allocation2], 12
    %569 = vst.msk [vmem:[%s568] sm:$0x3] %vm269, %v566
    %570 = vmatpush.msra.mxu0 0.0
    %571 = vmatpush.msra.mxu0 0.0
    %572 = vmatpush.msra.mxu0 0.0
    %573 = vmatpush.msra.mxu0 0.0
    %574 = vmatpush.msra.mxu0 0.0
    %575 = vmatpush.msra.mxu0 0.0
    %576 = vmatpush.msra.mxu0 0.0
    %577 = vmatpush.msra.mxu0 0.0
    %578 = vmatpush.msra.mxu0 0.0
    %579 = vmatpush.msra.mxu0 0.0
    %580 = vmatpush.msra.mxu0 0.0
    %581 = vmatpush.msra.mxu0 0.0
    %582 = vmatpush.msra.mxu0 0.0
    %583 = vmatpush.msra.mxu0 0.0
    %584 = vmatpush.msra.mxu0 0.0
    %585 = vmatpush.msra.mxu0 %v275
    %586 = vmatmul.f32.gmra.mxu0 %v546
    %v587 = vpop.f32.mrf.mxu0
    %v588 = vadd.f32 %v272, %v587
    %589 = vdwg.mxu0
    %s590 = scalar_lea.vmem [#allocation3], 12
    %591 = vst.msk [vmem:[%s590] sm:$0x3] %vm269, %v588
    %s592 = scalar_lea.vmem %s0, 14
    %v593 = vld [vmem:[%s592] sm:$0x3]
    %v595 = vsel %vm241, %v593, 0
    %597 = vmatpush.msra.mxu0 0.0
    %598 = vmatpush.msra.mxu0 0.0
    %599 = vmatpush.msra.mxu0 0.0
    %600 = vmatpush.msra.mxu0 0.0
    %601 = vmatpush.msra.mxu0 0.0
    %602 = vmatpush.msra.mxu0 0.0
    %603 = vmatpush.msra.mxu0 0.0
    %604 = vmatpush.msra.mxu0 0.0
    %605 = vmatpush.msra.mxu0 0.0
    %606 = vmatpush.msra.mxu0 0.0
    %607 = vmatpush.msra.mxu0 0.0
    %608 = vmatpush.msra.mxu0 0.0
    %609 = vmatpush.msra.mxu0 0.0
    %610 = vmatpush.msra.mxu0 0.0
    %611 = vmatpush.msra.mxu0 0.0
    %612 = vmatpush.msra.mxu0 %v247
    %613 = vmatmul.f32.gmra.mxu0 %v595
    %v614 = vpop.f32.mrf.mxu0
    %v615 = vadd.f32 %v239, %v614
    %616 = vdwg.mxu0
    %s617 = scalar_lea.vmem [#allocation2], 14
    %618 = vst.msk [vmem:[%s617] sm:$0x3] %vm269, %v615
    %619 = vmatpush.msra.mxu0 0.0
    %620 = vmatpush.msra.mxu0 0.0
    %621 = vmatpush.msra.mxu0 0.0
    %622 = vmatpush.msra.mxu0 0.0
    %623 = vmatpush.msra.mxu0 0.0
    %624 = vmatpush.msra.mxu0 0.0
    %625 = vmatpush.msra.mxu0 0.0
    %626 = vmatpush.msra.mxu0 0.0
    %627 = vmatpush.msra.mxu0 0.0
    %628 = vmatpush.msra.mxu0 0.0
    %629 = vmatpush.msra.mxu0 0.0
    %630 = vmatpush.msra.mxu0 0.0
    %631 = vmatpush.msra.mxu0 0.0
    %632 = vmatpush.msra.mxu0 0.0
    %633 = vmatpush.msra.mxu0 0.0
    %634 = vmatpush.msra.mxu0 %v275
    %635 = vmatmul.f32.gmra.mxu0 %v595
    %v636 = vpop.f32.mrf.mxu0
    %v637 = vadd.f32 %v272, %v636
    %638 = vdwg.mxu0
    %s639 = scalar_lea.vmem [#allocation3], 14
    %640 = vst.msk [vmem:[%s639] sm:$0x3] %vm269, %v637
    %v641 = vld [vmem:[%s2] sm:$0xff]
    %v642 = vld [vmem:[%s2 + $0x8] sm:$0x3f]
    %v643 = vld [vmem:[%s5] sm:$0xff]
    %v644 = vld [vmem:[%s5 + $0x8] sm:$0x3f]
    loop: start=0, step=1, limit=8
    $region130: #{decoder_model_forward.1} parent=1 // loop_pre_header
      _
    $region131: #{decoder_model_forward.1} parent=1 // loop_header
      %s646 = sphi 0, %s650
      %p647 = scmp.ge.s32.totalorder %s646, 8
      %v651 = vphi 0.0, %v757
      %v652 = vphi 0.0, %v751
      %v653 = vphi 0.0, %v794
      %v654 = vphi 0.0, %v788
    $region132: #{decoder_model_forward.1} parent=1 // loop_header_branch
      %649 = sbr.rel (%p647) target = $region136
    $region133: #{decoder_model_forward.1} parent=1 // loop_body
      %s655 = ssub.s32 7, %s646
      %s656 = smul.u32 %s646, 2
      %s657 = scalar_lea.vmem [#allocation2], %s656
      %v658 = vld [vmem:[%s657] sm:$0x3]
      %660 = vrot.lane.b32.xlu0 %v651, 100
      %v661 = vpop.permute.xlu0 %660
      %vm662 = vcmask 113664
      %v663 = vsel %vm662, %v661, 0
      %v666 = vsel %vm245, %v642, 0
      %668 = vmatpush.msra.mxu0 0.0
      %669 = vmatpush.msra.mxu0 0.0
      %670 = vmatpush.msra.mxu0 0.0
      %671 = vmatpush.msra.mxu0 0.0
      %672 = vmatpush.msra.mxu0 0.0
      %673 = vmatpush.msra.mxu0 0.0
      %674 = vmatpush.msra.mxu0 0.0
      %675 = vmatpush.msra.mxu0 0.0
      %676 = vmatpush.msra.mxu0 0.0
      %677 = vmatpush.msra.mxu0 0.0
      %678 = vmatpush.msra.mxu0 0.0
      %679 = vmatpush.msra.mxu0 0.0
      %680 = vmatpush.msra.mxu0 0.0
      %681 = vmatpush.msra.mxu0 0.0
      %682 = vmatpush.msra.mxu0 %v666
      %683 = vmatpush.msra.mxu0 %v641
      %684 = vmatmul.f32.gmra.mxu0 %v663
      %v685 = vpop.f32.mrf.mxu0
      %v686 = vadd.f32 0.0, %v685
      %687 = vdwg.mxu0
      %v688 = vadd.f32 %v658, %v686
      %s689 = smul.u32 %s655, 2
      %s690 = scalar_lea.vmem [#allocation3], %s689
      %v691 = vld [vmem:[%s690] sm:$0x3]
      %693 = vrot.lane.b32.xlu0 %v653, 100
      %v694 = vpop.permute.xlu0 %693
      %v695 = vsel %vm662, %v694, 0
      %v698 = vsel %vm245, %v644, 0
      %700 = vmatpush.msra.mxu0 0.0
      %701 = vmatpush.msra.mxu0 0.0
      %702 = vmatpush.msra.mxu0 0.0
      %703 = vmatpush.msra.mxu0 0.0
      %704 = vmatpush.msra.mxu0 0.0
      %705 = vmatpush.msra.mxu0 0.0
      %706 = vmatpush.msra.mxu0 0.0
      %707 = vmatpush.msra.mxu0 0.0
      %708 = vmatpush.msra.mxu0 0.0
      %709 = vmatpush.msra.mxu0 0.0
      %710 = vmatpush.msra.mxu0 0.0
      %711 = vmatpush.msra.mxu0 0.0
      %712 = vmatpush.msra.mxu0 0.0
      %713 = vmatpush.msra.mxu0 0.0
      %714 = vmatpush.msra.mxu0 %v698
      %715 = vmatpush.msra.mxu0 %v643
      %716 = vmatmul.f32.gmra.mxu0 %v695
      %v717 = vpop.f32.mrf.mxu0
      %v718 = vadd.f32 0.0, %v717
      %719 = vdwg.mxu0
      %v720 = vadd.f32 %v691, %v718
      %v721 = vxor.u32 %v688, 2147483648
      %v722 = vmul.f32 %v721, 1.442695
      %v723 = vpow.pop %v722
      %v724 = vadd.f32 %v723, 1.0
      %v725 = vrcp.pop %v724
      %v726 = vmul.f32 %v724, %v725
      %v727 = vsub.f32 1.0, %v726
      %v728 = vmul.f32 %v725, %v727
      %v729 = vadd.f32 %v725, %v728
      %vm730 = vweird.f32 %v724
      %vm731 = vweird.f32 %v725
      %vm732 = vmor %vm730, %vm731
      %v733 = vsel %vm732, %v725, %v729
      %v734 = vand.u32 2147483647, %v724
      %vm735 = vcmp.eq.f32.partialorder %v734, 8.507059e+37
      %v736 = vand.u32 %v724, 2147483648
      %v737 = vor.u32 1.1754944e-38, %v736
      %v738 = vsel %vm735, %v737, %v733
      %v739 = vmul.f32 1.0, %v738
      %v740 = vtanh.pop %v688
      %v741 = vmul.f32 %v739, %v652
      %743 = vrot.lane.b32.xlu0 %v740, 86
      %v744 = vpop.permute.xlu0 %743
      %v746 = vmul.f32 %v739, %v744
      %748 = vrot.lane.b32.xlu0 %v746, 14
      %v749 = vpop.permute.xlu0 %748
      %v751 = vadd.f32 %v741, %v749
      %v752 = vtanh.pop %v751
      %754 = vrot.lane.b32.xlu0 %v752, 14
      %v755 = vpop.permute.xlu0 %754
      %v757 = vmul.f32 %v739, %v755
      %v758 = vxor.u32 %v720, 2147483648
      %v759 = vmul.f32 %v758, 1.442695
      %v760 = vpow.pop %v759
      %v761 = vadd.f32 %v760, 1.0
      %v762 = vrcp.pop %v761
      %v763 = vmul.f32 %v761, %v762
      %v764 = vsub.f32 1.0, %v763
      %v765 = vmul.f32 %v762, %v764
      %v766 = vadd.f32 %v762, %v765
      %vm767 = vweird.f32 %v761
      %vm768 = vweird.f32 %v762
      %vm769 = vmor %vm767, %vm768
      %v770 = vsel %vm769, %v762, %v766
      %v771 = vand.u32 2147483647, %v761
      %vm772 = vcmp.eq.f32.partialorder %v771, 8.507059e+37
      %v773 = vand.u32 %v761, 2147483648
      %v774 = vor.u32 1.1754944e-38, %v773
      %v775 = vsel %vm772, %v774, %v770
      %v776 = vmul.f32 1.0, %v775
      %v777 = vtanh.pop %v720
      %v778 = vmul.f32 %v776, %v654
      %780 = vrot.lane.b32.xlu0 %v777, 86
      %v781 = vpop.permute.xlu0 %780
      %v783 = vmul.f32 %v776, %v781
      %785 = vrot.lane.b32.xlu0 %v783, 14
      %v786 = vpop.permute.xlu0 %785
      %v788 = vadd.f32 %v778, %v786
      %v789 = vtanh.pop %v788
      %791 = vrot.lane.b32.xlu0 %v789, 14
      %v792 = vpop.permute.xlu0 %791
      %v794 = vmul.f32 %v776, %v792
      %796 = vrot.lane.b32.xlu0 %v757, 100
      %v797 = vpop.permute.xlu0 %796
      %s799 = scalar_lea.vmem [#allocation4], %s656
      %vm800 = vcmask 107520
      %801 = vst.msk [vmem:[%s799] sm:$0x3] %vm800, %v797
      %803 = vrot.lane.b32.xlu0 %v794, 100
      %v804 = vpop.permute.xlu0 %803
      %s806 = scalar_lea.vmem [#allocation5], %s689
      %807 = vst.msk [vmem:[%s806] sm:$0x3] %vm800, %v804
    $region134: #{decoder_model_forward.1} parent=1 // loop_footer
      %s650 = sadd.s32 1, %s646
    $region135: #{decoder_model_forward.1} parent=1 // loop_footer_branch
      %645 = sbr.rel target = $region131
    $region136: #{decoder_model_forward.1} parent=1 // loop_exit
      _
    %v808 = vld [vmem:[%s7] sm:$0xff]
    %v809 = vld [vmem:[%s7 + $0x8] sm:$0x3f]
    %v810 = vld [vmem:[#allocation11] sm:$0xff]
    %v811 = vld [vmem:[#allocation11 + $0x8] sm:$0x3f]
    %v812 = vld [vmem:[#allocation14] sm:$0xff]
    %v813 = vld [vmem:[#allocation14 + $0x8] sm:$0x3f]
    %v814 = vld [vmem:[#allocation16] sm:$0xff]
    %v815 = vld [vmem:[#allocation16 + $0x8] sm:$0x3f]
    %v816 = vld [vmem:[%s10] sm:$0x1]
    %v817 = vld [vmem:[%s14] sm:$0x1]
    %v818 = vld [vmem:[#allocation4] sm:$0x3]
    %v819 = vld [vmem:[#allocation5] sm:$0x3]
    %vm820 = vcmask 113664
    %v822 = vsel %vm820, %v819, 0
    %v825 = vsel %vm245, %v811, 0
    %827 = vmatpush.msra.mxu0 0.0
    %828 = vmatpush.msra.mxu0 0.0
    %829 = vmatpush.msra.mxu0 0.0
    %830 = vmatpush.msra.mxu0 0.0
    %831 = vmatpush.msra.mxu0 0.0
    %832 = vmatpush.msra.mxu0 0.0
    %833 = vmatpush.msra.mxu0 0.0
    %834 = vmatpush.msra.mxu0 0.0
    %835 = vmatpush.msra.mxu0 0.0
    %836 = vmatpush.msra.mxu0 0.0
    %837 = vmatpush.msra.mxu0 0.0
    %838 = vmatpush.msra.mxu0 0.0
    %839 = vmatpush.msra.mxu0 0.0
    %840 = vmatpush.msra.mxu0 0.0
    %841 = vmatpush.msra.mxu0 %v825
    %842 = vmatpush.msra.mxu0 %v810
    %843 = vmatmul.f32.gmra.mxu0 %v822
    %v844 = vpop.f32.mrf.mxu0
    %v845 = vadd.f32 0.0, %v844
    %846 = vdwg.mxu0
    %v848 = vsel %vm820, %v818, 0
    %v851 = vsel %vm245, %v809, 0
    %853 = vmatpush.msra.mxu0 0.0
    %854 = vmatpush.msra.mxu0 0.0
    %855 = vmatpush.msra.mxu0 0.0
    %856 = vmatpush.msra.mxu0 0.0
    %857 = vmatpush.msra.mxu0 0.0
    %858 = vmatpush.msra.mxu0 0.0
    %859 = vmatpush.msra.mxu0 0.0
    %860 = vmatpush.msra.mxu0 0.0
    %861 = vmatpush.msra.mxu0 0.0
    %862 = vmatpush.msra.mxu0 0.0
    %863 = vmatpush.msra.mxu0 0.0
    %864 = vmatpush.msra.mxu0 0.0
    %865 = vmatpush.msra.mxu0 0.0
    %866 = vmatpush.msra.mxu0 0.0
    %867 = vmatpush.msra.mxu0 %v851
    %868 = vmatpush.msra.mxu0 %v808
    %869 = vmatmul.f32.gmra.mxu0 %v848
    %v870 = vpop.f32.mrf.mxu0
    %v871 = vadd.f32 %v845, %v870
    %872 = vdwg.mxu0
    %v874 = vperm.slane %v816, 0
    %v876 = vadd.f32 %v871, %v874
    %877 = vst.msk [vmem:[#allocation2] sm:$0x3] %vm269, %v876
    %v879 = vsel %vm245, %v815, 0
    %881 = vmatpush.msra.mxu0 0.0
    %882 = vmatpush.msra.mxu0 0.0
    %883 = vmatpush.msra.mxu0 0.0
    %884 = vmatpush.msra.mxu0 0.0
    %885 = vmatpush.msra.mxu0 0.0
    %886 = vmatpush.msra.mxu0 0.0
    %887 = vmatpush.msra.mxu0 0.0
    %888 = vmatpush.msra.mxu0 0.0
    %889 = vmatpush.msra.mxu0 0.0
    %890 = vmatpush.msra.mxu0 0.0
    %891 = vmatpush.msra.mxu0 0.0
    %892 = vmatpush.msra.mxu0 0.0
    %893 = vmatpush.msra.mxu0 0.0
    %894 = vmatpush.msra.mxu0 0.0
    %895 = vmatpush.msra.mxu0 %v879
    %896 = vmatpush.msra.mxu0 %v814
    %897 = vmatmul.f32.gmra.mxu0 %v822
    %v898 = vpop.f32.mrf.mxu0
    %v899 = vadd.f32 0.0, %v898
    %900 = vdwg.mxu0
    %v902 = vsel %vm245, %v813, 0
    %904 = vmatpush.msra.mxu0 0.0
    %905 = vmatpush.msra.mxu0 0.0
    %906 = vmatpush.msra.mxu0 0.0
    %907 = vmatpush.msra.mxu0 0.0
    %908 = vmatpush.msra.mxu0 0.0
    %909 = vmatpush.msra.mxu0 0.0
    %910 = vmatpush.msra.mxu0 0.0
    %911 = vmatpush.msra.mxu0 0.0
    %912 = vmatpush.msra.mxu0 0.0
    %913 = vmatpush.msra.mxu0 0.0
    %914 = vmatpush.msra.mxu0 0.0
    %915 = vmatpush.msra.mxu0 0.0
    %916 = vmatpush.msra.mxu0 0.0
    %917 = vmatpush.msra.mxu0 0.0
    %918 = vmatpush.msra.mxu0 %v902
    %919 = vmatpush.msra.mxu0 %v812
    %920 = vmatmul.f32.gmra.mxu0 %v848
    %v921 = vpop.f32.mrf.mxu0
    %v922 = vadd.f32 %v899, %v921
    %923 = vdwg.mxu0
    %v925 = vperm.slane %v817, 0
    %v927 = vadd.f32 %v922, %v925
    %928 = vst.msk [vmem:[#allocation3] sm:$0x3] %vm269, %v927
    %s929 = scalar_lea.vmem [#allocation4], 2
    %v930 = vld [vmem:[%s929] sm:$0x3]
    %s931 = scalar_lea.vmem [#allocation5], 2
    %v932 = vld [vmem:[%s931] sm:$0x3]
    %v934 = vsel %vm820, %v932, 0
    %936 = vmatpush.msra.mxu0 0.0
    %937 = vmatpush.msra.mxu0 0.0
    %938 = vmatpush.msra.mxu0 0.0
    %939 = vmatpush.msra.mxu0 0.0
    %940 = vmatpush.msra.mxu0 0.0
    %941 = vmatpush.msra.mxu0 0.0
    %942 = vmatpush.msra.mxu0 0.0
    %943 = vmatpush.msra.mxu0 0.0
    %944 = vmatpush.msra.mxu0 0.0
    %945 = vmatpush.msra.mxu0 0.0
    %946 = vmatpush.msra.mxu0 0.0
    %947 = vmatpush.msra.mxu0 0.0
    %948 = vmatpush.msra.mxu0 0.0
    %949 = vmatpush.msra.mxu0 0.0
    %950 = vmatpush.msra.mxu0 %v825
    %951 = vmatpush.msra.mxu0 %v810
    %952 = vmatmul.f32.gmra.mxu0 %v934
    %v953 = vpop.f32.mrf.mxu0
    %v954 = vadd.f32 0.0, %v953
    %955 = vdwg.mxu0
    %v957 = vsel %vm820, %v930, 0
    %959 = vmatpush.msra.mxu0 0.0
    %960 = vmatpush.msra.mxu0 0.0
    %961 = vmatpush.msra.mxu0 0.0
    %962 = vmatpush.msra.mxu0 0.0
    %963 = vmatpush.msra.mxu0 0.0
    %964 = vmatpush.msra.mxu0 0.0
    %965 = vmatpush.msra.mxu0 0.0
    %966 = vmatpush.msra.mxu0 0.0
    %967 = vmatpush.msra.mxu0 0.0
    %968 = vmatpush.msra.mxu0 0.0
    %969 = vmatpush.msra.mxu0 0.0
    %970 = vmatpush.msra.mxu0 0.0
    %971 = vmatpush.msra.mxu0 0.0
    %972 = vmatpush.msra.mxu0 0.0
    %973 = vmatpush.msra.mxu0 %v851
    %974 = vmatpush.msra.mxu0 %v808
    %975 = vmatmul.f32.gmra.mxu0 %v957
    %v976 = vpop.f32.mrf.mxu0
    %v977 = vadd.f32 %v954, %v976
    %978 = vdwg.mxu0
    %v979 = vadd.f32 %v977, %v874
    %980 = vst.msk [vmem:[%s323] sm:$0x3] %vm269, %v979
    %981 = vmatpush.msra.mxu0 0.0
    %982 = vmatpush.msra.mxu0 0.0
    %983 = vmatpush.msra.mxu0 0.0
    %984 = vmatpush.msra.mxu0 0.0
    %985 = vmatpush.msra.mxu0 0.0
    %986 = vmatpush.msra.mxu0 0.0
    %987 = vmatpush.msra.mxu0 0.0
    %988 = vmatpush.msra.mxu0 0.0
    %989 = vmatpush.msra.mxu0 0.0
    %990 = vmatpush.msra.mxu0 0.0
    %991 = vmatpush.msra.mxu0 0.0
    %992 = vmatpush.msra.mxu0 0.0
    %993 = vmatpush.msra.mxu0 0.0
    %994 = vmatpush.msra.mxu0 0.0
    %995 = vmatpush.msra.mxu0 %v879
    %996 = vmatpush.msra.mxu0 %v814
    %997 = vmatmul.f32.gmra.mxu0 %v934
    %v998 = vpop.f32.mrf.mxu0
    %v999 = vadd.f32 0.0, %v998
    %1000 = vdwg.mxu0
    %1001 = vmatpush.msra.mxu0 0.0
    %1002 = vmatpush.msra.mxu0 0.0
    %1003 = vmatpush.msra.mxu0 0.0
    %1004 = vmatpush.msra.mxu0 0.0
    %1005 = vmatpush.msra.mxu0 0.0
    %1006 = vmatpush.msra.mxu0 0.0
    %1007 = vmatpush.msra.mxu0 0.0
    %1008 = vmatpush.msra.mxu0 0.0
    %1009 = vmatpush.msra.mxu0 0.0
    %1010 = vmatpush.msra.mxu0 0.0
    %1011 = vmatpush.msra.mxu0 0.0
    %1012 = vmatpush.msra.mxu0 0.0
    %1013 = vmatpush.msra.mxu0 0.0
    %1014 = vmatpush.msra.mxu0 0.0
    %1015 = vmatpush.msra.mxu0 %v902
    %1016 = vmatpush.msra.mxu0 %v812
    %1017 = vmatmul.f32.gmra.mxu0 %v957
    %v1018 = vpop.f32.mrf.mxu0
    %v1019 = vadd.f32 %v999, %v1018
    %1020 = vdwg.mxu0
    %v1021 = vadd.f32 %v1019, %v925
    %1022 = vst.msk [vmem:[%s345] sm:$0x3] %vm269, %v1021
    %s1023 = scalar_lea.vmem [#allocation4], 4
    %v1024 = vld [vmem:[%s1023] sm:$0x3]
    %s1025 = scalar_lea.vmem [#allocation5], 4
    %v1026 = vld [vmem:[%s1025] sm:$0x3]
    %v1028 = vsel %vm820, %v1026, 0
    %1030 = vmatpush.msra.mxu0 0.0
    %1031 = vmatpush.msra.mxu0 0.0
    %1032 = vmatpush.msra.mxu0 0.0
    %1033 = vmatpush.msra.mxu0 0.0
    %1034 = vmatpush.msra.mxu0 0.0
    %1035 = vmatpush.msra.mxu0 0.0
    %1036 = vmatpush.msra.mxu0 0.0
    %1037 = vmatpush.msra.mxu0 0.0
    %1038 = vmatpush.msra.mxu0 0.0
    %1039 = vmatpush.msra.mxu0 0.0
    %1040 = vmatpush.msra.mxu0 0.0
    %1041 = vmatpush.msra.mxu0 0.0
    %1042 = vmatpush.msra.mxu0 0.0
    %1043 = vmatpush.msra.mxu0 0.0
    %1044 = vmatpush.msra.mxu0 %v825
    %1045 = vmatpush.msra.mxu0 %v810
    %1046 = vmatmul.f32.gmra.mxu0 %v1028
    %v1047 = vpop.f32.mrf.mxu0
    %v1048 = vadd.f32 0.0, %v1047
    %1049 = vdwg.mxu0
    %v1051 = vsel %vm820, %v1024, 0
    %1053 = vmatpush.msra.mxu0 0.0
    %1054 = vmatpush.msra.mxu0 0.0
    %1055 = vmatpush.msra.mxu0 0.0
    %1056 = vmatpush.msra.mxu0 0.0
    %1057 = vmatpush.msra.mxu0 0.0
    %1058 = vmatpush.msra.mxu0 0.0
    %1059 = vmatpush.msra.mxu0 0.0
    %1060 = vmatpush.msra.mxu0 0.0
    %1061 = vmatpush.msra.mxu0 0.0
    %1062 = vmatpush.msra.mxu0 0.0
    %1063 = vmatpush.msra.mxu0 0.0
    %1064 = vmatpush.msra.mxu0 0.0
    %1065 = vmatpush.msra.mxu0 0.0
    %1066 = vmatpush.msra.mxu0 0.0
    %1067 = vmatpush.msra.mxu0 %v851
    %1068 = vmatpush.msra.mxu0 %v808
    %1069 = vmatmul.f32.gmra.mxu0 %v1051
    %v1070 = vpop.f32.mrf.mxu0
    %v1071 = vadd.f32 %v1048, %v1070
    %1072 = vdwg.mxu0
    %v1073 = vadd.f32 %v1071, %v874
    %1074 = vst.msk [vmem:[%s372] sm:$0x3] %vm269, %v1073
    %1075 = vmatpush.msra.mxu0 0.0
    %1076 = vmatpush.msra.mxu0 0.0
    %1077 = vmatpush.msra.mxu0 0.0
    %1078 = vmatpush.msra.mxu0 0.0
    %1079 = vmatpush.msra.mxu0 0.0
    %1080 = vmatpush.msra.mxu0 0.0
    %1081 = vmatpush.msra.mxu0 0.0
    %1082 = vmatpush.msra.mxu0 0.0
    %1083 = vmatpush.msra.mxu0 0.0
    %1084 = vmatpush.msra.mxu0 0.0
    %1085 = vmatpush.msra.mxu0 0.0
    %1086 = vmatpush.msra.mxu0 0.0
    %1087 = vmatpush.msra.mxu0 0.0
    %1088 = vmatpush.msra.mxu0 0.0
    %1089 = vmatpush.msra.mxu0 %v879
    %1090 = vmatpush.msra.mxu0 %v814
    %1091 = vmatmul.f32.gmra.mxu0 %v1028
    %v1092 = vpop.f32.mrf.mxu0
    %v1093 = vadd.f32 0.0, %v1092
    %1094 = vdwg.mxu0
    %1095 = vmatpush.msra.mxu0 0.0
    %1096 = vmatpush.msra.mxu0 0.0
    %1097 = vmatpush.msra.mxu0 0.0
    %1098 = vmatpush.msra.mxu0 0.0
    %1099 = vmatpush.msra.mxu0 0.0
    %1100 = vmatpush.msra.mxu0 0.0
    %1101 = vmatpush.msra.mxu0 0.0
    %1102 = vmatpush.msra.mxu0 0.0
    %1103 = vmatpush.msra.mxu0 0.0
    %1104 = vmatpush.msra.mxu0 0.0
    %1105 = vmatpush.msra.mxu0 0.0
    %1106 = vmatpush.msra.mxu0 0.0
    %1107 = vmatpush.msra.mxu0 0.0
    %1108 = vmatpush.msra.mxu0 0.0
    %1109 = vmatpush.msra.mxu0 %v902
    %1110 = vmatpush.msra.mxu0 %v812
    %1111 = vmatmul.f32.gmra.mxu0 %v1051
    %v1112 = vpop.f32.mrf.mxu0
    %v1113 = vadd.f32 %v1093, %v1112
    %1114 = vdwg.mxu0
    %v1115 = vadd.f32 %v1113, %v925
    %1116 = vst.msk [vmem:[%s394] sm:$0x3] %vm269, %v1115
    %s1117 = scalar_lea.vmem [#allocation4], 6
    %v1118 = vld [vmem:[%s1117] sm:$0x3]
    %s1119 = scalar_lea.vmem [#allocation5], 6
    %v1120 = vld [vmem:[%s1119] sm:$0x3]
    %v1122 = vsel %vm820, %v1120, 0
    %1124 = vmatpush.msra.mxu0 0.0
    %1125 = vmatpush.msra.mxu0 0.0
    %1126 = vmatpush.msra.mxu0 0.0
    %1127 = vmatpush.msra.mxu0 0.0
    %1128 = vmatpush.msra.mxu0 0.0
    %1129 = vmatpush.msra.mxu0 0.0
    %1130 = vmatpush.msra.mxu0 0.0
    %1131 = vmatpush.msra.mxu0 0.0
    %1132 = vmatpush.msra.mxu0 0.0
    %1133 = vmatpush.msra.mxu0 0.0
    %1134 = vmatpush.msra.mxu0 0.0
    %1135 = vmatpush.msra.mxu0 0.0
    %1136 = vmatpush.msra.mxu0 0.0
    %1137 = vmatpush.msra.mxu0 0.0
    %1138 = vmatpush.msra.mxu0 %v825
    %1139 = vmatpush.msra.mxu0 %v810
    %1140 = vmatmul.f32.gmra.mxu0 %v1122
    %v1141 = vpop.f32.mrf.mxu0
    %v1142 = vadd.f32 0.0, %v1141
    %1143 = vdwg.mxu0
    %v1145 = vsel %vm820, %v1118, 0
    %1147 = vmatpush.msra.mxu0 0.0
    %1148 = vmatpush.msra.mxu0 0.0
    %1149 = vmatpush.msra.mxu0 0.0
    %1150 = vmatpush.msra.mxu0 0.0
    %1151 = vmatpush.msra.mxu0 0.0
    %1152 = vmatpush.msra.mxu0 0.0
    %1153 = vmatpush.msra.mxu0 0.0
    %1154 = vmatpush.msra.mxu0 0.0
    %1155 = vmatpush.msra.mxu0 0.0
    %1156 = vmatpush.msra.mxu0 0.0
    %1157 = vmatpush.msra.mxu0 0.0
    %1158 = vmatpush.msra.mxu0 0.0
    %1159 = vmatpush.msra.mxu0 0.0
    %1160 = vmatpush.msra.mxu0 0.0
    %1161 = vmatpush.msra.mxu0 %v851
    %1162 = vmatpush.msra.mxu0 %v808
    %1163 = vmatmul.f32.gmra.mxu0 %v1145
    %v1164 = vpop.f32.mrf.mxu0
    %v1165 = vadd.f32 %v1142, %v1164
    %1166 = vdwg.mxu0
    %v1167 = vadd.f32 %v1165, %v874
    %1168 = vst.msk [vmem:[%s421] sm:$0x3] %vm269, %v1167
    %1169 = vmatpush.msra.mxu0 0.0
    %1170 = vmatpush.msra.mxu0 0.0
    %1171 = vmatpush.msra.mxu0 0.0
    %1172 = vmatpush.msra.mxu0 0.0
    %1173 = vmatpush.msra.mxu0 0.0
    %1174 = vmatpush.msra.mxu0 0.0
    %1175 = vmatpush.msra.mxu0 0.0
    %1176 = vmatpush.msra.mxu0 0.0
    %1177 = vmatpush.msra.mxu0 0.0
    %1178 = vmatpush.msra.mxu0 0.0
    %1179 = vmatpush.msra.mxu0 0.0
    %1180 = vmatpush.msra.mxu0 0.0
    %1181 = vmatpush.msra.mxu0 0.0
    %1182 = vmatpush.msra.mxu0 0.0
    %1183 = vmatpush.msra.mxu0 %v879
    %1184 = vmatpush.msra.mxu0 %v814
    %1185 = vmatmul.f32.gmra.mxu0 %v1122
    %v1186 = vpop.f32.mrf.mxu0
    %v1187 = vadd.f32 0.0, %v1186
    %1188 = vdwg.mxu0
    %1189 = vmatpush.msra.mxu0 0.0
    %1190 = vmatpush.msra.mxu0 0.0
    %1191 = vmatpush.msra.mxu0 0.0
    %1192 = vmatpush.msra.mxu0 0.0
    %1193 = vmatpush.msra.mxu0 0.0
    %1194 = vmatpush.msra.mxu0 0.0
    %1195 = vmatpush.msra.mxu0 0.0
    %1196 = vmatpush.msra.mxu0 0.0
    %1197 = vmatpush.msra.mxu0 0.0
    %1198 = vmatpush.msra.mxu0 0.0
    %1199 = vmatpush.msra.mxu0 0.0
    %1200 = vmatpush.msra.mxu0 0.0
    %1201 = vmatpush.msra.mxu0 0.0
    %1202 = vmatpush.msra.mxu0 0.0
    %1203 = vmatpush.msra.mxu0 %v902
    %1204 = vmatpush.msra.mxu0 %v812
    %1205 = vmatmul.f32.gmra.mxu0 %v1145
    %v1206 = vpop.f32.mrf.mxu0
    %v1207 = vadd.f32 %v1187, %v1206
    %1208 = vdwg.mxu0
    %v1209 = vadd.f32 %v1207, %v925
    %1210 = vst.msk [vmem:[%s443] sm:$0x3] %vm269, %v1209
    %s1211 = scalar_lea.vmem [#allocation4], 8
    %v1212 = vld [vmem:[%s1211] sm:$0x3]
    %s1213 = scalar_lea.vmem [#allocation5], 8
    %v1214 = vld [vmem:[%s1213] sm:$0x3]
    %v1216 = vsel %vm820, %v1214, 0
    %1218 = vmatpush.msra.mxu0 0.0
    %1219 = vmatpush.msra.mxu0 0.0
    %1220 = vmatpush.msra.mxu0 0.0
    %1221 = vmatpush.msra.mxu0 0.0
    %1222 = vmatpush.msra.mxu0 0.0
    %1223 = vmatpush.msra.mxu0 0.0
    %1224 = vmatpush.msra.mxu0 0.0
    %1225 = vmatpush.msra.mxu0 0.0
    %1226 = vmatpush.msra.mxu0 0.0
    %1227 = vmatpush.msra.mxu0 0.0
    %1228 = vmatpush.msra.mxu0 0.0
    %1229 = vmatpush.msra.mxu0 0.0
    %1230 = vmatpush.msra.mxu0 0.0
    %1231 = vmatpush.msra.mxu0 0.0
    %1232 = vmatpush.msra.mxu0 %v825
    %1233 = vmatpush.msra.mxu0 %v810
    %1234 = vmatmul.f32.gmra.mxu0 %v1216
    %v1235 = vpop.f32.mrf.mxu0
    %v1236 = vadd.f32 0.0, %v1235
    %1237 = vdwg.mxu0
    %v1239 = vsel %vm820, %v1212, 0
    %1241 = vmatpush.msra.mxu0 0.0
    %1242 = vmatpush.msra.mxu0 0.0
    %1243 = vmatpush.msra.mxu0 0.0
    %1244 = vmatpush.msra.mxu0 0.0
    %1245 = vmatpush.msra.mxu0 0.0
    %1246 = vmatpush.msra.mxu0 0.0
    %1247 = vmatpush.msra.mxu0 0.0
    %1248 = vmatpush.msra.mxu0 0.0
    %1249 = vmatpush.msra.mxu0 0.0
    %1250 = vmatpush.msra.mxu0 0.0
    %1251 = vmatpush.msra.mxu0 0.0
    %1252 = vmatpush.msra.mxu0 0.0
    %1253 = vmatpush.msra.mxu0 0.0
    %1254 = vmatpush.msra.mxu0 0.0
    %1255 = vmatpush.msra.mxu0 %v851
    %1256 = vmatpush.msra.mxu0 %v808
    %1257 = vmatmul.f32.gmra.mxu0 %v1239
    %v1258 = vpop.f32.mrf.mxu0
    %v1259 = vadd.f32 %v1236, %v1258
    %1260 = vdwg.mxu0
    %v1261 = vadd.f32 %v1259, %v874
    %1262 = vst.msk [vmem:[%s470] sm:$0x3] %vm269, %v1261
    %1263 = vmatpush.msra.mxu0 0.0
    %1264 = vmatpush.msra.mxu0 0.0
    %1265 = vmatpush.msra.mxu0 0.0
    %1266 = vmatpush.msra.mxu0 0.0
    %1267 = vmatpush.msra.mxu0 0.0
    %1268 = vmatpush.msra.mxu0 0.0
    %1269 = vmatpush.msra.mxu0 0.0
    %1270 = vmatpush.msra.mxu0 0.0
    %1271 = vmatpush.msra.mxu0 0.0
    %1272 = vmatpush.msra.mxu0 0.0
    %1273 = vmatpush.msra.mxu0 0.0
    %1274 = vmatpush.msra.mxu0 0.0
    %1275 = vmatpush.msra.mxu0 0.0
    %1276 = vmatpush.msra.mxu0 0.0
    %1277 = vmatpush.msra.mxu0 %v879
    %1278 = vmatpush.msra.mxu0 %v814
    %1279 = vmatmul.f32.gmra.mxu0 %v1216
    %v1280 = vpop.f32.mrf.mxu0
    %v1281 = vadd.f32 0.0, %v1280
    %1282 = vdwg.mxu0
    %1283 = vmatpush.msra.mxu0 0.0
    %1284 = vmatpush.msra.mxu0 0.0
    %1285 = vmatpush.msra.mxu0 0.0
    %1286 = vmatpush.msra.mxu0 0.0
    %1287 = vmatpush.msra.mxu0 0.0
    %1288 = vmatpush.msra.mxu0 0.0
    %1289 = vmatpush.msra.mxu0 0.0
    %1290 = vmatpush.msra.mxu0 0.0
    %1291 = vmatpush.msra.mxu0 0.0
    %1292 = vmatpush.msra.mxu0 0.0
    %1293 = vmatpush.msra.mxu0 0.0
    %1294 = vmatpush.msra.mxu0 0.0
    %1295 = vmatpush.msra.mxu0 0.0
    %1296 = vmatpush.msra.mxu0 0.0
    %1297 = vmatpush.msra.mxu0 %v902
    %1298 = vmatpush.msra.mxu0 %v812
    %1299 = vmatmul.f32.gmra.mxu0 %v1239
    %v1300 = vpop.f32.mrf.mxu0
    %v1301 = vadd.f32 %v1281, %v1300
    %1302 = vdwg.mxu0
    %v1303 = vadd.f32 %v1301, %v925
    %1304 = vst.msk [vmem:[%s492] sm:$0x3] %vm269, %v1303
    %s1305 = scalar_lea.vmem [#allocation4], 10
    %v1306 = vld [vmem:[%s1305] sm:$0x3]
    %s1307 = scalar_lea.vmem [#allocation5], 10
    %v1308 = vld [vmem:[%s1307] sm:$0x3]
    %v1310 = vsel %vm820, %v1308, 0
    %1312 = vmatpush.msra.mxu0 0.0
    %1313 = vmatpush.msra.mxu0 0.0
    %1314 = vmatpush.msra.mxu0 0.0
    %1315 = vmatpush.msra.mxu0 0.0
    %1316 = vmatpush.msra.mxu0 0.0
    %1317 = vmatpush.msra.mxu0 0.0
    %1318 = vmatpush.msra.mxu0 0.0
    %1319 = vmatpush.msra.mxu0 0.0
    %1320 = vmatpush.msra.mxu0 0.0
    %1321 = vmatpush.msra.mxu0 0.0
    %1322 = vmatpush.msra.mxu0 0.0
    %1323 = vmatpush.msra.mxu0 0.0
    %1324 = vmatpush.msra.mxu0 0.0
    %1325 = vmatpush.msra.mxu0 0.0
    %1326 = vmatpush.msra.mxu0 %v825
    %1327 = vmatpush.msra.mxu0 %v810
    %1328 = vmatmul.f32.gmra.mxu0 %v1310
    %v1329 = vpop.f32.mrf.mxu0
    %v1330 = vadd.f32 0.0, %v1329
    %1331 = vdwg.mxu0
    %v1333 = vsel %vm820, %v1306, 0
    %1335 = vmatpush.msra.mxu0 0.0
    %1336 = vmatpush.msra.mxu0 0.0
    %1337 = vmatpush.msra.mxu0 0.0
    %1338 = vmatpush.msra.mxu0 0.0
    %1339 = vmatpush.msra.mxu0 0.0
    %1340 = vmatpush.msra.mxu0 0.0
    %1341 = vmatpush.msra.mxu0 0.0
    %1342 = vmatpush.msra.mxu0 0.0
    %1343 = vmatpush.msra.mxu0 0.0
    %1344 = vmatpush.msra.mxu0 0.0
    %1345 = vmatpush.msra.mxu0 0.0
    %1346 = vmatpush.msra.mxu0 0.0
    %1347 = vmatpush.msra.mxu0 0.0
    %1348 = vmatpush.msra.mxu0 0.0
    %1349 = vmatpush.msra.mxu0 %v851
    %1350 = vmatpush.msra.mxu0 %v808
    %1351 = vmatmul.f32.gmra.mxu0 %v1333
    %v1352 = vpop.f32.mrf.mxu0
    %v1353 = vadd.f32 %v1330, %v1352
    %1354 = vdwg.mxu0
    %v1355 = vadd.f32 %v1353, %v874
    %1356 = vst.msk [vmem:[%s519] sm:$0x3] %vm269, %v1355
    %1357 = vmatpush.msra.mxu0 0.0
    %1358 = vmatpush.msra.mxu0 0.0
    %1359 = vmatpush.msra.mxu0 0.0
    %1360 = vmatpush.msra.mxu0 0.0
    %1361 = vmatpush.msra.mxu0 0.0
    %1362 = vmatpush.msra.mxu0 0.0
    %1363 = vmatpush.msra.mxu0 0.0
    %1364 = vmatpush.msra.mxu0 0.0
    %1365 = vmatpush.msra.mxu0 0.0
    %1366 = vmatpush.msra.mxu0 0.0
    %1367 = vmatpush.msra.mxu0 0.0
    %1368 = vmatpush.msra.mxu0 0.0
    %1369 = vmatpush.msra.mxu0 0.0
    %1370 = vmatpush.msra.mxu0 0.0
    %1371 = vmatpush.msra.mxu0 %v879
    %1372 = vmatpush.msra.mxu0 %v814
    %1373 = vmatmul.f32.gmra.mxu0 %v1310
    %v1374 = vpop.f32.mrf.mxu0
    %v1375 = vadd.f32 0.0, %v1374
    %1376 = vdwg.mxu0
    %1377 = vmatpush.msra.mxu0 0.0
    %1378 = vmatpush.msra.mxu0 0.0
    %1379 = vmatpush.msra.mxu0 0.0
    %1380 = vmatpush.msra.mxu0 0.0
    %1381 = vmatpush.msra.mxu0 0.0
    %1382 = vmatpush.msra.mxu0 0.0
    %1383 = vmatpush.msra.mxu0 0.0
    %1384 = vmatpush.msra.mxu0 0.0
    %1385 = vmatpush.msra.mxu0 0.0
    %1386 = vmatpush.msra.mxu0 0.0
    %1387 = vmatpush.msra.mxu0 0.0
    %1388 = vmatpush.msra.mxu0 0.0
    %1389 = vmatpush.msra.mxu0 0.0
    %1390 = vmatpush.msra.mxu0 0.0
    %1391 = vmatpush.msra.mxu0 %v902
    %1392 = vmatpush.msra.mxu0 %v812
    %1393 = vmatmul.f32.gmra.mxu0 %v1333
    %v1394 = vpop.f32.mrf.mxu0
    %v1395 = vadd.f32 %v1375, %v1394
    %1396 = vdwg.mxu0
    %v1397 = vadd.f32 %v1395, %v925
    %1398 = vst.msk [vmem:[%s541] sm:$0x3] %vm269, %v1397
    %s1399 = scalar_lea.vmem [#allocation4], 12
    %v1400 = vld [vmem:[%s1399] sm:$0x3]
    %s1401 = scalar_lea.vmem [#allocation5], 12
    %v1402 = vld [vmem:[%s1401] sm:$0x3]
    %v1404 = vsel %vm820, %v1402, 0
    %1406 = vmatpush.msra.mxu0 0.0
    %1407 = vmatpush.msra.mxu0 0.0
    %1408 = vmatpush.msra.mxu0 0.0
    %1409 = vmatpush.msra.mxu0 0.0
    %1410 = vmatpush.msra.mxu0 0.0
    %1411 = vmatpush.msra.mxu0 0.0
    %1412 = vmatpush.msra.mxu0 0.0
    %1413 = vmatpush.msra.mxu0 0.0
    %1414 = vmatpush.msra.mxu0 0.0
    %1415 = vmatpush.msra.mxu0 0.0
    %1416 = vmatpush.msra.mxu0 0.0
    %1417 = vmatpush.msra.mxu0 0.0
    %1418 = vmatpush.msra.mxu0 0.0
    %1419 = vmatpush.msra.mxu0 0.0
    %1420 = vmatpush.msra.mxu0 %v825
    %1421 = vmatpush.msra.mxu0 %v810
    %1422 = vmatmul.f32.gmra.mxu0 %v1404
    %v1423 = vpop.f32.mrf.mxu0
    %v1424 = vadd.f32 0.0, %v1423
    %1425 = vdwg.mxu0
    %v1427 = vsel %vm820, %v1400, 0
    %1429 = vmatpush.msra.mxu0 0.0
    %1430 = vmatpush.msra.mxu0 0.0
    %1431 = vmatpush.msra.mxu0 0.0
    %1432 = vmatpush.msra.mxu0 0.0
    %1433 = vmatpush.msra.mxu0 0.0
    %1434 = vmatpush.msra.mxu0 0.0
    %1435 = vmatpush.msra.mxu0 0.0
    %1436 = vmatpush.msra.mxu0 0.0
    %1437 = vmatpush.msra.mxu0 0.0
    %1438 = vmatpush.msra.mxu0 0.0
    %1439 = vmatpush.msra.mxu0 0.0
    %1440 = vmatpush.msra.mxu0 0.0
    %1441 = vmatpush.msra.mxu0 0.0
    %1442 = vmatpush.msra.mxu0 0.0
    %1443 = vmatpush.msra.mxu0 %v851
    %1444 = vmatpush.msra.mxu0 %v808
    %1445 = vmatmul.f32.gmra.mxu0 %v1427
    %v1446 = vpop.f32.mrf.mxu0
    %v1447 = vadd.f32 %v1424, %v1446
    %1448 = vdwg.mxu0
    %v1449 = vadd.f32 %v1447, %v874
    %1450 = vst.msk [vmem:[%s568] sm:$0x3] %vm269, %v1449
    %1451 = vmatpush.msra.mxu0 0.0
    %1452 = vmatpush.msra.mxu0 0.0
    %1453 = vmatpush.msra.mxu0 0.0
    %1454 = vmatpush.msra.mxu0 0.0
    %1455 = vmatpush.msra.mxu0 0.0
    %1456 = vmatpush.msra.mxu0 0.0
    %1457 = vmatpush.msra.mxu0 0.0
    %1458 = vmatpush.msra.mxu0 0.0
    %1459 = vmatpush.msra.mxu0 0.0
    %1460 = vmatpush.msra.mxu0 0.0
    %1461 = vmatpush.msra.mxu0 0.0
    %1462 = vmatpush.msra.mxu0 0.0
    %1463 = vmatpush.msra.mxu0 0.0
    %1464 = vmatpush.msra.mxu0 0.0
    %1465 = vmatpush.msra.mxu0 %v879
    %1466 = vmatpush.msra.mxu0 %v814
    %1467 = vmatmul.f32.gmra.mxu0 %v1404
    %v1468 = vpop.f32.mrf.mxu0
    %v1469 = vadd.f32 0.0, %v1468
    %1470 = vdwg.mxu0
    %1471 = vmatpush.msra.mxu0 0.0
    %1472 = vmatpush.msra.mxu0 0.0
    %1473 = vmatpush.msra.mxu0 0.0
    %1474 = vmatpush.msra.mxu0 0.0
    %1475 = vmatpush.msra.mxu0 0.0
    %1476 = vmatpush.msra.mxu0 0.0
    %1477 = vmatpush.msra.mxu0 0.0
    %1478 = vmatpush.msra.mxu0 0.0
    %1479 = vmatpush.msra.mxu0 0.0
    %1480 = vmatpush.msra.mxu0 0.0
    %1481 = vmatpush.msra.mxu0 0.0
    %1482 = vmatpush.msra.mxu0 0.0
    %1483 = vmatpush.msra.mxu0 0.0
    %1484 = vmatpush.msra.mxu0 0.0
    %1485 = vmatpush.msra.mxu0 %v902
    %1486 = vmatpush.msra.mxu0 %v812
    %1487 = vmatmul.f32.gmra.mxu0 %v1427
    %v1488 = vpop.f32.mrf.mxu0
    %v1489 = vadd.f32 %v1469, %v1488
    %1490 = vdwg.mxu0
    %v1491 = vadd.f32 %v1489, %v925
    %1492 = vst.msk [vmem:[%s590] sm:$0x3] %vm269, %v1491
    %s1493 = scalar_lea.vmem [#allocation4], 14
    %v1494 = vld [vmem:[%s1493] sm:$0x3]
    %s1495 = scalar_lea.vmem [#allocation5], 14
    %v1496 = vld [vmem:[%s1495] sm:$0x3]
    %v1498 = vsel %vm820, %v1496, 0
    %1500 = vmatpush.msra.mxu0 0.0
    %1501 = vmatpush.msra.mxu0 0.0
    %1502 = vmatpush.msra.mxu0 0.0
    %1503 = vmatpush.msra.mxu0 0.0
    %1504 = vmatpush.msra.mxu0 0.0
    %1505 = vmatpush.msra.mxu0 0.0
    %1506 = vmatpush.msra.mxu0 0.0
    %1507 = vmatpush.msra.mxu0 0.0
    %1508 = vmatpush.msra.mxu0 0.0
    %1509 = vmatpush.msra.mxu0 0.0
    %1510 = vmatpush.msra.mxu0 0.0
    %1511 = vmatpush.msra.mxu0 0.0
    %1512 = vmatpush.msra.mxu0 0.0
    %1513 = vmatpush.msra.mxu0 0.0
    %1514 = vmatpush.msra.mxu0 %v825
    %1515 = vmatpush.msra.mxu0 %v810
    %1516 = vmatmul.f32.gmra.mxu0 %v1498
    %v1517 = vpop.f32.mrf.mxu0
    %v1518 = vadd.f32 0.0, %v1517
    %1519 = vdwg.mxu0
    %v1521 = vsel %vm820, %v1494, 0
    %1523 = vmatpush.msra.mxu0 0.0
    %1524 = vmatpush.msra.mxu0 0.0
    %1525 = vmatpush.msra.mxu0 0.0
    %1526 = vmatpush.msra.mxu0 0.0
    %1527 = vmatpush.msra.mxu0 0.0
    %1528 = vmatpush.msra.mxu0 0.0
    %1529 = vmatpush.msra.mxu0 0.0
    %1530 = vmatpush.msra.mxu0 0.0
    %1531 = vmatpush.msra.mxu0 0.0
    %1532 = vmatpush.msra.mxu0 0.0
    %1533 = vmatpush.msra.mxu0 0.0
    %1534 = vmatpush.msra.mxu0 0.0
    %1535 = vmatpush.msra.mxu0 0.0
    %1536 = vmatpush.msra.mxu0 0.0
    %1537 = vmatpush.msra.mxu0 %v851
    %1538 = vmatpush.msra.mxu0 %v808
    %1539 = vmatmul.f32.gmra.mxu0 %v1521
    %v1540 = vpop.f32.mrf.mxu0
    %v1541 = vadd.f32 %v1518, %v1540
    %1542 = vdwg.mxu0
    %v1543 = vadd.f32 %v1541, %v874
    %1544 = vst.msk [vmem:[%s617] sm:$0x3] %vm269, %v1543
    %1545 = vmatpush.msra.mxu0 0.0
    %1546 = vmatpush.msra.mxu0 0.0
    %1547 = vmatpush.msra.mxu0 0.0
    %1548 = vmatpush.msra.mxu0 0.0
    %1549 = vmatpush.msra.mxu0 0.0
    %1550 = vmatpush.msra.mxu0 0.0
    %1551 = vmatpush.msra.mxu0 0.0
    %1552 = vmatpush.msra.mxu0 0.0
    %1553 = vmatpush.msra.mxu0 0.0
    %1554 = vmatpush.msra.mxu0 0.0
    %1555 = vmatpush.msra.mxu0 0.0
    %1556 = vmatpush.msra.mxu0 0.0
    %1557 = vmatpush.msra.mxu0 0.0
    %1558 = vmatpush.msra.mxu0 0.0
    %1559 = vmatpush.msra.mxu0 %v879
    %1560 = vmatpush.msra.mxu0 %v814
    %1561 = vmatmul.f32.gmra.mxu0 %v1498
    %v1562 = vpop.f32.mrf.mxu0
    %v1563 = vadd.f32 0.0, %v1562
    %1564 = vdwg.mxu0
    %1565 = vmatpush.msra.mxu0 0.0
    %1566 = vmatpush.msra.mxu0 0.0
    %1567 = vmatpush.msra.mxu0 0.0
    %1568 = vmatpush.msra.mxu0 0.0
    %1569 = vmatpush.msra.mxu0 0.0
    %1570 = vmatpush.msra.mxu0 0.0
    %1571 = vmatpush.msra.mxu0 0.0
    %1572 = vmatpush.msra.mxu0 0.0
    %1573 = vmatpush.msra.mxu0 0.0
    %1574 = vmatpush.msra.mxu0 0.0
    %1575 = vmatpush.msra.mxu0 0.0
    %1576 = vmatpush.msra.mxu0 0.0
    %1577 = vmatpush.msra.mxu0 0.0
    %1578 = vmatpush.msra.mxu0 0.0
    %1579 = vmatpush.msra.mxu0 %v902
    %1580 = vmatpush.msra.mxu0 %v812
    %1581 = vmatmul.f32.gmra.mxu0 %v1521
    %v1582 = vpop.f32.mrf.mxu0
    %v1583 = vadd.f32 %v1563, %v1582
    %1584 = vdwg.mxu0
    %v1585 = vadd.f32 %v1583, %v925
    %1586 = vst.msk [vmem:[%s639] sm:$0x3] %vm269, %v1585
    %v1587 = vld [vmem:[#allocation13] sm:$0xff]
    %v1588 = vld [vmem:[#allocation13 + $0x8] sm:$0x3f]
    %v1589 = vld [vmem:[#allocation17] sm:$0xff]
    %v1590 = vld [vmem:[#allocation17 + $0x8] sm:$0x3f]
    loop: start=0, step=1, limit=8
    $region137: #{decoder_model_forward.1} parent=1 // loop_pre_header
      _
    $region138: #{decoder_model_forward.1} parent=1 // loop_header
      %s1592 = sphi 0, %s1596
      %p1593 = scmp.ge.s32.totalorder %s1592, 8
      %v1597 = vphi 0.0, %v1702
      %v1598 = vphi 0.0, %v1696
      %v1599 = vphi 0.0, %v1739
      %v1600 = vphi 0.0, %v1733
    $region139: #{decoder_model_forward.1} parent=1 // loop_header_branch
      %1595 = sbr.rel (%p1593) target = $region143
    $region140: #{decoder_model_forward.1} parent=1 // loop_body
      %s1601 = ssub.s32 7, %s1592
      %s1602 = smul.u32 %s1592, 2
      %s1603 = scalar_lea.vmem [#allocation2], %s1602
      %v1604 = vld [vmem:[%s1603] sm:$0x3]
      %1606 = vrot.lane.b32.xlu0 %v1597, 100
      %v1607 = vpop.permute.xlu0 %1606
      %v1608 = vsel %vm820, %v1607, 0
      %v1611 = vsel %vm245, %v1588, 0
      %1613 = vmatpush.msra.mxu0 0.0
      %1614 = vmatpush.msra.mxu0 0.0
      %1615 = vmatpush.msra.mxu0 0.0
      %1616 = vmatpush.msra.mxu0 0.0
      %1617 = vmatpush.msra.mxu0 0.0
      %1618 = vmatpush.msra.mxu0 0.0
      %1619 = vmatpush.msra.mxu0 0.0
      %1620 = vmatpush.msra.mxu0 0.0
      %1621 = vmatpush.msra.mxu0 0.0
      %1622 = vmatpush.msra.mxu0 0.0
      %1623 = vmatpush.msra.mxu0 0.0
      %1624 = vmatpush.msra.mxu0 0.0
      %1625 = vmatpush.msra.mxu0 0.0
      %1626 = vmatpush.msra.mxu0 0.0
      %1627 = vmatpush.msra.mxu0 %v1611
      %1628 = vmatpush.msra.mxu0 %v1587
      %1629 = vmatmul.f32.gmra.mxu0 %v1608
      %v1630 = vpop.f32.mrf.mxu0
      %v1631 = vadd.f32 0.0, %v1630
      %1632 = vdwg.mxu0
      %v1633 = vadd.f32 %v1604, %v1631
      %s1634 = smul.u32 %s1601, 2
      %s1635 = scalar_lea.vmem [#allocation3], %s1634
      %v1636 = vld [vmem:[%s1635] sm:$0x3]
      %1638 = vrot.lane.b32.xlu0 %v1599, 100
      %v1639 = vpop.permute.xlu0 %1638
      %v1640 = vsel %vm820, %v1639, 0
      %v1643 = vsel %vm245, %v1590, 0
      %1645 = vmatpush.msra.mxu0 0.0
      %1646 = vmatpush.msra.mxu0 0.0
      %1647 = vmatpush.msra.mxu0 0.0
      %1648 = vmatpush.msra.mxu0 0.0
      %1649 = vmatpush.msra.mxu0 0.0
      %1650 = vmatpush.msra.mxu0 0.0
      %1651 = vmatpush.msra.mxu0 0.0
      %1652 = vmatpush.msra.mxu0 0.0
      %1653 = vmatpush.msra.mxu0 0.0
      %1654 = vmatpush.msra.mxu0 0.0
      %1655 = vmatpush.msra.mxu0 0.0
      %1656 = vmatpush.msra.mxu0 0.0
      %1657 = vmatpush.msra.mxu0 0.0
      %1658 = vmatpush.msra.mxu0 0.0
      %1659 = vmatpush.msra.mxu0 %v1643
      %1660 = vmatpush.msra.mxu0 %v1589
      %1661 = vmatmul.f32.gmra.mxu0 %v1640
      %v1662 = vpop.f32.mrf.mxu0
      %v1663 = vadd.f32 0.0, %v1662
      %1664 = vdwg.mxu0
      %v1665 = vadd.f32 %v1636, %v1663
      %v1666 = vxor.u32 %v1633, 2147483648
      %v1667 = vmul.f32 %v1666, 1.442695
      %v1668 = vpow.pop %v1667
      %v1669 = vadd.f32 %v1668, 1.0
      %v1670 = vrcp.pop %v1669
      %v1671 = vmul.f32 %v1669, %v1670
      %v1672 = vsub.f32 1.0, %v1671
      %v1673 = vmul.f32 %v1670, %v1672
      %v1674 = vadd.f32 %v1670, %v1673
      %vm1675 = vweird.f32 %v1669
      %vm1676 = vweird.f32 %v1670
      %vm1677 = vmor %vm1675, %vm1676
      %v1678 = vsel %vm1677, %v1670, %v1674
      %v1679 = vand.u32 2147483647, %v1669
      %vm1680 = vcmp.eq.f32.partialorder %v1679, 8.507059e+37
      %v1681 = vand.u32 %v1669, 2147483648
      %v1682 = vor.u32 1.1754944e-38, %v1681
      %v1683 = vsel %vm1680, %v1682, %v1678
      %v1684 = vmul.f32 1.0, %v1683
      %v1685 = vtanh.pop %v1633
      %v1686 = vmul.f32 %v1684, %v1598
      %1688 = vrot.lane.b32.xlu0 %v1685, 86
      %v1689 = vpop.permute.xlu0 %1688
      %v1691 = vmul.f32 %v1684, %v1689
      %1693 = vrot.lane.b32.xlu0 %v1691, 14
      %v1694 = vpop.permute.xlu0 %1693
      %v1696 = vadd.f32 %v1686, %v1694
      %v1697 = vtanh.pop %v1696
      %1699 = vrot.lane.b32.xlu0 %v1697, 14
      %v1700 = vpop.permute.xlu0 %1699
      %v1702 = vmul.f32 %v1684, %v1700
      %v1703 = vxor.u32 %v1665, 2147483648
      %v1704 = vmul.f32 %v1703, 1.442695
      %v1705 = vpow.pop %v1704
      %v1706 = vadd.f32 %v1705, 1.0
      %v1707 = vrcp.pop %v1706
      %v1708 = vmul.f32 %v1706, %v1707
      %v1709 = vsub.f32 1.0, %v1708
      %v1710 = vmul.f32 %v1707, %v1709
      %v1711 = vadd.f32 %v1707, %v1710
      %vm1712 = vweird.f32 %v1706
      %vm1713 = vweird.f32 %v1707
      %vm1714 = vmor %vm1712, %vm1713
      %v1715 = vsel %vm1714, %v1707, %v1711
      %v1716 = vand.u32 2147483647, %v1706
      %vm1717 = vcmp.eq.f32.partialorder %v1716, 8.507059e+37
      %v1718 = vand.u32 %v1706, 2147483648
      %v1719 = vor.u32 1.1754944e-38, %v1718
      %v1720 = vsel %vm1717, %v1719, %v1715
      %v1721 = vmul.f32 1.0, %v1720
      %v1722 = vtanh.pop %v1665
      %v1723 = vmul.f32 %v1721, %v1600
      %1725 = vrot.lane.b32.xlu0 %v1722, 86
      %v1726 = vpop.permute.xlu0 %1725
      %v1728 = vmul.f32 %v1721, %v1726
      %1730 = vrot.lane.b32.xlu0 %v1728, 14
      %v1731 = vpop.permute.xlu0 %1730
      %v1733 = vadd.f32 %v1723, %v1731
      %v1734 = vtanh.pop %v1733
      %1736 = vrot.lane.b32.xlu0 %v1734, 14
      %v1737 = vpop.permute.xlu0 %1736
      %v1739 = vmul.f32 %v1721, %v1737
      %1741 = vrot.lane.b32.xlu0 %v1702, 100
      %v1742 = vpop.permute.xlu0 %1741
      %s1744 = scalar_lea.vmem [#allocation4], %s1602
      %vm1745 = vcmask 107520
      %1746 = vst.msk [vmem:[%s1744] sm:$0x3] %vm1745, %v1742
      %1748 = vrot.lane.b32.xlu0 %v1739, 100
      %v1749 = vpop.permute.xlu0 %1748
      %s1751 = scalar_lea.vmem [#allocation5], %s1634
      %1752 = vst.msk [vmem:[%s1751] sm:$0x3] %vm1745, %v1749
    $region141: #{decoder_model_forward.1} parent=1 // loop_footer
      %s1596 = sadd.s32 1, %s1592
    $region142: #{decoder_model_forward.1} parent=1 // loop_footer_branch
      %1591 = sbr.rel target = $region138
    $region143: #{decoder_model_forward.1} parent=1 // loop_exit
      _
    %v1753 = vld [vmem:[#allocation19] sm:$0xff]
    %v1754 = vld [vmem:[#allocation19 + $0x8] sm:$0x3f]
    %v1755 = vld [vmem:[#allocation20] sm:$0xff]
    %v1756 = vld [vmem:[#allocation20 + $0x8] sm:$0x3f]
    %v1757 = vld [vmem:[%s18] sm:$0x1]
    %v1758 = vld [vmem:[#allocation4] sm:$0x3]
    %v1759 = vld [vmem:[#allocation5] sm:$0x3]
    %v1761 = vsel %vm820, %v1759, 0
    %v1764 = vsel %vm245, %v1756, 0
    %1766 = vmatpush.msra.mxu0 0.0
    %1767 = vmatpush.msra.mxu0 0.0
    %1768 = vmatpush.msra.mxu0 0.0
    %1769 = vmatpush.msra.mxu0 0.0
    %1770 = vmatpush.msra.mxu0 0.0
    %1771 = vmatpush.msra.mxu0 0.0
    %1772 = vmatpush.msra.mxu0 0.0
    %1773 = vmatpush.msra.mxu0 0.0
    %1774 = vmatpush.msra.mxu0 0.0
    %1775 = vmatpush.msra.mxu0 0.0
    %1776 = vmatpush.msra.mxu0 0.0
    %1777 = vmatpush.msra.mxu0 0.0
    %1778 = vmatpush.msra.mxu0 0.0
    %1779 = vmatpush.msra.mxu0 0.0
    %1780 = vmatpush.msra.mxu0 %v1764
    %1781 = vmatpush.msra.mxu0 %v1755
    %1782 = vmatmul.f32.gmra.mxu0 %v1761
    %v1783 = vpop.f32.mrf.mxu0
    %v1784 = vadd.f32 0.0, %v1783
    %1785 = vdwg.mxu0
    %v1787 = vsel %vm820, %v1758, 0
    %v1790 = vsel %vm245, %v1754, 0
    %1792 = vmatpush.msra.mxu0 0.0
    %1793 = vmatpush.msra.mxu0 0.0
    %1794 = vmatpush.msra.mxu0 0.0
    %1795 = vmatpush.msra.mxu0 0.0
    %1796 = vmatpush.msra.mxu0 0.0
    %1797 = vmatpush.msra.mxu0 0.0
    %1798 = vmatpush.msra.mxu0 0.0
    %1799 = vmatpush.msra.mxu0 0.0
    %1800 = vmatpush.msra.mxu0 0.0
    %1801 = vmatpush.msra.mxu0 0.0
    %1802 = vmatpush.msra.mxu0 0.0
    %1803 = vmatpush.msra.mxu0 0.0
    %1804 = vmatpush.msra.mxu0 0.0
    %1805 = vmatpush.msra.mxu0 0.0
    %1806 = vmatpush.msra.mxu0 %v1790
    %1807 = vmatpush.msra.mxu0 %v1753
    %1808 = vmatmul.f32.gmra.mxu0 %v1787
    %v1809 = vpop.f32.mrf.mxu0
    %v1810 = vadd.f32 %v1784, %v1809
    %1811 = vdwg.mxu0
    %v1813 = vperm.slane %v1757, 0
    %v1815 = vadd.f32 %v1810, %v1813
    %1816 = vst.msk [vmem:[#allocation2] sm:$0x3] %vm269, %v1815
    %v1817 = vld [vmem:[%s929] sm:$0x3]
    %v1818 = vld [vmem:[%s931] sm:$0x3]
    %v1820 = vsel %vm820, %v1818, 0
    %1822 = vmatpush.msra.mxu0 0.0
    %1823 = vmatpush.msra.mxu0 0.0
    %1824 = vmatpush.msra.mxu0 0.0
    %1825 = vmatpush.msra.mxu0 0.0
    %1826 = vmatpush.msra.mxu0 0.0
    %1827 = vmatpush.msra.mxu0 0.0
    %1828 = vmatpush.msra.mxu0 0.0
    %1829 = vmatpush.msra.mxu0 0.0
    %1830 = vmatpush.msra.mxu0 0.0
    %1831 = vmatpush.msra.mxu0 0.0
    %1832 = vmatpush.msra.mxu0 0.0
    %1833 = vmatpush.msra.mxu0 0.0
    %1834 = vmatpush.msra.mxu0 0.0
    %1835 = vmatpush.msra.mxu0 0.0
    %1836 = vmatpush.msra.mxu0 %v1764
    %1837 = vmatpush.msra.mxu0 %v1755
    %1838 = vmatmul.f32.gmra.mxu0 %v1820
    %v1839 = vpop.f32.mrf.mxu0
    %v1840 = vadd.f32 0.0, %v1839
    %1841 = vdwg.mxu0
    %v1843 = vsel %vm820, %v1817, 0
    %1845 = vmatpush.msra.mxu0 0.0
    %1846 = vmatpush.msra.mxu0 0.0
    %1847 = vmatpush.msra.mxu0 0.0
    %1848 = vmatpush.msra.mxu0 0.0
    %1849 = vmatpush.msra.mxu0 0.0
    %1850 = vmatpush.msra.mxu0 0.0
    %1851 = vmatpush.msra.mxu0 0.0
    %1852 = vmatpush.msra.mxu0 0.0
    %1853 = vmatpush.msra.mxu0 0.0
    %1854 = vmatpush.msra.mxu0 0.0
    %1855 = vmatpush.msra.mxu0 0.0
    %1856 = vmatpush.msra.mxu0 0.0
    %1857 = vmatpush.msra.mxu0 0.0
    %1858 = vmatpush.msra.mxu0 0.0
    %1859 = vmatpush.msra.mxu0 %v1790
    %1860 = vmatpush.msra.mxu0 %v1753
    %1861 = vmatmul.f32.gmra.mxu0 %v1843
    %v1862 = vpop.f32.mrf.mxu0
    %v1863 = vadd.f32 %v1840, %v1862
    %1864 = vdwg.mxu0
    %v1865 = vadd.f32 %v1863, %v1813
    %1866 = vst.msk [vmem:[%s323] sm:$0x3] %vm269, %v1865
    %v1867 = vld [vmem:[%s1023] sm:$0x3]
    %v1868 = vld [vmem:[%s1025] sm:$0x3]
    %v1870 = vsel %vm820, %v1868, 0
    %1872 = vmatpush.msra.mxu0 0.0
    %1873 = vmatpush.msra.mxu0 0.0
    %1874 = vmatpush.msra.mxu0 0.0
    %1875 = vmatpush.msra.mxu0 0.0
    %1876 = vmatpush.msra.mxu0 0.0
    %1877 = vmatpush.msra.mxu0 0.0
    %1878 = vmatpush.msra.mxu0 0.0
    %1879 = vmatpush.msra.mxu0 0.0
    %1880 = vmatpush.msra.mxu0 0.0
    %1881 = vmatpush.msra.mxu0 0.0
    %1882 = vmatpush.msra.mxu0 0.0
    %1883 = vmatpush.msra.mxu0 0.0
    %1884 = vmatpush.msra.mxu0 0.0
    %1885 = vmatpush.msra.mxu0 0.0
    %1886 = vmatpush.msra.mxu0 %v1764
    %1887 = vmatpush.msra.mxu0 %v1755
    %1888 = vmatmul.f32.gmra.mxu0 %v1870
    %v1889 = vpop.f32.mrf.mxu0
    %v1890 = vadd.f32 0.0, %v1889
    %1891 = vdwg.mxu0
    %v1893 = vsel %vm820, %v1867, 0
    %1895 = vmatpush.msra.mxu0 0.0
    %1896 = vmatpush.msra.mxu0 0.0
    %1897 = vmatpush.msra.mxu0 0.0
    %1898 = vmatpush.msra.mxu0 0.0
    %1899 = vmatpush.msra.mxu0 0.0
    %1900 = vmatpush.msra.mxu0 0.0
    %1901 = vmatpush.msra.mxu0 0.0
    %1902 = vmatpush.msra.mxu0 0.0
    %1903 = vmatpush.msra.mxu0 0.0
    %1904 = vmatpush.msra.mxu0 0.0
    %1905 = vmatpush.msra.mxu0 0.0
    %1906 = vmatpush.msra.mxu0 0.0
    %1907 = vmatpush.msra.mxu0 0.0
    %1908 = vmatpush.msra.mxu0 0.0
    %1909 = vmatpush.msra.mxu0 %v1790
    %1910 = vmatpush.msra.mxu0 %v1753
    %1911 = vmatmul.f32.gmra.mxu0 %v1893
    %v1912 = vpop.f32.mrf.mxu0
    %v1913 = vadd.f32 %v1890, %v1912
    %1914 = vdwg.mxu0
    %v1915 = vadd.f32 %v1913, %v1813
    %1916 = vst.msk [vmem:[%s372] sm:$0x3] %vm269, %v1915
    %v1917 = vld [vmem:[%s1117] sm:$0x3]
    %v1918 = vld [vmem:[%s1119] sm:$0x3]
    %v1920 = vsel %vm820, %v1918, 0
    %1922 = vmatpush.msra.mxu0 0.0
    %1923 = vmatpush.msra.mxu0 0.0
    %1924 = vmatpush.msra.mxu0 0.0
    %1925 = vmatpush.msra.mxu0 0.0
    %1926 = vmatpush.msra.mxu0 0.0
    %1927 = vmatpush.msra.mxu0 0.0
    %1928 = vmatpush.msra.mxu0 0.0
    %1929 = vmatpush.msra.mxu0 0.0
    %1930 = vmatpush.msra.mxu0 0.0
    %1931 = vmatpush.msra.mxu0 0.0
    %1932 = vmatpush.msra.mxu0 0.0
    %1933 = vmatpush.msra.mxu0 0.0
    %1934 = vmatpush.msra.mxu0 0.0
    %1935 = vmatpush.msra.mxu0 0.0
    %1936 = vmatpush.msra.mxu0 %v1764
    %1937 = vmatpush.msra.mxu0 %v1755
    %1938 = vmatmul.f32.gmra.mxu0 %v1920
    %v1939 = vpop.f32.mrf.mxu0
    %v1940 = vadd.f32 0.0, %v1939
    %1941 = vdwg.mxu0
    %v1943 = vsel %vm820, %v1917, 0
    %1945 = vmatpush.msra.mxu0 0.0
    %1946 = vmatpush.msra.mxu0 0.0
    %1947 = vmatpush.msra.mxu0 0.0
    %1948 = vmatpush.msra.mxu0 0.0
    %1949 = vmatpush.msra.mxu0 0.0
    %1950 = vmatpush.msra.mxu0 0.0
    %1951 = vmatpush.msra.mxu0 0.0
    %1952 = vmatpush.msra.mxu0 0.0
    %1953 = vmatpush.msra.mxu0 0.0
    %1954 = vmatpush.msra.mxu0 0.0
    %1955 = vmatpush.msra.mxu0 0.0
    %1956 = vmatpush.msra.mxu0 0.0
    %1957 = vmatpush.msra.mxu0 0.0
    %1958 = vmatpush.msra.mxu0 0.0
    %1959 = vmatpush.msra.mxu0 %v1790
    %1960 = vmatpush.msra.mxu0 %v1753
    %1961 = vmatmul.f32.gmra.mxu0 %v1943
    %v1962 = vpop.f32.mrf.mxu0
    %v1963 = vadd.f32 %v1940, %v1962
    %1964 = vdwg.mxu0
    %v1965 = vadd.f32 %v1963, %v1813
    %1966 = vst.msk [vmem:[%s421] sm:$0x3] %vm269, %v1965
    %v1967 = vld [vmem:[%s1211] sm:$0x3]
    %v1968 = vld [vmem:[%s1213] sm:$0x3]
    %v1970 = vsel %vm820, %v1968, 0
    %1972 = vmatpush.msra.mxu0 0.0
    %1973 = vmatpush.msra.mxu0 0.0
    %1974 = vmatpush.msra.mxu0 0.0
    %1975 = vmatpush.msra.mxu0 0.0
    %1976 = vmatpush.msra.mxu0 0.0
    %1977 = vmatpush.msra.mxu0 0.0
    %1978 = vmatpush.msra.mxu0 0.0
    %1979 = vmatpush.msra.mxu0 0.0
    %1980 = vmatpush.msra.mxu0 0.0
    %1981 = vmatpush.msra.mxu0 0.0
    %1982 = vmatpush.msra.mxu0 0.0
    %1983 = vmatpush.msra.mxu0 0.0
    %1984 = vmatpush.msra.mxu0 0.0
    %1985 = vmatpush.msra.mxu0 0.0
    %1986 = vmatpush.msra.mxu0 %v1764
    %1987 = vmatpush.msra.mxu0 %v1755
    %1988 = vmatmul.f32.gmra.mxu0 %v1970
    %v1989 = vpop.f32.mrf.mxu0
    %v1990 = vadd.f32 0.0, %v1989
    %1991 = vdwg.mxu0
    %v1993 = vsel %vm820, %v1967, 0
    %1995 = vmatpush.msra.mxu0 0.0
    %1996 = vmatpush.msra.mxu0 0.0
    %1997 = vmatpush.msra.mxu0 0.0
    %1998 = vmatpush.msra.mxu0 0.0
    %1999 = vmatpush.msra.mxu0 0.0
    %2000 = vmatpush.msra.mxu0 0.0
    %2001 = vmatpush.msra.mxu0 0.0
    %2002 = vmatpush.msra.mxu0 0.0
    %2003 = vmatpush.msra.mxu0 0.0
    %2004 = vmatpush.msra.mxu0 0.0
    %2005 = vmatpush.msra.mxu0 0.0
    %2006 = vmatpush.msra.mxu0 0.0
    %2007 = vmatpush.msra.mxu0 0.0
    %2008 = vmatpush.msra.mxu0 0.0
    %2009 = vmatpush.msra.mxu0 %v1790
    %2010 = vmatpush.msra.mxu0 %v1753
    %2011 = vmatmul.f32.gmra.mxu0 %v1993
    %v2012 = vpop.f32.mrf.mxu0
    %v2013 = vadd.f32 %v1990, %v2012
    %2014 = vdwg.mxu0
    %v2015 = vadd.f32 %v2013, %v1813
    %2016 = vst.msk [vmem:[%s470] sm:$0x3] %vm269, %v2015
    %v2017 = vld [vmem:[%s1305] sm:$0x3]
    %v2018 = vld [vmem:[%s1307] sm:$0x3]
    %v2020 = vsel %vm820, %v2018, 0
    %2022 = vmatpush.msra.mxu0 0.0
    %2023 = vmatpush.msra.mxu0 0.0
    %2024 = vmatpush.msra.mxu0 0.0
    %2025 = vmatpush.msra.mxu0 0.0
    %2026 = vmatpush.msra.mxu0 0.0
    %2027 = vmatpush.msra.mxu0 0.0
    %2028 = vmatpush.msra.mxu0 0.0
    %2029 = vmatpush.msra.mxu0 0.0
    %2030 = vmatpush.msra.mxu0 0.0
    %2031 = vmatpush.msra.mxu0 0.0
    %2032 = vmatpush.msra.mxu0 0.0
    %2033 = vmatpush.msra.mxu0 0.0
    %2034 = vmatpush.msra.mxu0 0.0
    %2035 = vmatpush.msra.mxu0 0.0
    %2036 = vmatpush.msra.mxu0 %v1764
    %2037 = vmatpush.msra.mxu0 %v1755
    %2038 = vmatmul.f32.gmra.mxu0 %v2020
    %v2039 = vpop.f32.mrf.mxu0
    %v2040 = vadd.f32 0.0, %v2039
    %2041 = vdwg.mxu0
    %v2043 = vsel %vm820, %v2017, 0
    %2045 = vmatpush.msra.mxu0 0.0
    %2046 = vmatpush.msra.mxu0 0.0
    %2047 = vmatpush.msra.mxu0 0.0
    %2048 = vmatpush.msra.mxu0 0.0
    %2049 = vmatpush.msra.mxu0 0.0
    %2050 = vmatpush.msra.mxu0 0.0
    %2051 = vmatpush.msra.mxu0 0.0
    %2052 = vmatpush.msra.mxu0 0.0
    %2053 = vmatpush.msra.mxu0 0.0
    %2054 = vmatpush.msra.mxu0 0.0
    %2055 = vmatpush.msra.mxu0 0.0
    %2056 = vmatpush.msra.mxu0 0.0
    %2057 = vmatpush.msra.mxu0 0.0
    %2058 = vmatpush.msra.mxu0 0.0
    %2059 = vmatpush.msra.mxu0 %v1790
    %2060 = vmatpush.msra.mxu0 %v1753
    %2061 = vmatmul.f32.gmra.mxu0 %v2043
    %v2062 = vpop.f32.mrf.mxu0
    %v2063 = vadd.f32 %v2040, %v2062
    %2064 = vdwg.mxu0
    %v2065 = vadd.f32 %v2063, %v1813
    %2066 = vst.msk [vmem:[%s519] sm:$0x3] %vm269, %v2065
    %v2067 = vld [vmem:[%s1399] sm:$0x3]
    %v2068 = vld [vmem:[%s1401] sm:$0x3]
    %v2070 = vsel %vm820, %v2068, 0
    %2072 = vmatpush.msra.mxu0 0.0
    %2073 = vmatpush.msra.mxu0 0.0
    %2074 = vmatpush.msra.mxu0 0.0
    %2075 = vmatpush.msra.mxu0 0.0
    %2076 = vmatpush.msra.mxu0 0.0
    %2077 = vmatpush.msra.mxu0 0.0
    %2078 = vmatpush.msra.mxu0 0.0
    %2079 = vmatpush.msra.mxu0 0.0
    %2080 = vmatpush.msra.mxu0 0.0
    %2081 = vmatpush.msra.mxu0 0.0
    %2082 = vmatpush.msra.mxu0 0.0
    %2083 = vmatpush.msra.mxu0 0.0
    %2084 = vmatpush.msra.mxu0 0.0
    %2085 = vmatpush.msra.mxu0 0.0
    %2086 = vmatpush.msra.mxu0 %v1764
    %2087 = vmatpush.msra.mxu0 %v1755
    %2088 = vmatmul.f32.gmra.mxu0 %v2070
    %v2089 = vpop.f32.mrf.mxu0
    %v2090 = vadd.f32 0.0, %v2089
    %2091 = vdwg.mxu0
    %v2093 = vsel %vm820, %v2067, 0
    %2095 = vmatpush.msra.mxu0 0.0
    %2096 = vmatpush.msra.mxu0 0.0
    %2097 = vmatpush.msra.mxu0 0.0
    %2098 = vmatpush.msra.mxu0 0.0
    %2099 = vmatpush.msra.mxu0 0.0
    %2100 = vmatpush.msra.mxu0 0.0
    %2101 = vmatpush.msra.mxu0 0.0
    %2102 = vmatpush.msra.mxu0 0.0
    %2103 = vmatpush.msra.mxu0 0.0
    %2104 = vmatpush.msra.mxu0 0.0
    %2105 = vmatpush.msra.mxu0 0.0
    %2106 = vmatpush.msra.mxu0 0.0
    %2107 = vmatpush.msra.mxu0 0.0
    %2108 = vmatpush.msra.mxu0 0.0
    %2109 = vmatpush.msra.mxu0 %v1790
    %2110 = vmatpush.msra.mxu0 %v1753
    %2111 = vmatmul.f32.gmra.mxu0 %v2093
    %v2112 = vpop.f32.mrf.mxu0
    %v2113 = vadd.f32 %v2090, %v2112
    %2114 = vdwg.mxu0
    %v2115 = vadd.f32 %v2113, %v1813
    %2116 = vst.msk [vmem:[%s568] sm:$0x3] %vm269, %v2115
    %v2117 = vld [vmem:[%s1493] sm:$0x3]
    %v2118 = vld [vmem:[%s1495] sm:$0x3]
    %v2120 = vsel %vm820, %v2118, 0
    %2122 = vmatpush.msra.mxu0 0.0
    %2123 = vmatpush.msra.mxu0 0.0
    %2124 = vmatpush.msra.mxu0 0.0
    %2125 = vmatpush.msra.mxu0 0.0
    %2126 = vmatpush.msra.mxu0 0.0
    %2127 = vmatpush.msra.mxu0 0.0
    %2128 = vmatpush.msra.mxu0 0.0
    %2129 = vmatpush.msra.mxu0 0.0
    %2130 = vmatpush.msra.mxu0 0.0
    %2131 = vmatpush.msra.mxu0 0.0
    %2132 = vmatpush.msra.mxu0 0.0
    %2133 = vmatpush.msra.mxu0 0.0
    %2134 = vmatpush.msra.mxu0 0.0
    %2135 = vmatpush.msra.mxu0 0.0
    %2136 = vmatpush.msra.mxu0 %v1764
    %2137 = vmatpush.msra.mxu0 %v1755
    %2138 = vmatmul.f32.gmra.mxu0 %v2120
    %v2139 = vpop.f32.mrf.mxu0
    %v2140 = vadd.f32 0.0, %v2139
    %2141 = vdwg.mxu0
    %v2143 = vsel %vm820, %v2117, 0
    %2145 = vmatpush.msra.mxu0 0.0
    %2146 = vmatpush.msra.mxu0 0.0
    %2147 = vmatpush.msra.mxu0 0.0
    %2148 = vmatpush.msra.mxu0 0.0
    %2149 = vmatpush.msra.mxu0 0.0
    %2150 = vmatpush.msra.mxu0 0.0
    %2151 = vmatpush.msra.mxu0 0.0
    %2152 = vmatpush.msra.mxu0 0.0
    %2153 = vmatpush.msra.mxu0 0.0
    %2154 = vmatpush.msra.mxu0 0.0
    %2155 = vmatpush.msra.mxu0 0.0
    %2156 = vmatpush.msra.mxu0 0.0
    %2157 = vmatpush.msra.mxu0 0.0
    %2158 = vmatpush.msra.mxu0 0.0
    %2159 = vmatpush.msra.mxu0 %v1790
    %2160 = vmatpush.msra.mxu0 %v1753
    %2161 = vmatmul.f32.gmra.mxu0 %v2143
    %v2162 = vpop.f32.mrf.mxu0
    %v2163 = vadd.f32 %v2140, %v2162
    %2164 = vdwg.mxu0
    %v2165 = vadd.f32 %v2163, %v1813
    %2166 = vst.msk [vmem:[%s617] sm:$0x3] %vm269, %v2165
    %v2167 = vld [vmem:[#allocation22] sm:$0xff]
    %v2168 = vld [vmem:[#allocation22 + $0x8] sm:$0x3f]
    loop: start=0, step=1, limit=8
    $region144: #{decoder_model_forward.1} parent=1 // loop_pre_header
      _
    $region145: #{decoder_model_forward.1} parent=1 // loop_header
      %s2170 = sphi 0, %s2174
      %p2171 = scmp.ge.s32.totalorder %s2170, 8
      %v2175 = vphi 0.0, %v2245
      %v2176 = vphi 0.0, %v2239
    $region146: #{decoder_model_forward.1} parent=1 // loop_header_branch
      %2173 = sbr.rel (%p2171) target = $region150
    $region147: #{decoder_model_forward.1} parent=1 // loop_body
      %s2177 = smul.u32 %s2170, 2
      %s2178 = scalar_lea.vmem [#allocation2], %s2177
      %v2179 = vld [vmem:[%s2178] sm:$0x3]
      %2181 = vrot.lane.b32.xlu0 %v2175, 100
      %v2182 = vpop.permute.xlu0 %2181
      %v2183 = vsel %vm820, %v2182, 0
      %v2186 = vsel %vm245, %v2168, 0
      %2188 = vmatpush.msra.mxu0 0.0
      %2189 = vmatpush.msra.mxu0 0.0
      %2190 = vmatpush.msra.mxu0 0.0
      %2191 = vmatpush.msra.mxu0 0.0
      %2192 = vmatpush.msra.mxu0 0.0
      %2193 = vmatpush.msra.mxu0 0.0
      %2194 = vmatpush.msra.mxu0 0.0
      %2195 = vmatpush.msra.mxu0 0.0
      %2196 = vmatpush.msra.mxu0 0.0
      %2197 = vmatpush.msra.mxu0 0.0
      %2198 = vmatpush.msra.mxu0 0.0
      %2199 = vmatpush.msra.mxu0 0.0
      %2200 = vmatpush.msra.mxu0 0.0
      %2201 = vmatpush.msra.mxu0 0.0
      %2202 = vmatpush.msra.mxu0 %v2186
      %2203 = vmatpush.msra.mxu0 %v2167
      %2204 = vmatmul.f32.gmra.mxu0 %v2183
      %v2205 = vpop.f32.mrf.mxu0
      %v2206 = vadd.f32 0.0, %v2205
      %2207 = vdwg.mxu0
      %v2208 = vadd.f32 %v2179, %v2206
      %v2209 = vxor.u32 %v2208, 2147483648
      %v2210 = vmul.f32 %v2209, 1.442695
      %v2211 = vpow.pop %v2210
      %v2212 = vadd.f32 %v2211, 1.0
      %v2213 = vrcp.pop %v2212
      %v2214 = vmul.f32 %v2212, %v2213
      %v2215 = vsub.f32 1.0, %v2214
      %v2216 = vmul.f32 %v2213, %v2215
      %v2217 = vadd.f32 %v2213, %v2216
      %vm2218 = vweird.f32 %v2212
      %vm2219 = vweird.f32 %v2213
      %vm2220 = vmor %vm2218, %vm2219
      %v2221 = vsel %vm2220, %v2213, %v2217
      %v2222 = vand.u32 2147483647, %v2212
      %vm2223 = vcmp.eq.f32.partialorder %v2222, 8.507059e+37
      %v2224 = vand.u32 %v2212, 2147483648
      %v2225 = vor.u32 1.1754944e-38, %v2224
      %v2226 = vsel %vm2223, %v2225, %v2221
      %v2227 = vmul.f32 1.0, %v2226
      %v2228 = vtanh.pop %v2208
      %v2229 = vmul.f32 %v2227, %v2176
      %2231 = vrot.lane.b32.xlu0 %v2228, 86
      %v2232 = vpop.permute.xlu0 %2231
      %v2234 = vmul.f32 %v2227, %v2232
      %2236 = vrot.lane.b32.xlu0 %v2234, 14
      %v2237 = vpop.permute.xlu0 %2236
      %v2239 = vadd.f32 %v2229, %v2237
      %v2240 = vtanh.pop %v2239
      %2242 = vrot.lane.b32.xlu0 %v2240, 14
      %v2243 = vpop.permute.xlu0 %2242
      %v2245 = vmul.f32 %v2227, %v2243
      %2247 = vrot.lane.b32.xlu0 %v2245, 100
      %v2248 = vpop.permute.xlu0 %2247
      %s2250 = scalar_lea.vmem [#allocation4], %s2177
      %vm2251 = vcmask 107520
      %2252 = vst.msk [vmem:[%s2250] sm:$0x3] %vm2251, %v2248
    $region148: #{decoder_model_forward.1} parent=1 // loop_footer
      %s2174 = sadd.s32 1, %s2170
    $region149: #{decoder_model_forward.1} parent=1 // loop_footer_branch
      %2169 = sbr.rel target = $region145
    $region150: #{decoder_model_forward.1} parent=1 // loop_exit
      _
    %v2253 = vld [vmem:[%s19] sm:$0xff]
    %v2254 = vld [vmem:[%s19 + $0x8] sm:$0x3f]
    %v2255 = vld [vmem:[%s20] sm:$0x1]
    %v2256 = vld [vmem:[#allocation4] sm:$0x3]
    %v2258 = vperm.slane %v2255, 0
    %v2261 = vsel %vm820, %v2256, 0
    %v2264 = vsel %vm245, %v2254, 0
    %2266 = vmatpush.msra.mxu0 0.0
    %2267 = vmatpush.msra.mxu0 0.0
    %2268 = vmatpush.msra.mxu0 0.0
    %2269 = vmatpush.msra.mxu0 0.0
    %2270 = vmatpush.msra.mxu0 0.0
    %2271 = vmatpush.msra.mxu0 0.0
    %2272 = vmatpush.msra.mxu0 0.0
    %2273 = vmatpush.msra.mxu0 0.0
    %2274 = vmatpush.msra.mxu0 0.0
    %2275 = vmatpush.msra.mxu0 0.0
    %2276 = vmatpush.msra.mxu0 0.0
    %2277 = vmatpush.msra.mxu0 0.0
    %2278 = vmatpush.msra.mxu0 0.0
    %2279 = vmatpush.msra.mxu0 0.0
    %2280 = vmatpush.msra.mxu0 %v2264
    %2281 = vmatpush.msra.mxu0 %v2253
    %2282 = vmatmul.f32.gmra.mxu0 %v2261
    %v2283 = vpop.f32.mrf.mxu0
    %v2284 = vadd.f32 %v2258, %v2283
    %2285 = vdwg.mxu0
    %vm2286 = vcmask 17408
    %2287 = vst.msk [vmem:[%s21] sm:$0x3] %vm2286, %v2284
    %v2288 = vld [vmem:[%s929] sm:$0x3]
    %v2290 = vsel %vm820, %v2288, 0
    %2292 = vmatpush.msra.mxu0 0.0
    %2293 = vmatpush.msra.mxu0 0.0
    %2294 = vmatpush.msra.mxu0 0.0
    %2295 = vmatpush.msra.mxu0 0.0
    %2296 = vmatpush.msra.mxu0 0.0
    %2297 = vmatpush.msra.mxu0 0.0
    %2298 = vmatpush.msra.mxu0 0.0
    %2299 = vmatpush.msra.mxu0 0.0
    %2300 = vmatpush.msra.mxu0 0.0
    %2301 = vmatpush.msra.mxu0 0.0
    %2302 = vmatpush.msra.mxu0 0.0
    %2303 = vmatpush.msra.mxu0 0.0
    %2304 = vmatpush.msra.mxu0 0.0
    %2305 = vmatpush.msra.mxu0 0.0
    %2306 = vmatpush.msra.mxu0 %v2264
    %2307 = vmatpush.msra.mxu0 %v2253
    %2308 = vmatmul.f32.gmra.mxu0 %v2290
    %v2309 = vpop.f32.mrf.mxu0
    %v2310 = vadd.f32 %v2258, %v2309
    %2311 = vdwg.mxu0
    %s2312 = scalar_lea.vmem %s21, 2
    %2313 = vst.msk [vmem:[%s2312] sm:$0x3] %vm2286, %v2310
    %v2314 = vld [vmem:[%s1023] sm:$0x3]
    %v2316 = vsel %vm820, %v2314, 0
    %2318 = vmatpush.msra.mxu0 0.0
    %2319 = vmatpush.msra.mxu0 0.0
    %2320 = vmatpush.msra.mxu0 0.0
    %2321 = vmatpush.msra.mxu0 0.0
    %2322 = vmatpush.msra.mxu0 0.0
    %2323 = vmatpush.msra.mxu0 0.0
    %2324 = vmatpush.msra.mxu0 0.0
    %2325 = vmatpush.msra.mxu0 0.0
    %2326 = vmatpush.msra.mxu0 0.0
    %2327 = vmatpush.msra.mxu0 0.0
    %2328 = vmatpush.msra.mxu0 0.0
    %2329 = vmatpush.msra.mxu0 0.0
    %2330 = vmatpush.msra.mxu0 0.0
    %2331 = vmatpush.msra.mxu0 0.0
    %2332 = vmatpush.msra.mxu0 %v2264
    %2333 = vmatpush.msra.mxu0 %v2253
    %2334 = vmatmul.f32.gmra.mxu0 %v2316
    %v2335 = vpop.f32.mrf.mxu0
    %v2336 = vadd.f32 %v2258, %v2335
    %2337 = vdwg.mxu0
    %s2338 = scalar_lea.vmem %s21, 4
    %2339 = vst.msk [vmem:[%s2338] sm:$0x3] %vm2286, %v2336
    %v2340 = vld [vmem:[%s1117] sm:$0x3]
    %v2342 = vsel %vm820, %v2340, 0
    %2344 = vmatpush.msra.mxu0 0.0
    %2345 = vmatpush.msra.mxu0 0.0
    %2346 = vmatpush.msra.mxu0 0.0
    %2347 = vmatpush.msra.mxu0 0.0
    %2348 = vmatpush.msra.mxu0 0.0
    %2349 = vmatpush.msra.mxu0 0.0
    %2350 = vmatpush.msra.mxu0 0.0
    %2351 = vmatpush.msra.mxu0 0.0
    %2352 = vmatpush.msra.mxu0 0.0
    %2353 = vmatpush.msra.mxu0 0.0
    %2354 = vmatpush.msra.mxu0 0.0
    %2355 = vmatpush.msra.mxu0 0.0
    %2356 = vmatpush.msra.mxu0 0.0
    %2357 = vmatpush.msra.mxu0 0.0
    %2358 = vmatpush.msra.mxu0 %v2264
    %2359 = vmatpush.msra.mxu0 %v2253
    %2360 = vmatmul.f32.gmra.mxu0 %v2342
    %v2361 = vpop.f32.mrf.mxu0
    %v2362 = vadd.f32 %v2258, %v2361
    %2363 = vdwg.mxu0
    %s2364 = scalar_lea.vmem %s21, 6
    %2365 = vst.msk [vmem:[%s2364] sm:$0x3] %vm2286, %v2362
    %v2366 = vld [vmem:[%s1211] sm:$0x3]
    %v2368 = vsel %vm820, %v2366, 0
    %2370 = vmatpush.msra.mxu0 0.0
    %2371 = vmatpush.msra.mxu0 0.0
    %2372 = vmatpush.msra.mxu0 0.0
    %2373 = vmatpush.msra.mxu0 0.0
    %2374 = vmatpush.msra.mxu0 0.0
    %2375 = vmatpush.msra.mxu0 0.0
    %2376 = vmatpush.msra.mxu0 0.0
    %2377 = vmatpush.msra.mxu0 0.0
    %2378 = vmatpush.msra.mxu0 0.0
    %2379 = vmatpush.msra.mxu0 0.0
    %2380 = vmatpush.msra.mxu0 0.0
    %2381 = vmatpush.msra.mxu0 0.0
    %2382 = vmatpush.msra.mxu0 0.0
    %2383 = vmatpush.msra.mxu0 0.0
    %2384 = vmatpush.msra.mxu0 %v2264
    %2385 = vmatpush.msra.mxu0 %v2253
    %2386 = vmatmul.f32.gmra.mxu0 %v2368
    %v2387 = vpop.f32.mrf.mxu0
    %v2388 = vadd.f32 %v2258, %v2387
    %2389 = vdwg.mxu0
    %s2390 = scalar_lea.vmem %s21, 8
    %2391 = vst.msk [vmem:[%s2390] sm:$0x3] %vm2286, %v2388
    %v2392 = vld [vmem:[%s1305] sm:$0x3]
    %v2394 = vsel %vm820, %v2392, 0
    %2396 = vmatpush.msra.mxu0 0.0
    %2397 = vmatpush.msra.mxu0 0.0
    %2398 = vmatpush.msra.mxu0 0.0
    %2399 = vmatpush.msra.mxu0 0.0
    %2400 = vmatpush.msra.mxu0 0.0
    %2401 = vmatpush.msra.mxu0 0.0
    %2402 = vmatpush.msra.mxu0 0.0
    %2403 = vmatpush.msra.mxu0 0.0
    %2404 = vmatpush.msra.mxu0 0.0
    %2405 = vmatpush.msra.mxu0 0.0
    %2406 = vmatpush.msra.mxu0 0.0
    %2407 = vmatpush.msra.mxu0 0.0
    %2408 = vmatpush.msra.mxu0 0.0
    %2409 = vmatpush.msra.mxu0 0.0
    %2410 = vmatpush.msra.mxu0 %v2264
    %2411 = vmatpush.msra.mxu0 %v2253
    %2412 = vmatmul.f32.gmra.mxu0 %v2394
    %v2413 = vpop.f32.mrf.mxu0
    %v2414 = vadd.f32 %v2258, %v2413
    %2415 = vdwg.mxu0
    %s2416 = scalar_lea.vmem %s21, 10
    %2417 = vst.msk [vmem:[%s2416] sm:$0x3] %vm2286, %v2414
    %v2418 = vld [vmem:[%s1399] sm:$0x3]
    %v2420 = vsel %vm820, %v2418, 0
    %2422 = vmatpush.msra.mxu0 0.0
    %2423 = vmatpush.msra.mxu0 0.0
    %2424 = vmatpush.msra.mxu0 0.0
    %2425 = vmatpush.msra.mxu0 0.0
    %2426 = vmatpush.msra.mxu0 0.0
    %2427 = vmatpush.msra.mxu0 0.0
    %2428 = vmatpush.msra.mxu0 0.0
    %2429 = vmatpush.msra.mxu0 0.0
    %2430 = vmatpush.msra.mxu0 0.0
    %2431 = vmatpush.msra.mxu0 0.0
    %2432 = vmatpush.msra.mxu0 0.0
    %2433 = vmatpush.msra.mxu0 0.0
    %2434 = vmatpush.msra.mxu0 0.0
    %2435 = vmatpush.msra.mxu0 0.0
    %2436 = vmatpush.msra.mxu0 %v2264
    %2437 = vmatpush.msra.mxu0 %v2253
    %2438 = vmatmul.f32.gmra.mxu0 %v2420
    %v2439 = vpop.f32.mrf.mxu0
    %v2440 = vadd.f32 %v2258, %v2439
    %2441 = vdwg.mxu0
    %s2442 = scalar_lea.vmem %s21, 12
    %2443 = vst.msk [vmem:[%s2442] sm:$0x3] %vm2286, %v2440
    %v2444 = vld [vmem:[%s1493] sm:$0x3]
    %v2446 = vsel %vm820, %v2444, 0
    %2448 = vmatpush.msra.mxu0 0.0
    %2449 = vmatpush.msra.mxu0 0.0
    %2450 = vmatpush.msra.mxu0 0.0
    %2451 = vmatpush.msra.mxu0 0.0
    %2452 = vmatpush.msra.mxu0 0.0
    %2453 = vmatpush.msra.mxu0 0.0
    %2454 = vmatpush.msra.mxu0 0.0
    %2455 = vmatpush.msra.mxu0 0.0
    %2456 = vmatpush.msra.mxu0 0.0
    %2457 = vmatpush.msra.mxu0 0.0
    %2458 = vmatpush.msra.mxu0 0.0
    %2459 = vmatpush.msra.mxu0 0.0
    %2460 = vmatpush.msra.mxu0 0.0
    %2461 = vmatpush.msra.mxu0 0.0
    %2462 = vmatpush.msra.mxu0 %v2264
    %2463 = vmatpush.msra.mxu0 %v2253
    %2464 = vmatmul.f32.gmra.mxu0 %v2446
    %v2465 = vpop.f32.mrf.mxu0
    %v2466 = vadd.f32 %v2258, %v2465
    %2467 = vdwg.mxu0
    %s2468 = scalar_lea.vmem %s21, 14
    %2469 = vst.msk [vmem:[%s2468] sm:$0x3] %vm2286, %v2466
    // Predicated region
    $region151: #{decoder_model_forward.1} parent=1 // pred_check
      _
    $region152: #{decoder_model_forward.1} parent=1 // pred_check_branch
      %2471 = sbr.rel (0) target = $region154
    $region153: #{decoder_model_forward.1} parent=1 // pred_region
      _
    $region154: #{decoder_model_forward.1} parent=1 // pred_fallthru
      _
    // Predicated region
    $region155: #{decoder_model_forward.1} parent=1 // pred_check
      _
    $region156: #{decoder_model_forward.1} parent=1 // pred_check_branch
      %2473 = sbr.rel (0) target = $region158
    $region157: #{decoder_model_forward.1} parent=1 // pred_region
      _
    $region158: #{decoder_model_forward.1} parent=1 // pred_fallthru
      _
    %2474 = vsyncpa [#allocation7], 1
    %2475 = vsyncpa [#allocation9], 1
    %2476 = vsyncpa [#allocation12], 1
    %2477 = vsyncpa [#allocation15], 1
    %2478 = vsyncpa [#allocation18], 1
    %2479 = vsyncpa [#allocation21], 1

</llo_original>
